<compile_context>
chip_gen: v7x
topology: tpu7x:2x2x1
jax: 0.10.0
libtpu: 0.0.40
codegen_flags: <defaults>
</compile_context>

<pallas_src>
import jax
import jax.numpy as jnp
import numpy as np
from jax import lax
from jax.experimental import pallas as pl
from jax.experimental.pallas import tpu as pltpu

GRID_SIZE = 64      # _GRID_SIZE: number of LUT knots of the lerp-PSA
GRID_RANGE = 4.0    # psa_config['grid_range'] -> knots span [-4, 4]
KNOT_GROUP = 8      # knots per reassociated group (one dm slab load / f32 update)


# ----------------------------- Pallas kernel -------------------------------

def _psa_spline(x, base, m0, dm_ref):
    """ResPSA (add_res=True) as an exact ReLU-spline of the per-channel lerp LUT.

    x:      (TN, W) f32 activations
    base:   (1, W)  f32  = alpha * lut[0] + beta
    m0:     (1, W)  f32  = alpha * (lut[1] - lut[0])
    dm_ref: (Gm, W) ref  = alpha * (lut[g+1] - 2*lut[g] + lut[g-1]), zero padded;
            its dtype is the spline compute dtype (f32, or bf16 on bf16-VPU chips).

        y = base + m0*t + sum_g dm[g] * relu(t - (g+1)) + x,
        t = clip((x + R) * (G-1)/(2R), 0, G-1)

    which equals linear interpolation of the LUT on the clipped grid coordinate
    (no per-lane gathers; VPU only).  Knots are processed in groups of KNOT_GROUP:
    one contiguous slab load per group, static row indexing inside the group, the
    8-term partial sum kept in the compute dtype, and a single f32 accumulator
    update per group.
    """
    cd = dm_ref.dtype
    scale = (GRID_SIZE - 1) / (2.0 * GRID_RANGE)
    t32 = jnp.clip((x + GRID_RANGE) * scale, 0.0, float(GRID_SIZE - 1))
    acc0 = base + m0 * t32 + x                       # linear part + PSA residual, f32
    t = t32.astype(cd)
    n_groups = dm_ref.shape[0] // KNOT_GROUP

    def body(gi, acc):
        start = pl.multiple_of(gi * KNOT_GROUP, KNOT_GROUP)
        slab = dm_ref[pl.ds(start, KNOT_GROUP), :]                 # (8, W), one load
        knot0 = (gi * KNOT_GROUP + 1).astype(jnp.float32).astype(cd)
        local = slab[0:1, :] * jnp.maximum(t - knot0, 0)
        for k in range(1, KNOT_GROUP):
            local = local + slab[k:k + 1, :] * jnp.maximum(t - (knot0 + k), 0)
        return acc + local.astype(jnp.float32)                     # one f32 update/group

    return lax.fori_loop(0, n_groups, body, acc0, unroll=True)


def _cross_channel_kernel(x_ref,
                          w1_ref, b1_ref,                 # affine_1 (folded BN, eval)
                          base1_ref, m01_ref, dm1_ref,    # ResPSA(C) spline coeffs
                          wl1_ref, bl1_ref,               # Linear(C->h): bf16 W^T col chunk
                          base2_ref, m02_ref, dm2_ref,    # ResPSA(h) spline coeffs (chunk)
                          wl2_ref, bl2_ref,               # Linear(h->C): bf16 W^T row chunk
                          a2_ref, b2_ref,                 # affine_2 (layerscale)
                          o_ref,
                          y1_sc, acc_sc):
    """Grid = (row tiles, hidden-column chunks).  The hidden axis is blocked so the
    (tile, h) intermediate never exists in VMEM: each chunk's post-spline
    activations feed straight back into the MXU while acc_sc (tile, C) carries the
    second matmul's f32 partial sums across chunks."""
    j = pl.program_id(1)
    mm_dtype = wl1_ref.dtype

    @pl.when(j == 0)
    def _():
        x = x_ref[...].astype(jnp.float32)
        y = x * w1_ref[...] + b1_ref[...]                           # affine_1
        y = _psa_spline(y, base1_ref[...], m01_ref[...], dm1_ref)   # ResPSA(C)
        y1_sc[...] = y.astype(mm_dtype)
        acc_sc[...] = jnp.zeros_like(acc_sc)

    # Hidden chunk j: Linear1 column block -> ResPSA(h) chunk -> Linear2 row block.
    yj = jnp.dot(y1_sc[...], wl1_ref[...],
                 preferred_element_type=jnp.float32) + bl1_ref[...]
    yj = _psa_spline(yj, base2_ref[...], m02_ref[...], dm2_ref)     # ResPSA(h)
    acc_sc[...] += jnp.dot(yj.astype(mm_dtype), wl2_ref[...],
                           preferred_element_type=jnp.float32)

    @pl.when(j == pl.num_programs(1) - 1)
    def _():
        out = acc_sc[...] + bl2_ref[...]
        out = out * a2_ref[...] + b2_ref[...]                       # affine_2 (layerscale)
        out = out + x_ref[...].astype(jnp.float32)                  # outer residual
        o_ref[...] = out.astype(o_ref.dtype)


# ------------------------------- wrapper ------------------------------------

def _spline_coeffs(lut, alpha, beta, dm_dtype):
    """Fold the PSA output affine into exact ReLU-spline coefficients of the LUT."""
    lut = lut.astype(jnp.float32)
    alpha = alpha.astype(jnp.float32)
    beta = beta.astype(jnp.float32)
    slopes = lut[1:] - lut[:-1]                           # (G-1, C)
    base = alpha * lut[:1] + beta                         # (1, C)
    m0 = alpha * slopes[:1]                               # (1, C)
    dm = alpha * (slopes[1:] - slopes[:-1])               # (G-2, C)
    pad = (-dm.shape[0]) % KNOT_GROUP                     # sublane + group alignment
    if pad:
        dm = jnp.concatenate(
            [dm, jnp.zeros((pad, dm.shape[1]), jnp.float32)], axis=0)
    return base, m0, dm.astype(dm_dtype)                  # padded rows stay exactly zero


def _tpu_defaults():
    """Generation-aware defaults: spline dtype, row tile, physical VMEM capacity."""
    kind = ""
    try:
        kind = jax.devices()[0].device_kind.lower()
    except Exception:
        pass
    try:
        vmem_cap = int(pltpu.get_tpu_info().vmem_capacity_bytes)
    except Exception:
        vmem_cap = 64 << 20                               # conservative: v7x physical VMEM
    no_bf16_vpu = any(f"v{g}" in kind for g in (2, 3, 4, 5))
    spline_dtype = jnp.float32 if no_bf16_vpu else jnp.bfloat16
    row_tile = 512 if "v6" in kind else 256               # v6e: 128 MiB VMEM headroom
    return spline_dtype, row_tile, vmem_cap


def cross_channel_sublayer(x, params, *, row_tile=None, col_tile=128,
                           matmul_dtype=jnp.bfloat16, spline_dtype=None):
    B, P, C = x.shape
    N = B * P
    h = params["wl1"].shape[1]

    spl_default, tile_default, vmem_cap = _tpu_defaults()
    if spline_dtype is None:
        spline_dtype = spl_default
    if row_tile is None:
        row_tile = tile_default

    # Row tile: multiple of 8; when N >= 16 force >= 2 grid steps so the
    # "parallel" row axis can be sharded across v7x's 2 TensorCores.
    up8 = lambda n: ((n + 7) // 8) * 8
    tile = max(8, min((int(row_tile) // 8) * 8, up8(N)))
    if N >= 16:
        tile = min(tile, up8((N + 1) // 2))
    n_pad = (-N) % tile
    xf = x.reshape(N, C)
    if n_pad:
        # TODO(synk): padded rows are fully computed and discarded (wasted, not wrong).
        xf = jnp.pad(xf, ((0, n_pad), (0, 0)))
    n_rows = N + n_pad

    # Hidden-column chunk width: a multiple of 128 that divides h, else the full h.
    W = h
    if h % 128 == 0:
        W = max(128, min((int(col_tile) // 128) * 128, h))
        while h % W:
            W -= 128
    n_h = h // W

    # Host-side parameter prep: spline coefficients (dm in the spline compute
    # dtype) and bf16 matmul weights (halves weight DMA / VMEM, MXU-native).
    base1, m01, dm1 = _spline_coeffs(params["lut1"], params["pa1"], params["pb1"],
                                     spline_dtype)
    base2, m02, dm2 = _spline_coeffs(params["lut2"], params["pa2"], params["pb2"],
                                     spline_dtype)
    wl1 = params["wl1"].astype(matmul_dtype)
    wl2 = params["wl2"].astype(matmul_dtype)
    f32 = lambda a: a.astype(jnp.float32)
    w1, b1 = f32(params["w1"]), f32(params["b1"])
    bl1, bl2 = f32(params["bl1"]), f32(params["bl2"])
    a2, b2 = f32(params["a2"]), f32(params["b2"])
    Gm = dm1.shape[0]

    # VMEM budget from the actual footprint (double-buffered blocks, scratch,
    # spline/matmul temporaries) with headroom, capped below physical VMEM (v7x:
    # 64 MiB -> cap at 48 MiB).
    nbytes = lambda *arrs: sum(int(np.prod(a.shape)) * a.dtype.itemsize for a in arrs)
    param_bytes = nbytes(w1, b1, base1, m01, dm1, wl1, bl1,
                         base2, m02, dm2, wl2, bl2, a2, b2)
    io_bytes = 4 * tile * C * np.dtype(x.dtype).itemsize           # 2x-buffered in + out
    scratch_bytes = tile * C * (np.dtype(matmul_dtype).itemsize + 4)
    temp_bytes = 8 * tile * max(W, C) * 4                          # t / local / yj / acc temps
    est = 2 * param_bytes + io_bytes + scratch_bytes + temp_bytes + (4 << 20)
    vmem_limit = int(min(max(est, 16 << 20), (vmem_cap * 3) // 4))

    def fixed(shape):
        return pl.BlockSpec(shape, lambda i, j: (0, 0))

    in_specs = [
        pl.BlockSpec((tile, C), lambda i, j: (i, 0)),     # x rows (resident across j)
        fixed((1, C)), fixed((1, C)),                     # affine_1 w, b
        fixed((1, C)), fixed((1, C)), fixed((Gm, C)),     # PSA1 base, m0, dm
        pl.BlockSpec((C, W), lambda i, j: (0, j)),        # Linear1 W^T column chunk (bf16)
        pl.BlockSpec((1, W), lambda i, j: (0, j)),        # Linear1 bias chunk
        pl.BlockSpec((1, W), lambda i, j: (0, j)),        # PSA2 base chunk
        pl.BlockSpec((1, W), lambda i, j: (0, j)),        # PSA2 m0 chunk
        pl.BlockSpec((Gm, W), lambda i, j: (0, j)),       # PSA2 dm chunk
        pl.BlockSpec((W, C), lambda i, j: (j, 0)),        # Linear2 W^T row chunk (bf16)
        fixed((1, C)),                                    # Linear2 bias
        fixed((1, C)), fixed((1, C)),                     # affine_2 alpha, beta
    ]

    out = pl.pallas_call(
        _cross_channel_kernel,
        out_shape=jax.ShapeDtypeStruct((n_rows, C), x.dtype),
        grid_spec=pltpu.PrefetchScalarGridSpec(
            num_scalar_prefetch=0,
            grid=(n_rows // tile, n_h),
            in_specs=in_specs,
            out_specs=pl.BlockSpec((tile, C), lambda i, j: (i, 0)),
            scratch_shapes=[pltpu.VMEM((tile, C), matmul_dtype),    # spline1 output (reused)
                            pltpu.VMEM((tile, C), jnp.float32)],    # Linear2 f32 accumulator
        ),
        compiler_params=pltpu.CompilerParams(
            dimension_semantics=("parallel", "arbitrary"),
            vmem_limit_bytes=vmem_limit,
        ),
    )(xf,
      w1, b1,
      base1, m01, dm1,
      wl1, bl1,
      base2, m02, dm2,
      wl2, bl2,
      a2, b2)
    return out[:N].reshape(B, P, C)


# ---------------------------- parameter setup ------------------------------

def init_params(key, in_channels, hidden, dtype=jnp.float32):
    C, h = in_channels, hidden
    ks = jax.random.split(key, 10)
    knots = jnp.linspace(-GRID_RANGE, GRID_RANGE, GRID_SIZE)
    gelu_knots = jax.nn.gelu(knots)                      # distill_init: LUT matches GELU
    p = dict(
        # affine_1: eval-mode BatchNorm1d folded to per-channel scale/shift
        w1=1.0 + 0.02 * jax.random.normal(ks[0], (1, C)),
        b1=0.02 * jax.random.normal(ks[1], (1, C)),
        # ResPSA(in_channels): per-channel LUT + affine output (alpha_init=1.0)
        lut1=jnp.tile(gelu_knots[:, None], (1, C)),
        pa1=1.0 + 0.1 * jax.random.normal(ks[2], (1, C)),
        pb1=0.02 * jax.random.normal(ks[3], (1, C)),
        # Linear(C -> h): stored as W^T (in, out) so the kernel does x @ W^T
        wl1=0.05 * jax.random.normal(ks[4], (C, h)),
        bl1=0.02 * jax.random.normal(ks[5], (1, h)),
        # ResPSA(h)
        lut2=jnp.tile(gelu_knots[:, None], (1, h)),
        pa2=1.0 + 0.1 * jax.random.normal(ks[6], (1, h)),
        pb2=0.02 * jax.random.normal(ks[7], (1, h)),
        # Linear(h -> C)
        wl2=0.05 * jax.random.normal(ks[8], (h, C)),
        bl2=0.02 * jax.random.normal(ks[9], (1, C)),
        # affine_2: layerscale, alpha_init=0.1
        a2=0.1 * jnp.ones((1, C)),
        b2=jnp.zeros((1, C)),
    )
    return {k: v.astype(dtype) for k, v in p.items()}


# --------------------------- pure-JAX reference ----------------------------

def _psa_ref(v, lut, a, b):
    G = lut.shape[0]
    t = jnp.clip((v + GRID_RANGE) * ((G - 1) / (2.0 * GRID_RANGE)), 0.0, float(G - 1))
    i0 = jnp.clip(jnp.floor(t).astype(jnp.int32), 0, G - 2)
    f = t - i0
    lo = jnp.take_along_axis(lut, i0, axis=0)
    hi = jnp.take_along_axis(lut, i0 + 1, axis=0)
    return a * (lo * (1.0 - f) + hi * f) + b + v


def reference(x, p, matmul_dtype=jnp.float32):
    B, P, C = x.shape
    xf = x.reshape(-1, C).astype(jnp.float32)
    x_res = xf

    def mm(v, w):
        return jnp.dot(v.astype(matmul_dtype), w.astype(matmul_dtype),
                       preferred_element_type=jnp.float32)

    y = xf * p["w1"] + p["b1"]
    y = _psa_ref(y, p["lut1"], p["pa1"], p["pb1"])
    y = mm(y, p["wl1"]) + p["bl1"]
    y = _psa_ref(y, p["lut2"], p["pa2"], p["pb2"])
    y = mm(y, p["wl2"]) + p["bl2"]
    y = y * p["a2"] + p["b2"]
    return (y + x_res).reshape(B, P, C).astype(x.dtype)


# --------------------------------- main -------------------------------------

if __name__ == "__main__":
    key = jax.random.PRNGKey(0)
    kx, kp = jax.random.split(key)

    B, P, C = 2, 8, 128           # batch=2, in_patches=8, in_channels=128 (lane-dense)
    h = 4 * C                     # hidden_factor=4

    x = jax.random.normal(kx, (B, P, C), dtype=jnp.float32)
    params = init_params(kp, C, h)

    # 1) Exactness path: f32 spline (exact ReLU-spline rewrite of the lerp LUT),
    #    so only bf16-MXU rounding differs from a reference using bf16 matmuls.
    out_exact = jax.block_until_ready(
        cross_channel_sublayer(x, params, spline_dtype=jnp.float32))
    ref_bf16 = reference(x, params, matmul_dtype=jnp.bfloat16)
    np.testing.assert_allclose(np.asarray(out_exact), np.asarray(ref_bf16),
                               rtol=2e-3, atol=2e-3)

    # 2) Default path (bf16 spline math on v6e/v7x, f32 on v5e and older) vs the
    #    pure-f32 module semantics; the 0.1 layerscale keeps the bf16 spline /
    #    bf16 matmul rounding well inside this tolerance.
    out = jax.block_until_ready(cross_channel_sublayer(x, params))
    ref_f32 = reference(x, params, matmul_dtype=jnp.float32)
    np.testing.assert_allclose(np.asarray(out), np.asarray(ref_f32),
                               rtol=2e-2, atol=2e-2)

    print("KERNEL_OK")
</pallas_src>

<mosaic_0001>
module attributes {stable_mosaic.version = 11 : i64} {
  func.func @_cross_channel_kernel(%arg0: i32, %arg1: i32, %arg2: memref<8x128xf32, #tpu.memory_space<vmem>>, %arg3: memref<1x128xf32, #tpu.memory_space<vmem>>, %arg4: memref<1x128xf32, #tpu.memory_space<vmem>>, %arg5: memref<1x128xf32, #tpu.memory_space<vmem>>, %arg6: memref<1x128xf32, #tpu.memory_space<vmem>>, %arg7: memref<64x128xf32, #tpu.memory_space<vmem>>, %arg8: memref<128x128xbf16, #tpu.memory_space<vmem>>, %arg9: memref<1x128xf32, #tpu.memory_space<vmem>>, %arg10: memref<1x128xf32, #tpu.memory_space<vmem>>, %arg11: memref<1x128xf32, #tpu.memory_space<vmem>>, %arg12: memref<64x128xf32, #tpu.memory_space<vmem>>, %arg13: memref<128x128xbf16, #tpu.memory_space<vmem>>, %arg14: memref<1x128xf32, #tpu.memory_space<vmem>>, %arg15: memref<1x128xf32, #tpu.memory_space<vmem>>, %arg16: memref<1x128xf32, #tpu.memory_space<vmem>>, %arg17: memref<8x128xf32, #tpu.memory_space<vmem>>, %arg18: memref<8x128xbf16, #tpu.memory_space<vmem>>, %arg19: memref<8x128xf32, #tpu.memory_space<vmem>>) attributes {dimension_semantics = [#tpu.dimension_semantics<parallel>, #tpu.dimension_semantics<arbitrary>], iteration_bounds = array<i64: 2, 4>, scalar_prefetch = 0 : i64, scratch_operands = 2 : i64, tpu.core_type = #tpu.core_type<tc>, window_params = [{transform_indices = @transform_0, window_bounds = array<i64: 8, 128>}, {pipeline_mode = #tpu.pipeline_mode<synchronous>, transform_indices = @transform_1, window_bounds = array<i64: 1, 128>}, {pipeline_mode = #tpu.pipeline_mode<synchronous>, transform_indices = @transform_2, window_bounds = array<i64: 1, 128>}, {pipeline_mode = #tpu.pipeline_mode<synchronous>, transform_indices = @transform_3, window_bounds = array<i64: 1, 128>}, {pipeline_mode = #tpu.pipeline_mode<synchronous>, transform_indices = @transform_4, window_bounds = array<i64: 1, 128>}, {pipeline_mode = #tpu.pipeline_mode<synchronous>, transform_indices = @transform_5, window_bounds = array<i64: 64, 128>}, {transform_indices = @transform_6, window_bounds = array<i64: 128, 128>}, {transform_indices = @transform_7, window_bounds = array<i64: 1, 128>}, {transform_indices = @transform_8, window_bounds = array<i64: 1, 128>}, {transform_indices = @transform_9, window_bounds = array<i64: 1, 128>}, {transform_indices = @transform_10, window_bounds = array<i64: 64, 128>}, {transform_indices = @transform_11, window_bounds = array<i64: 128, 128>}, {pipeline_mode = #tpu.pipeline_mode<synchronous>, transform_indices = @transform_12, window_bounds = array<i64: 1, 128>}, {pipeline_mode = #tpu.pipeline_mode<synchronous>, transform_indices = @transform_13, window_bounds = array<i64: 1, 128>}, {pipeline_mode = #tpu.pipeline_mode<synchronous>, transform_indices = @transform_14, window_bounds = array<i64: 1, 128>}, {transform_indices = @transform_15, window_bounds = array<i64: 8, 128>}]} {
    %c0_i32 = arith.constant 0 : i32
    %0 = arith.cmpi eq, %arg1, %c0_i32 : i32
    %1 = arith.extui %0 : i1 to i32
    %c0_i32_0 = arith.constant 0 : i32
    %2 = arith.cmpi ne, %1, %c0_i32_0 : i32
    scf.if %2 {
      %c0_176 = arith.constant 0 : index
      %c0_177 = arith.constant 0 : index
      %657 = vector.load %arg2[%c0_176, %c0_177] : memref<8x128xf32, #tpu.memory_space<vmem>>, vector<8x128xf32>
      %c0_178 = arith.constant 0 : index
      %c0_179 = arith.constant 0 : index
      %658 = vector.load %arg3[%c0_178, %c0_179] : memref<1x128xf32, #tpu.memory_space<vmem>>, vector<1x128xf32>
      %659 = vector.broadcast %658 : vector<1x128xf32> to vector<8x128xf32>
      %660 = arith.mulf %657, %659 : vector<8x128xf32>
      %c0_180 = arith.constant 0 : index
      %c0_181 = arith.constant 0 : index
      %661 = vector.load %arg4[%c0_180, %c0_181] : memref<1x128xf32, #tpu.memory_space<vmem>>, vector<1x128xf32>
      %662 = vector.broadcast %661 : vector<1x128xf32> to vector<8x128xf32>
      %663 = arith.addf %660, %662 : vector<8x128xf32>
      %c0_182 = arith.constant 0 : index
      %c0_183 = arith.constant 0 : index
      %664 = vector.load %arg5[%c0_182, %c0_183] : memref<1x128xf32, #tpu.memory_space<vmem>>, vector<1x128xf32>
      %c0_184 = arith.constant 0 : index
      %c0_185 = arith.constant 0 : index
      %665 = vector.load %arg6[%c0_184, %c0_185] : memref<1x128xf32, #tpu.memory_space<vmem>>, vector<1x128xf32>
      %cst_186 = arith.constant 4.000000e+00 : f32
      %666 = vector.broadcast %cst_186 : f32 to vector<8x128xf32>
      %667 = arith.addf %663, %666 : vector<8x128xf32>
      %cst_187 = arith.constant 7.875000e+00 : f32
      %668 = vector.broadcast %cst_187 : f32 to vector<8x128xf32>
      %669 = arith.mulf %667, %668 : vector<8x128xf32>
      %cst_188 = arith.constant 0.000000e+00 : f32
      %cst_189 = arith.constant 6.300000e+01 : f32
      %670 = vector.broadcast %cst_188 : f32 to vector<8x128xf32>
      %671 = arith.maximumf %670, %669 : vector<8x128xf32>
      %672 = vector.broadcast %cst_189 : f32 to vector<8x128xf32>
      %673 = arith.minimumf %672, %671 : vector<8x128xf32>
      %674 = vector.broadcast %665 : vector<1x128xf32> to vector<8x128xf32>
      %675 = arith.mulf %674, %673 : vector<8x128xf32>
      %676 = vector.broadcast %664 : vector<1x128xf32> to vector<8x128xf32>
      %677 = arith.addf %676, %675 : vector<8x128xf32>
      %678 = arith.addf %677, %663 : vector<8x128xf32>
      %c0_i32_190 = arith.constant 0 : i32
      %c8_i32_191 = arith.constant 8 : i32
      %679 = arith.muli %c0_i32_190, %c8_i32_191 : i32
      %680 = tpu.assume_multiple %679, 8 : i32
      %681 = arith.index_cast %680 : i32 to index
      %c0_192 = arith.constant 0 : index
      %682 = vector.load %arg7[%681, %c0_192] : memref<64x128xf32, #tpu.memory_space<vmem>>, vector<8x128xf32>
      %c8_i32_193 = arith.constant 8 : i32
      %683 = arith.muli %c0_i32_190, %c8_i32_193 : i32
      %c1_i32_194 = arith.constant 1 : i32
      %684 = arith.addi %683, %c1_i32_194 : i32
      %685 = arith.sitofp %684 : i32 to f32
      %686 = vector.extract_strided_slice %682 {offsets = [0, 0], sizes = [1, 128], strides = [1, 1]} : vector<8x128xf32> to vector<1x128xf32>
      %687 = vector.broadcast %685 : f32 to vector<8x128xf32>
      %688 = arith.subf %673, %687 : vector<8x128xf32>
      %cst_195 = arith.constant 0.000000e+00 : f32
      %689 = vector.broadcast %cst_195 : f32 to vector<8x128xf32>
      %690 = arith.maximumf %688, %689 : vector<8x128xf32>
      %691 = vector.broadcast %686 : vector<1x128xf32> to vector<8x128xf32>
      %692 = arith.mulf %691, %690 : vector<8x128xf32>
      %693 = vector.extract_strided_slice %682 {offsets = [1, 0], sizes = [1, 128], strides = [1, 1]} : vector<8x128xf32> to vector<1x128xf32>
      %cst_196 = arith.constant 1.000000e+00 : f32
      %694 = arith.addf %685, %cst_196 : f32
      %695 = vector.broadcast %694 : f32 to vector<8x128xf32>
      %696 = arith.subf %673, %695 : vector<8x128xf32>
      %cst_197 = arith.constant 0.000000e+00 : f32
      %697 = vector.broadcast %cst_197 : f32 to vector<8x128xf32>
      %698 = arith.maximumf %696, %697 : vector<8x128xf32>
      %699 = vector.broadcast %693 : vector<1x128xf32> to vector<8x128xf32>
      %700 = arith.mulf %699, %698 : vector<8x128xf32>
      %701 = arith.addf %692, %700 : vector<8x128xf32>
      %702 = vector.extract_strided_slice %682 {offsets = [2, 0], sizes = [1, 128], strides = [1, 1]} : vector<8x128xf32> to vector<1x128xf32>
      %cst_198 = arith.constant 2.000000e+00 : f32
      %703 = arith.addf %685, %cst_198 : f32
      %704 = vector.broadcast %703 : f32 to vector<8x128xf32>
      %705 = arith.subf %673, %704 : vector<8x128xf32>
      %cst_199 = arith.constant 0.000000e+00 : f32
      %706 = vector.broadcast %cst_199 : f32 to vector<8x128xf32>
      %707 = arith.maximumf %705, %706 : vector<8x128xf32>
      %708 = vector.broadcast %702 : vector<1x128xf32> to vector<8x128xf32>
      %709 = arith.mulf %708, %707 : vector<8x128xf32>
      %710 = arith.addf %701, %709 : vector<8x128xf32>
      %711 = vector.extract_strided_slice %682 {offsets = [3, 0], sizes = [1, 128], strides = [1, 1]} : vector<8x128xf32> to vector<1x128xf32>
      %cst_200 = arith.constant 3.000000e+00 : f32
      %712 = arith.addf %685, %cst_200 : f32
      %713 = vector.broadcast %712 : f32 to vector<8x128xf32>
      %714 = arith.subf %673, %713 : vector<8x128xf32>
      %cst_201 = arith.constant 0.000000e+00 : f32
      %715 = vector.broadcast %cst_201 : f32 to vector<8x128xf32>
      %716 = arith.maximumf %714, %715 : vector<8x128xf32>
      %717 = vector.broadcast %711 : vector<1x128xf32> to vector<8x128xf32>
      %718 = arith.mulf %717, %716 : vector<8x128xf32>
      %719 = arith.addf %710, %718 : vector<8x128xf32>
      %720 = vector.extract_strided_slice %682 {offsets = [4, 0], sizes = [1, 128], strides = [1, 1]} : vector<8x128xf32> to vector<1x128xf32>
      %cst_202 = arith.constant 4.000000e+00 : f32
      %721 = arith.addf %685, %cst_202 : f32
      %722 = vector.broadcast %721 : f32 to vector<8x128xf32>
      %723 = arith.subf %673, %722 : vector<8x128xf32>
      %cst_203 = arith.constant 0.000000e+00 : f32
      %724 = vector.broadcast %cst_203 : f32 to vector<8x128xf32>
      %725 = arith.maximumf %723, %724 : vector<8x128xf32>
      %726 = vector.broadcast %720 : vector<1x128xf32> to vector<8x128xf32>
      %727 = arith.mulf %726, %725 : vector<8x128xf32>
      %728 = arith.addf %719, %727 : vector<8x128xf32>
      %729 = vector.extract_strided_slice %682 {offsets = [5, 0], sizes = [1, 128], strides = [1, 1]} : vector<8x128xf32> to vector<1x128xf32>
      %cst_204 = arith.constant 5.000000e+00 : f32
      %730 = arith.addf %685, %cst_204 : f32
      %731 = vector.broadcast %730 : f32 to vector<8x128xf32>
      %732 = arith.subf %673, %731 : vector<8x128xf32>
      %cst_205 = arith.constant 0.000000e+00 : f32
      %733 = vector.broadcast %cst_205 : f32 to vector<8x128xf32>
      %734 = arith.maximumf %732, %733 : vector<8x128xf32>
      %735 = vector.broadcast %729 : vector<1x128xf32> to vector<8x128xf32>
      %736 = arith.mulf %735, %734 : vector<8x128xf32>
      %737 = arith.addf %728, %736 : vector<8x128xf32>
      %738 = vector.extract_strided_slice %682 {offsets = [6, 0], sizes = [1, 128], strides = [1, 1]} : vector<8x128xf32> to vector<1x128xf32>
      %cst_206 = arith.constant 6.000000e+00 : f32
      %739 = arith.addf %685, %cst_206 : f32
      %740 = vector.broadcast %739 : f32 to vector<8x128xf32>
      %741 = arith.subf %673, %740 : vector<8x128xf32>
      %cst_207 = arith.constant 0.000000e+00 : f32
      %742 = vector.broadcast %cst_207 : f32 to vector<8x128xf32>
      %743 = arith.maximumf %741, %742 : vector<8x128xf32>
      %744 = vector.broadcast %738 : vector<1x128xf32> to vector<8x128xf32>
      %745 = arith.mulf %744, %743 : vector<8x128xf32>
      %746 = arith.addf %737, %745 : vector<8x128xf32>
      %747 = vector.extract_strided_slice %682 {offsets = [7, 0], sizes = [1, 128], strides = [1, 1]} : vector<8x128xf32> to vector<1x128xf32>
      %cst_208 = arith.constant 7.000000e+00 : f32
      %748 = arith.addf %685, %cst_208 : f32
      %749 = vector.broadcast %748 : f32 to vector<8x128xf32>
      %750 = arith.subf %673, %749 : vector<8x128xf32>
      %cst_209 = arith.constant 0.000000e+00 : f32
      %751 = vector.broadcast %cst_209 : f32 to vector<8x128xf32>
      %752 = arith.maximumf %750, %751 : vector<8x128xf32>
      %753 = vector.broadcast %747 : vector<1x128xf32> to vector<8x128xf32>
      %754 = arith.mulf %753, %752 : vector<8x128xf32>
      %755 = arith.addf %746, %754 : vector<8x128xf32>
      %756 = arith.addf %678, %755 : vector<8x128xf32>
      %c1_i32_210 = arith.constant 1 : i32
      %c8_i32_211 = arith.constant 8 : i32
      %757 = arith.muli %c1_i32_210, %c8_i32_211 : i32
      %758 = tpu.assume_multiple %757, 8 : i32
      %759 = arith.index_cast %758 : i32 to index
      %c0_212 = arith.constant 0 : index
      %760 = vector.load %arg7[%759, %c0_212] : memref<64x128xf32, #tpu.memory_space<vmem>>, vector<8x128xf32>
      %c8_i32_213 = arith.constant 8 : i32
      %761 = arith.muli %c1_i32_210, %c8_i32_213 : i32
      %c1_i32_214 = arith.constant 1 : i32
      %762 = arith.addi %761, %c1_i32_214 : i32
      %763 = arith.sitofp %762 : i32 to f32
      %764 = vector.extract_strided_slice %760 {offsets = [0, 0], sizes = [1, 128], strides = [1, 1]} : vector<8x128xf32> to vector<1x128xf32>
      %765 = vector.broadcast %763 : f32 to vector<8x128xf32>
      %766 = arith.subf %673, %765 : vector<8x128xf32>
      %cst_215 = arith.constant 0.000000e+00 : f32
      %767 = vector.broadcast %cst_215 : f32 to vector<8x128xf32>
      %768 = arith.maximumf %766, %767 : vector<8x128xf32>
      %769 = vector.broadcast %764 : vector<1x128xf32> to vector<8x128xf32>
      %770 = arith.mulf %769, %768 : vector<8x128xf32>
      %771 = vector.extract_strided_slice %760 {offsets = [1, 0], sizes = [1, 128], strides = [1, 1]} : vector<8x128xf32> to vector<1x128xf32>
      %cst_216 = arith.constant 1.000000e+00 : f32
      %772 = arith.addf %763, %cst_216 : f32
      %773 = vector.broadcast %772 : f32 to vector<8x128xf32>
      %774 = arith.subf %673, %773 : vector<8x128xf32>
      %cst_217 = arith.constant 0.000000e+00 : f32
      %775 = vector.broadcast %cst_217 : f32 to vector<8x128xf32>
      %776 = arith.maximumf %774, %775 : vector<8x128xf32>
      %777 = vector.broadcast %771 : vector<1x128xf32> to vector<8x128xf32>
      %778 = arith.mulf %777, %776 : vector<8x128xf32>
      %779 = arith.addf %770, %778 : vector<8x128xf32>
      %780 = vector.extract_strided_slice %760 {offsets = [2, 0], sizes = [1, 128], strides = [1, 1]} : vector<8x128xf32> to vector<1x128xf32>
      %cst_218 = arith.constant 2.000000e+00 : f32
      %781 = arith.addf %763, %cst_218 : f32
      %782 = vector.broadcast %781 : f32 to vector<8x128xf32>
      %783 = arith.subf %673, %782 : vector<8x128xf32>
      %cst_219 = arith.constant 0.000000e+00 : f32
      %784 = vector.broadcast %cst_219 : f32 to vector<8x128xf32>
      %785 = arith.maximumf %783, %784 : vector<8x128xf32>
      %786 = vector.broadcast %780 : vector<1x128xf32> to vector<8x128xf32>
      %787 = arith.mulf %786, %785 : vector<8x128xf32>
      %788 = arith.addf %779, %787 : vector<8x128xf32>
      %789 = vector.extract_strided_slice %760 {offsets = [3, 0], sizes = [1, 128], strides = [1, 1]} : vector<8x128xf32> to vector<1x128xf32>
      %cst_220 = arith.constant 3.000000e+00 : f32
      %790 = arith.addf %763, %cst_220 : f32
      %791 = vector.broadcast %790 : f32 to vector<8x128xf32>
      %792 = arith.subf %673, %791 : vector<8x128xf32>
      %cst_221 = arith.constant 0.000000e+00 : f32
      %793 = vector.broadcast %cst_221 : f32 to vector<8x128xf32>
      %794 = arith.maximumf %792, %793 : vector<8x128xf32>
      %795 = vector.broadcast %789 : vector<1x128xf32> to vector<8x128xf32>
      %796 = arith.mulf %795, %794 : vector<8x128xf32>
      %797 = arith.addf %788, %796 : vector<8x128xf32>
      %798 = vector.extract_strided_slice %760 {offsets = [4, 0], sizes = [1, 128], strides = [1, 1]} : vector<8x128xf32> to vector<1x128xf32>
      %cst_222 = arith.constant 4.000000e+00 : f32
      %799 = arith.addf %763, %cst_222 : f32
      %800 = vector.broadcast %799 : f32 to vector<8x128xf32>
      %801 = arith.subf %673, %800 : vector<8x128xf32>
      %cst_223 = arith.constant 0.000000e+00 : f32
      %802 = vector.broadcast %cst_223 : f32 to vector<8x128xf32>
      %803 = arith.maximumf %801, %802 : vector<8x128xf32>
      %804 = vector.broadcast %798 : vector<1x128xf32> to vector<8x128xf32>
      %805 = arith.mulf %804, %803 : vector<8x128xf32>
      %806 = arith.addf %797, %805 : vector<8x128xf32>
      %807 = vector.extract_strided_slice %760 {offsets = [5, 0], sizes = [1, 128], strides = [1, 1]} : vector<8x128xf32> to vector<1x128xf32>
      %cst_224 = arith.constant 5.000000e+00 : f32
      %808 = arith.addf %763, %cst_224 : f32
      %809 = vector.broadcast %808 : f32 to vector<8x128xf32>
      %810 = arith.subf %673, %809 : vector<8x128xf32>
      %cst_225 = arith.constant 0.000000e+00 : f32
      %811 = vector.broadcast %cst_225 : f32 to vector<8x128xf32>
      %812 = arith.maximumf %810, %811 : vector<8x128xf32>
      %813 = vector.broadcast %807 : vector<1x128xf32> to vector<8x128xf32>
      %814 = arith.mulf %813, %812 : vector<8x128xf32>
      %815 = arith.addf %806, %814 : vector<8x128xf32>
      %816 = vector.extract_strided_slice %760 {offsets = [6, 0], sizes = [1, 128], strides = [1, 1]} : vector<8x128xf32> to vector<1x128xf32>
      %cst_226 = arith.constant 6.000000e+00 : f32
      %817 = arith.addf %763, %cst_226 : f32
      %818 = vector.broadcast %817 : f32 to vector<8x128xf32>
      %819 = arith.subf %673, %818 : vector<8x128xf32>
      %cst_227 = arith.constant 0.000000e+00 : f32
      %820 = vector.broadcast %cst_227 : f32 to vector<8x128xf32>
      %821 = arith.maximumf %819, %820 : vector<8x128xf32>
      %822 = vector.broadcast %816 : vector<1x128xf32> to vector<8x128xf32>
      %823 = arith.mulf %822, %821 : vector<8x128xf32>
      %824 = arith.addf %815, %823 : vector<8x128xf32>
      %825 = vector.extract_strided_slice %760 {offsets = [7, 0], sizes = [1, 128], strides = [1, 1]} : vector<8x128xf32> to vector<1x128xf32>
      %cst_228 = arith.constant 7.000000e+00 : f32
      %826 = arith.addf %763, %cst_228 : f32
      %827 = vector.broadcast %826 : f32 to vector<8x128xf32>
      %828 = arith.subf %673, %827 : vector<8x128xf32>
      %cst_229 = arith.constant 0.000000e+00 : f32
      %829 = vector.broadcast %cst_229 : f32 to vector<8x128xf32>
      %830 = arith.maximumf %828, %829 : vector<8x128xf32>
      %831 = vector.broadcast %825 : vector<1x128xf32> to vector<8x128xf32>
      %832 = arith.mulf %831, %830 : vector<8x128xf32>
      %833 = arith.addf %824, %832 : vector<8x128xf32>
      %834 = arith.addf %756, %833 : vector<8x128xf32>
      %c2_i32_230 = arith.constant 2 : i32
      %c8_i32_231 = arith.constant 8 : i32
      %835 = arith.muli %c2_i32_230, %c8_i32_231 : i32
      %836 = tpu.assume_multiple %835, 8 : i32
      %837 = arith.index_cast %836 : i32 to index
      %c0_232 = arith.constant 0 : index
      %838 = vector.load %arg7[%837, %c0_232] : memref<64x128xf32, #tpu.memory_space<vmem>>, vector<8x128xf32>
      %c8_i32_233 = arith.constant 8 : i32
      %839 = arith.muli %c2_i32_230, %c8_i32_233 : i32
      %c1_i32_234 = arith.constant 1 : i32
      %840 = arith.addi %839, %c1_i32_234 : i32
      %841 = arith.sitofp %840 : i32 to f32
      %842 = vector.extract_strided_slice %838 {offsets = [0, 0], sizes = [1, 128], strides = [1, 1]} : vector<8x128xf32> to vector<1x128xf32>
      %843 = vector.broadcast %841 : f32 to vector<8x128xf32>
      %844 = arith.subf %673, %843 : vector<8x128xf32>
      %cst_235 = arith.constant 0.000000e+00 : f32
      %845 = vector.broadcast %cst_235 : f32 to vector<8x128xf32>
      %846 = arith.maximumf %844, %845 : vector<8x128xf32>
      %847 = vector.broadcast %842 : vector<1x128xf32> to vector<8x128xf32>
      %848 = arith.mulf %847, %846 : vector<8x128xf32>
      %849 = vector.extract_strided_slice %838 {offsets = [1, 0], sizes = [1, 128], strides = [1, 1]} : vector<8x128xf32> to vector<1x128xf32>
      %cst_236 = arith.constant 1.000000e+00 : f32
      %850 = arith.addf %841, %cst_236 : f32
      %851 = vector.broadcast %850 : f32 to vector<8x128xf32>
      %852 = arith.subf %673, %851 : vector<8x128xf32>
      %cst_237 = arith.constant 0.000000e+00 : f32
      %853 = vector.broadcast %cst_237 : f32 to vector<8x128xf32>
      %854 = arith.maximumf %852, %853 : vector<8x128xf32>
      %855 = vector.broadcast %849 : vector<1x128xf32> to vector<8x128xf32>
      %856 = arith.mulf %855, %854 : vector<8x128xf32>
      %857 = arith.addf %848, %856 : vector<8x128xf32>
      %858 = vector.extract_strided_slice %838 {offsets = [2, 0], sizes = [1, 128], strides = [1, 1]} : vector<8x128xf32> to vector<1x128xf32>
      %cst_238 = arith.constant 2.000000e+00 : f32
      %859 = arith.addf %841, %cst_238 : f32
      %860 = vector.broadcast %859 : f32 to vector<8x128xf32>
      %861 = arith.subf %673, %860 : vector<8x128xf32>
      %cst_239 = arith.constant 0.000000e+00 : f32
      %862 = vector.broadcast %cst_239 : f32 to vector<8x128xf32>
      %863 = arith.maximumf %861, %862 : vector<8x128xf32>
      %864 = vector.broadcast %858 : vector<1x128xf32> to vector<8x128xf32>
      %865 = arith.mulf %864, %863 : vector<8x128xf32>
      %866 = arith.addf %857, %865 : vector<8x128xf32>
      %867 = vector.extract_strided_slice %838 {offsets = [3, 0], sizes = [1, 128], strides = [1, 1]} : vector<8x128xf32> to vector<1x128xf32>
      %cst_240 = arith.constant 3.000000e+00 : f32
      %868 = arith.addf %841, %cst_240 : f32
      %869 = vector.broadcast %868 : f32 to vector<8x128xf32>
      %870 = arith.subf %673, %869 : vector<8x128xf32>
      %cst_241 = arith.constant 0.000000e+00 : f32
      %871 = vector.broadcast %cst_241 : f32 to vector<8x128xf32>
      %872 = arith.maximumf %870, %871 : vector<8x128xf32>
      %873 = vector.broadcast %867 : vector<1x128xf32> to vector<8x128xf32>
      %874 = arith.mulf %873, %872 : vector<8x128xf32>
      %875 = arith.addf %866, %874 : vector<8x128xf32>
      %876 = vector.extract_strided_slice %838 {offsets = [4, 0], sizes = [1, 128], strides = [1, 1]} : vector<8x128xf32> to vector<1x128xf32>
      %cst_242 = arith.constant 4.000000e+00 : f32
      %877 = arith.addf %841, %cst_242 : f32
      %878 = vector.broadcast %877 : f32 to vector<8x128xf32>
      %879 = arith.subf %673, %878 : vector<8x128xf32>
      %cst_243 = arith.constant 0.000000e+00 : f32
      %880 = vector.broadcast %cst_243 : f32 to vector<8x128xf32>
      %881 = arith.maximumf %879, %880 : vector<8x128xf32>
      %882 = vector.broadcast %876 : vector<1x128xf32> to vector<8x128xf32>
      %883 = arith.mulf %882, %881 : vector<8x128xf32>
      %884 = arith.addf %875, %883 : vector<8x128xf32>
      %885 = vector.extract_strided_slice %838 {offsets = [5, 0], sizes = [1, 128], strides = [1, 1]} : vector<8x128xf32> to vector<1x128xf32>
      %cst_244 = arith.constant 5.000000e+00 : f32
      %886 = arith.addf %841, %cst_244 : f32
      %887 = vector.broadcast %886 : f32 to vector<8x128xf32>
      %888 = arith.subf %673, %887 : vector<8x128xf32>
      %cst_245 = arith.constant 0.000000e+00 : f32
      %889 = vector.broadcast %cst_245 : f32 to vector<8x128xf32>
      %890 = arith.maximumf %888, %889 : vector<8x128xf32>
      %891 = vector.broadcast %885 : vector<1x128xf32> to vector<8x128xf32>
      %892 = arith.mulf %891, %890 : vector<8x128xf32>
      %893 = arith.addf %884, %892 : vector<8x128xf32>
      %894 = vector.extract_strided_slice %838 {offsets = [6, 0], sizes = [1, 128], strides = [1, 1]} : vector<8x128xf32> to vector<1x128xf32>
      %cst_246 = arith.constant 6.000000e+00 : f32
      %895 = arith.addf %841, %cst_246 : f32
      %896 = vector.broadcast %895 : f32 to vector<8x128xf32>
      %897 = arith.subf %673, %896 : vector<8x128xf32>
      %cst_247 = arith.constant 0.000000e+00 : f32
      %898 = vector.broadcast %cst_247 : f32 to vector<8x128xf32>
      %899 = arith.maximumf %897, %898 : vector<8x128xf32>
      %900 = vector.broadcast %894 : vector<1x128xf32> to vector<8x128xf32>
      %901 = arith.mulf %900, %899 : vector<8x128xf32>
      %902 = arith.addf %893, %901 : vector<8x128xf32>
      %903 = vector.extract_strided_slice %838 {offsets = [7, 0], sizes = [1, 128], strides = [1, 1]} : vector<8x128xf32> to vector<1x128xf32>
      %cst_248 = arith.constant 7.000000e+00 : f32
      %904 = arith.addf %841, %cst_248 : f32
      %905 = vector.broadcast %904 : f32 to vector<8x128xf32>
      %906 = arith.subf %673, %905 : vector<8x128xf32>
      %cst_249 = arith.constant 0.000000e+00 : f32
      %907 = vector.broadcast %cst_249 : f32 to vector<8x128xf32>
      %908 = arith.maximumf %906, %907 : vector<8x128xf32>
      %909 = vector.broadcast %903 : vector<1x128xf32> to vector<8x128xf32>
      %910 = arith.mulf %909, %908 : vector<8x128xf32>
      %911 = arith.addf %902, %910 : vector<8x128xf32>
      %912 = arith.addf %834, %911 : vector<8x128xf32>
      %c3_i32_250 = arith.constant 3 : i32
      %c8_i32_251 = arith.constant 8 : i32
      %913 = arith.muli %c3_i32_250, %c8_i32_251 : i32
      %914 = tpu.assume_multiple %913, 8 : i32
      %915 = arith.index_cast %914 : i32 to index
      %c0_252 = arith.constant 0 : index
      %916 = vector.load %arg7[%915, %c0_252] : memref<64x128xf32, #tpu.memory_space<vmem>>, vector<8x128xf32>
      %c8_i32_253 = arith.constant 8 : i32
      %917 = arith.muli %c3_i32_250, %c8_i32_253 : i32
      %c1_i32_254 = arith.constant 1 : i32
      %918 = arith.addi %917, %c1_i32_254 : i32
      %919 = arith.sitofp %918 : i32 to f32
      %920 = vector.extract_strided_slice %916 {offsets = [0, 0], sizes = [1, 128], strides = [1, 1]} : vector<8x128xf32> to vector<1x128xf32>
      %921 = vector.broadcast %919 : f32 to vector<8x128xf32>
      %922 = arith.subf %673, %921 : vector<8x128xf32>
      %cst_255 = arith.constant 0.000000e+00 : f32
      %923 = vector.broadcast %cst_255 : f32 to vector<8x128xf32>
      %924 = arith.maximumf %922, %923 : vector<8x128xf32>
      %925 = vector.broadcast %920 : vector<1x128xf32> to vector<8x128xf32>
      %926 = arith.mulf %925, %924 : vector<8x128xf32>
      %927 = vector.extract_strided_slice %916 {offsets = [1, 0], sizes = [1, 128], strides = [1, 1]} : vector<8x128xf32> to vector<1x128xf32>
      %cst_256 = arith.constant 1.000000e+00 : f32
      %928 = arith.addf %919, %cst_256 : f32
      %929 = vector.broadcast %928 : f32 to vector<8x128xf32>
      %930 = arith.subf %673, %929 : vector<8x128xf32>
      %cst_257 = arith.constant 0.000000e+00 : f32
      %931 = vector.broadcast %cst_257 : f32 to vector<8x128xf32>
      %932 = arith.maximumf %930, %931 : vector<8x128xf32>
      %933 = vector.broadcast %927 : vector<1x128xf32> to vector<8x128xf32>
      %934 = arith.mulf %933, %932 : vector<8x128xf32>
      %935 = arith.addf %926, %934 : vector<8x128xf32>
      %936 = vector.extract_strided_slice %916 {offsets = [2, 0], sizes = [1, 128], strides = [1, 1]} : vector<8x128xf32> to vector<1x128xf32>
      %cst_258 = arith.constant 2.000000e+00 : f32
      %937 = arith.addf %919, %cst_258 : f32
      %938 = vector.broadcast %937 : f32 to vector<8x128xf32>
      %939 = arith.subf %673, %938 : vector<8x128xf32>
      %cst_259 = arith.constant 0.000000e+00 : f32
      %940 = vector.broadcast %cst_259 : f32 to vector<8x128xf32>
      %941 = arith.maximumf %939, %940 : vector<8x128xf32>
      %942 = vector.broadcast %936 : vector<1x128xf32> to vector<8x128xf32>
      %943 = arith.mulf %942, %941 : vector<8x128xf32>
      %944 = arith.addf %935, %943 : vector<8x128xf32>
      %945 = vector.extract_strided_slice %916 {offsets = [3, 0], sizes = [1, 128], strides = [1, 1]} : vector<8x128xf32> to vector<1x128xf32>
      %cst_260 = arith.constant 3.000000e+00 : f32
      %946 = arith.addf %919, %cst_260 : f32
      %947 = vector.broadcast %946 : f32 to vector<8x128xf32>
      %948 = arith.subf %673, %947 : vector<8x128xf32>
      %cst_261 = arith.constant 0.000000e+00 : f32
      %949 = vector.broadcast %cst_261 : f32 to vector<8x128xf32>
      %950 = arith.maximumf %948, %949 : vector<8x128xf32>
      %951 = vector.broadcast %945 : vector<1x128xf32> to vector<8x128xf32>
      %952 = arith.mulf %951, %950 : vector<8x128xf32>
      %953 = arith.addf %944, %952 : vector<8x128xf32>
      %954 = vector.extract_strided_slice %916 {offsets = [4, 0], sizes = [1, 128], strides = [1, 1]} : vector<8x128xf32> to vector<1x128xf32>
      %cst_262 = arith.constant 4.000000e+00 : f32
      %955 = arith.addf %919, %cst_262 : f32
      %956 = vector.broadcast %955 : f32 to vector<8x128xf32>
      %957 = arith.subf %673, %956 : vector<8x128xf32>
      %cst_263 = arith.constant 0.000000e+00 : f32
      %958 = vector.broadcast %cst_263 : f32 to vector<8x128xf32>
      %959 = arith.maximumf %957, %958 : vector<8x128xf32>
      %960 = vector.broadcast %954 : vector<1x128xf32> to vector<8x128xf32>
      %961 = arith.mulf %960, %959 : vector<8x128xf32>
      %962 = arith.addf %953, %961 : vector<8x128xf32>
      %963 = vector.extract_strided_slice %916 {offsets = [5, 0], sizes = [1, 128], strides = [1, 1]} : vector<8x128xf32> to vector<1x128xf32>
      %cst_264 = arith.constant 5.000000e+00 : f32
      %964 = arith.addf %919, %cst_264 : f32
      %965 = vector.broadcast %964 : f32 to vector<8x128xf32>
      %966 = arith.subf %673, %965 : vector<8x128xf32>
      %cst_265 = arith.constant 0.000000e+00 : f32
      %967 = vector.broadcast %cst_265 : f32 to vector<8x128xf32>
      %968 = arith.maximumf %966, %967 : vector<8x128xf32>
      %969 = vector.broadcast %963 : vector<1x128xf32> to vector<8x128xf32>
      %970 = arith.mulf %969, %968 : vector<8x128xf32>
      %971 = arith.addf %962, %970 : vector<8x128xf32>
      %972 = vector.extract_strided_slice %916 {offsets = [6, 0], sizes = [1, 128], strides = [1, 1]} : vector<8x128xf32> to vector<1x128xf32>
      %cst_266 = arith.constant 6.000000e+00 : f32
      %973 = arith.addf %919, %cst_266 : f32
      %974 = vector.broadcast %973 : f32 to vector<8x128xf32>
      %975 = arith.subf %673, %974 : vector<8x128xf32>
      %cst_267 = arith.constant 0.000000e+00 : f32
      %976 = vector.broadcast %cst_267 : f32 to vector<8x128xf32>
      %977 = arith.maximumf %975, %976 : vector<8x128xf32>
      %978 = vector.broadcast %972 : vector<1x128xf32> to vector<8x128xf32>
      %979 = arith.mulf %978, %977 : vector<8x128xf32>
      %980 = arith.addf %971, %979 : vector<8x128xf32>
      %981 = vector.extract_strided_slice %916 {offsets = [7, 0], sizes = [1, 128], strides = [1, 1]} : vector<8x128xf32> to vector<1x128xf32>
      %cst_268 = arith.constant 7.000000e+00 : f32
      %982 = arith.addf %919, %cst_268 : f32
      %983 = vector.broadcast %982 : f32 to vector<8x128xf32>
      %984 = arith.subf %673, %983 : vector<8x128xf32>
      %cst_269 = arith.constant 0.000000e+00 : f32
      %985 = vector.broadcast %cst_269 : f32 to vector<8x128xf32>
      %986 = arith.maximumf %984, %985 : vector<8x128xf32>
      %987 = vector.broadcast %981 : vector<1x128xf32> to vector<8x128xf32>
      %988 = arith.mulf %987, %986 : vector<8x128xf32>
      %989 = arith.addf %980, %988 : vector<8x128xf32>
      %990 = arith.addf %912, %989 : vector<8x128xf32>
      %c4_i32_270 = arith.constant 4 : i32
      %c8_i32_271 = arith.constant 8 : i32
      %991 = arith.muli %c4_i32_270, %c8_i32_271 : i32
      %992 = tpu.assume_multiple %991, 8 : i32
      %993 = arith.index_cast %992 : i32 to index
      %c0_272 = arith.constant 0 : index
      %994 = vector.load %arg7[%993, %c0_272] : memref<64x128xf32, #tpu.memory_space<vmem>>, vector<8x128xf32>
      %c8_i32_273 = arith.constant 8 : i32
      %995 = arith.muli %c4_i32_270, %c8_i32_273 : i32
      %c1_i32_274 = arith.constant 1 : i32
      %996 = arith.addi %995, %c1_i32_274 : i32
      %997 = arith.sitofp %996 : i32 to f32
      %998 = vector.extract_strided_slice %994 {offsets = [0, 0], sizes = [1, 128], strides = [1, 1]} : vector<8x128xf32> to vector<1x128xf32>
      %999 = vector.broadcast %997 : f32 to vector<8x128xf32>
      %1000 = arith.subf %673, %999 : vector<8x128xf32>
      %cst_275 = arith.constant 0.000000e+00 : f32
      %1001 = vector.broadcast %cst_275 : f32 to vector<8x128xf32>
      %1002 = arith.maximumf %1000, %1001 : vector<8x128xf32>
      %1003 = vector.broadcast %998 : vector<1x128xf32> to vector<8x128xf32>
      %1004 = arith.mulf %1003, %1002 : vector<8x128xf32>
      %1005 = vector.extract_strided_slice %994 {offsets = [1, 0], sizes = [1, 128], strides = [1, 1]} : vector<8x128xf32> to vector<1x128xf32>
      %cst_276 = arith.constant 1.000000e+00 : f32
      %1006 = arith.addf %997, %cst_276 : f32
      %1007 = vector.broadcast %1006 : f32 to vector<8x128xf32>
      %1008 = arith.subf %673, %1007 : vector<8x128xf32>
      %cst_277 = arith.constant 0.000000e+00 : f32
      %1009 = vector.broadcast %cst_277 : f32 to vector<8x128xf32>
      %1010 = arith.maximumf %1008, %1009 : vector<8x128xf32>
      %1011 = vector.broadcast %1005 : vector<1x128xf32> to vector<8x128xf32>
      %1012 = arith.mulf %1011, %1010 : vector<8x128xf32>
      %1013 = arith.addf %1004, %1012 : vector<8x128xf32>
      %1014 = vector.extract_strided_slice %994 {offsets = [2, 0], sizes = [1, 128], strides = [1, 1]} : vector<8x128xf32> to vector<1x128xf32>
      %cst_278 = arith.constant 2.000000e+00 : f32
      %1015 = arith.addf %997, %cst_278 : f32
      %1016 = vector.broadcast %1015 : f32 to vector<8x128xf32>
      %1017 = arith.subf %673, %1016 : vector<8x128xf32>
      %cst_279 = arith.constant 0.000000e+00 : f32
      %1018 = vector.broadcast %cst_279 : f32 to vector<8x128xf32>
      %1019 = arith.maximumf %1017, %1018 : vector<8x128xf32>
      %1020 = vector.broadcast %1014 : vector<1x128xf32> to vector<8x128xf32>
      %1021 = arith.mulf %1020, %1019 : vector<8x128xf32>
      %1022 = arith.addf %1013, %1021 : vector<8x128xf32>
      %1023 = vector.extract_strided_slice %994 {offsets = [3, 0], sizes = [1, 128], strides = [1, 1]} : vector<8x128xf32> to vector<1x128xf32>
      %cst_280 = arith.constant 3.000000e+00 : f32
      %1024 = arith.addf %997, %cst_280 : f32
      %1025 = vector.broadcast %1024 : f32 to vector<8x128xf32>
      %1026 = arith.subf %673, %1025 : vector<8x128xf32>
      %cst_281 = arith.constant 0.000000e+00 : f32
      %1027 = vector.broadcast %cst_281 : f32 to vector<8x128xf32>
      %1028 = arith.maximumf %1026, %1027 : vector<8x128xf32>
      %1029 = vector.broadcast %1023 : vector<1x128xf32> to vector<8x128xf32>
      %1030 = arith.mulf %1029, %1028 : vector<8x128xf32>
      %1031 = arith.addf %1022, %1030 : vector<8x128xf32>
      %1032 = vector.extract_strided_slice %994 {offsets = [4, 0], sizes = [1, 128], strides = [1, 1]} : vector<8x128xf32> to vector<1x128xf32>
      %cst_282 = arith.constant 4.000000e+00 : f32
      %1033 = arith.addf %997, %cst_282 : f32
      %1034 = vector.broadcast %1033 : f32 to vector<8x128xf32>
      %1035 = arith.subf %673, %1034 : vector<8x128xf32>
      %cst_283 = arith.constant 0.000000e+00 : f32
      %1036 = vector.broadcast %cst_283 : f32 to vector<8x128xf32>
      %1037 = arith.maximumf %1035, %1036 : vector<8x128xf32>
      %1038 = vector.broadcast %1032 : vector<1x128xf32> to vector<8x128xf32>
      %1039 = arith.mulf %1038, %1037 : vector<8x128xf32>
      %1040 = arith.addf %1031, %1039 : vector<8x128xf32>
      %1041 = vector.extract_strided_slice %994 {offsets = [5, 0], sizes = [1, 128], strides = [1, 1]} : vector<8x128xf32> to vector<1x128xf32>
      %cst_284 = arith.constant 5.000000e+00 : f32
      %1042 = arith.addf %997, %cst_284 : f32
      %1043 = vector.broadcast %1042 : f32 to vector<8x128xf32>
      %1044 = arith.subf %673, %1043 : vector<8x128xf32>
      %cst_285 = arith.constant 0.000000e+00 : f32
      %1045 = vector.broadcast %cst_285 : f32 to vector<8x128xf32>
      %1046 = arith.maximumf %1044, %1045 : vector<8x128xf32>
      %1047 = vector.broadcast %1041 : vector<1x128xf32> to vector<8x128xf32>
      %1048 = arith.mulf %1047, %1046 : vector<8x128xf32>
      %1049 = arith.addf %1040, %1048 : vector<8x128xf32>
      %1050 = vector.extract_strided_slice %994 {offsets = [6, 0], sizes = [1, 128], strides = [1, 1]} : vector<8x128xf32> to vector<1x128xf32>
      %cst_286 = arith.constant 6.000000e+00 : f32
      %1051 = arith.addf %997, %cst_286 : f32
      %1052 = vector.broadcast %1051 : f32 to vector<8x128xf32>
      %1053 = arith.subf %673, %1052 : vector<8x128xf32>
      %cst_287 = arith.constant 0.000000e+00 : f32
      %1054 = vector.broadcast %cst_287 : f32 to vector<8x128xf32>
      %1055 = arith.maximumf %1053, %1054 : vector<8x128xf32>
      %1056 = vector.broadcast %1050 : vector<1x128xf32> to vector<8x128xf32>
      %1057 = arith.mulf %1056, %1055 : vector<8x128xf32>
      %1058 = arith.addf %1049, %1057 : vector<8x128xf32>
      %1059 = vector.extract_strided_slice %994 {offsets = [7, 0], sizes = [1, 128], strides = [1, 1]} : vector<8x128xf32> to vector<1x128xf32>
      %cst_288 = arith.constant 7.000000e+00 : f32
      %1060 = arith.addf %997, %cst_288 : f32
      %1061 = vector.broadcast %1060 : f32 to vector<8x128xf32>
      %1062 = arith.subf %673, %1061 : vector<8x128xf32>
      %cst_289 = arith.constant 0.000000e+00 : f32
      %1063 = vector.broadcast %cst_289 : f32 to vector<8x128xf32>
      %1064 = arith.maximumf %1062, %1063 : vector<8x128xf32>
      %1065 = vector.broadcast %1059 : vector<1x128xf32> to vector<8x128xf32>
      %1066 = arith.mulf %1065, %1064 : vector<8x128xf32>
      %1067 = arith.addf %1058, %1066 : vector<8x128xf32>
      %1068 = arith.addf %990, %1067 : vector<8x128xf32>
      %c5_i32_290 = arith.constant 5 : i32
      %c8_i32_291 = arith.constant 8 : i32
      %1069 = arith.muli %c5_i32_290, %c8_i32_291 : i32
      %1070 = tpu.assume_multiple %1069, 8 : i32
      %1071 = arith.index_cast %1070 : i32 to index
      %c0_292 = arith.constant 0 : index
      %1072 = vector.load %arg7[%1071, %c0_292] : memref<64x128xf32, #tpu.memory_space<vmem>>, vector<8x128xf32>
      %c8_i32_293 = arith.constant 8 : i32
      %1073 = arith.muli %c5_i32_290, %c8_i32_293 : i32
      %c1_i32_294 = arith.constant 1 : i32
      %1074 = arith.addi %1073, %c1_i32_294 : i32
      %1075 = arith.sitofp %1074 : i32 to f32
      %1076 = vector.extract_strided_slice %1072 {offsets = [0, 0], sizes = [1, 128], strides = [1, 1]} : vector<8x128xf32> to vector<1x128xf32>
      %1077 = vector.broadcast %1075 : f32 to vector<8x128xf32>
      %1078 = arith.subf %673, %1077 : vector<8x128xf32>
      %cst_295 = arith.constant 0.000000e+00 : f32
      %1079 = vector.broadcast %cst_295 : f32 to vector<8x128xf32>
      %1080 = arith.maximumf %1078, %1079 : vector<8x128xf32>
      %1081 = vector.broadcast %1076 : vector<1x128xf32> to vector<8x128xf32>
      %1082 = arith.mulf %1081, %1080 : vector<8x128xf32>
      %1083 = vector.extract_strided_slice %1072 {offsets = [1, 0], sizes = [1, 128], strides = [1, 1]} : vector<8x128xf32> to vector<1x128xf32>
      %cst_296 = arith.constant 1.000000e+00 : f32
      %1084 = arith.addf %1075, %cst_296 : f32
      %1085 = vector.broadcast %1084 : f32 to vector<8x128xf32>
      %1086 = arith.subf %673, %1085 : vector<8x128xf32>
      %cst_297 = arith.constant 0.000000e+00 : f32
      %1087 = vector.broadcast %cst_297 : f32 to vector<8x128xf32>
      %1088 = arith.maximumf %1086, %1087 : vector<8x128xf32>
      %1089 = vector.broadcast %1083 : vector<1x128xf32> to vector<8x128xf32>
      %1090 = arith.mulf %1089, %1088 : vector<8x128xf32>
      %1091 = arith.addf %1082, %1090 : vector<8x128xf32>
      %1092 = vector.extract_strided_slice %1072 {offsets = [2, 0], sizes = [1, 128], strides = [1, 1]} : vector<8x128xf32> to vector<1x128xf32>
      %cst_298 = arith.constant 2.000000e+00 : f32
      %1093 = arith.addf %1075, %cst_298 : f32
      %1094 = vector.broadcast %1093 : f32 to vector<8x128xf32>
      %1095 = arith.subf %673, %1094 : vector<8x128xf32>
      %cst_299 = arith.constant 0.000000e+00 : f32
      %1096 = vector.broadcast %cst_299 : f32 to vector<8x128xf32>
      %1097 = arith.maximumf %1095, %1096 : vector<8x128xf32>
      %1098 = vector.broadcast %1092 : vector<1x128xf32> to vector<8x128xf32>
      %1099 = arith.mulf %1098, %1097 : vector<8x128xf32>
      %1100 = arith.addf %1091, %1099 : vector<8x128xf32>
      %1101 = vector.extract_strided_slice %1072 {offsets = [3, 0], sizes = [1, 128], strides = [1, 1]} : vector<8x128xf32> to vector<1x128xf32>
      %cst_300 = arith.constant 3.000000e+00 : f32
      %1102 = arith.addf %1075, %cst_300 : f32
      %1103 = vector.broadcast %1102 : f32 to vector<8x128xf32>
      %1104 = arith.subf %673, %1103 : vector<8x128xf32>
      %cst_301 = arith.constant 0.000000e+00 : f32
      %1105 = vector.broadcast %cst_301 : f32 to vector<8x128xf32>
      %1106 = arith.maximumf %1104, %1105 : vector<8x128xf32>
      %1107 = vector.broadcast %1101 : vector<1x128xf32> to vector<8x128xf32>
      %1108 = arith.mulf %1107, %1106 : vector<8x128xf32>
      %1109 = arith.addf %1100, %1108 : vector<8x128xf32>
      %1110 = vector.extract_strided_slice %1072 {offsets = [4, 0], sizes = [1, 128], strides = [1, 1]} : vector<8x128xf32> to vector<1x128xf32>
      %cst_302 = arith.constant 4.000000e+00 : f32
      %1111 = arith.addf %1075, %cst_302 : f32
      %1112 = vector.broadcast %1111 : f32 to vector<8x128xf32>
      %1113 = arith.subf %673, %1112 : vector<8x128xf32>
      %cst_303 = arith.constant 0.000000e+00 : f32
      %1114 = vector.broadcast %cst_303 : f32 to vector<8x128xf32>
      %1115 = arith.maximumf %1113, %1114 : vector<8x128xf32>
      %1116 = vector.broadcast %1110 : vector<1x128xf32> to vector<8x128xf32>
      %1117 = arith.mulf %1116, %1115 : vector<8x128xf32>
      %1118 = arith.addf %1109, %1117 : vector<8x128xf32>
      %1119 = vector.extract_strided_slice %1072 {offsets = [5, 0], sizes = [1, 128], strides = [1, 1]} : vector<8x128xf32> to vector<1x128xf32>
      %cst_304 = arith.constant 5.000000e+00 : f32
      %1120 = arith.addf %1075, %cst_304 : f32
      %1121 = vector.broadcast %1120 : f32 to vector<8x128xf32>
      %1122 = arith.subf %673, %1121 : vector<8x128xf32>
      %cst_305 = arith.constant 0.000000e+00 : f32
      %1123 = vector.broadcast %cst_305 : f32 to vector<8x128xf32>
      %1124 = arith.maximumf %1122, %1123 : vector<8x128xf32>
      %1125 = vector.broadcast %1119 : vector<1x128xf32> to vector<8x128xf32>
      %1126 = arith.mulf %1125, %1124 : vector<8x128xf32>
      %1127 = arith.addf %1118, %1126 : vector<8x128xf32>
      %1128 = vector.extract_strided_slice %1072 {offsets = [6, 0], sizes = [1, 128], strides = [1, 1]} : vector<8x128xf32> to vector<1x128xf32>
      %cst_306 = arith.constant 6.000000e+00 : f32
      %1129 = arith.addf %1075, %cst_306 : f32
      %1130 = vector.broadcast %1129 : f32 to vector<8x128xf32>
      %1131 = arith.subf %673, %1130 : vector<8x128xf32>
      %cst_307 = arith.constant 0.000000e+00 : f32
      %1132 = vector.broadcast %cst_307 : f32 to vector<8x128xf32>
      %1133 = arith.maximumf %1131, %1132 : vector<8x128xf32>
      %1134 = vector.broadcast %1128 : vector<1x128xf32> to vector<8x128xf32>
      %1135 = arith.mulf %1134, %1133 : vector<8x128xf32>
      %1136 = arith.addf %1127, %1135 : vector<8x128xf32>
      %1137 = vector.extract_strided_slice %1072 {offsets = [7, 0], sizes = [1, 128], strides = [1, 1]} : vector<8x128xf32> to vector<1x128xf32>
      %cst_308 = arith.constant 7.000000e+00 : f32
      %1138 = arith.addf %1075, %cst_308 : f32
      %1139 = vector.broadcast %1138 : f32 to vector<8x128xf32>
      %1140 = arith.subf %673, %1139 : vector<8x128xf32>
      %cst_309 = arith.constant 0.000000e+00 : f32
      %1141 = vector.broadcast %cst_309 : f32 to vector<8x128xf32>
      %1142 = arith.maximumf %1140, %1141 : vector<8x128xf32>
      %1143 = vector.broadcast %1137 : vector<1x128xf32> to vector<8x128xf32>
      %1144 = arith.mulf %1143, %1142 : vector<8x128xf32>
      %1145 = arith.addf %1136, %1144 : vector<8x128xf32>
      %1146 = arith.addf %1068, %1145 : vector<8x128xf32>
      %c6_i32_310 = arith.constant 6 : i32
      %c8_i32_311 = arith.constant 8 : i32
      %1147 = arith.muli %c6_i32_310, %c8_i32_311 : i32
      %1148 = tpu.assume_multiple %1147, 8 : i32
      %1149 = arith.index_cast %1148 : i32 to index
      %c0_312 = arith.constant 0 : index
      %1150 = vector.load %arg7[%1149, %c0_312] : memref<64x128xf32, #tpu.memory_space<vmem>>, vector<8x128xf32>
      %c8_i32_313 = arith.constant 8 : i32
      %1151 = arith.muli %c6_i32_310, %c8_i32_313 : i32
      %c1_i32_314 = arith.constant 1 : i32
      %1152 = arith.addi %1151, %c1_i32_314 : i32
      %1153 = arith.sitofp %1152 : i32 to f32
      %1154 = vector.extract_strided_slice %1150 {offsets = [0, 0], sizes = [1, 128], strides = [1, 1]} : vector<8x128xf32> to vector<1x128xf32>
      %1155 = vector.broadcast %1153 : f32 to vector<8x128xf32>
      %1156 = arith.subf %673, %1155 : vector<8x128xf32>
      %cst_315 = arith.constant 0.000000e+00 : f32
      %1157 = vector.broadcast %cst_315 : f32 to vector<8x128xf32>
      %1158 = arith.maximumf %1156, %1157 : vector<8x128xf32>
      %1159 = vector.broadcast %1154 : vector<1x128xf32> to vector<8x128xf32>
      %1160 = arith.mulf %1159, %1158 : vector<8x128xf32>
      %1161 = vector.extract_strided_slice %1150 {offsets = [1, 0], sizes = [1, 128], strides = [1, 1]} : vector<8x128xf32> to vector<1x128xf32>
      %cst_316 = arith.constant 1.000000e+00 : f32
      %1162 = arith.addf %1153, %cst_316 : f32
      %1163 = vector.broadcast %1162 : f32 to vector<8x128xf32>
      %1164 = arith.subf %673, %1163 : vector<8x128xf32>
      %cst_317 = arith.constant 0.000000e+00 : f32
      %1165 = vector.broadcast %cst_317 : f32 to vector<8x128xf32>
      %1166 = arith.maximumf %1164, %1165 : vector<8x128xf32>
      %1167 = vector.broadcast %1161 : vector<1x128xf32> to vector<8x128xf32>
      %1168 = arith.mulf %1167, %1166 : vector<8x128xf32>
      %1169 = arith.addf %1160, %1168 : vector<8x128xf32>
      %1170 = vector.extract_strided_slice %1150 {offsets = [2, 0], sizes = [1, 128], strides = [1, 1]} : vector<8x128xf32> to vector<1x128xf32>
      %cst_318 = arith.constant 2.000000e+00 : f32
      %1171 = arith.addf %1153, %cst_318 : f32
      %1172 = vector.broadcast %1171 : f32 to vector<8x128xf32>
      %1173 = arith.subf %673, %1172 : vector<8x128xf32>
      %cst_319 = arith.constant 0.000000e+00 : f32
      %1174 = vector.broadcast %cst_319 : f32 to vector<8x128xf32>
      %1175 = arith.maximumf %1173, %1174 : vector<8x128xf32>
      %1176 = vector.broadcast %1170 : vector<1x128xf32> to vector<8x128xf32>
      %1177 = arith.mulf %1176, %1175 : vector<8x128xf32>
      %1178 = arith.addf %1169, %1177 : vector<8x128xf32>
      %1179 = vector.extract_strided_slice %1150 {offsets = [3, 0], sizes = [1, 128], strides = [1, 1]} : vector<8x128xf32> to vector<1x128xf32>
      %cst_320 = arith.constant 3.000000e+00 : f32
      %1180 = arith.addf %1153, %cst_320 : f32
      %1181 = vector.broadcast %1180 : f32 to vector<8x128xf32>
      %1182 = arith.subf %673, %1181 : vector<8x128xf32>
      %cst_321 = arith.constant 0.000000e+00 : f32
      %1183 = vector.broadcast %cst_321 : f32 to vector<8x128xf32>
      %1184 = arith.maximumf %1182, %1183 : vector<8x128xf32>
      %1185 = vector.broadcast %1179 : vector<1x128xf32> to vector<8x128xf32>
      %1186 = arith.mulf %1185, %1184 : vector<8x128xf32>
      %1187 = arith.addf %1178, %1186 : vector<8x128xf32>
      %1188 = vector.extract_strided_slice %1150 {offsets = [4, 0], sizes = [1, 128], strides = [1, 1]} : vector<8x128xf32> to vector<1x128xf32>
      %cst_322 = arith.constant 4.000000e+00 : f32
      %1189 = arith.addf %1153, %cst_322 : f32
      %1190 = vector.broadcast %1189 : f32 to vector<8x128xf32>
      %1191 = arith.subf %673, %1190 : vector<8x128xf32>
      %cst_323 = arith.constant 0.000000e+00 : f32
      %1192 = vector.broadcast %cst_323 : f32 to vector<8x128xf32>
      %1193 = arith.maximumf %1191, %1192 : vector<8x128xf32>
      %1194 = vector.broadcast %1188 : vector<1x128xf32> to vector<8x128xf32>
      %1195 = arith.mulf %1194, %1193 : vector<8x128xf32>
      %1196 = arith.addf %1187, %1195 : vector<8x128xf32>
      %1197 = vector.extract_strided_slice %1150 {offsets = [5, 0], sizes = [1, 128], strides = [1, 1]} : vector<8x128xf32> to vector<1x128xf32>
      %cst_324 = arith.constant 5.000000e+00 : f32
      %1198 = arith.addf %1153, %cst_324 : f32
      %1199 = vector.broadcast %1198 : f32 to vector<8x128xf32>
      %1200 = arith.subf %673, %1199 : vector<8x128xf32>
      %cst_325 = arith.constant 0.000000e+00 : f32
      %1201 = vector.broadcast %cst_325 : f32 to vector<8x128xf32>
      %1202 = arith.maximumf %1200, %1201 : vector<8x128xf32>
      %1203 = vector.broadcast %1197 : vector<1x128xf32> to vector<8x128xf32>
      %1204 = arith.mulf %1203, %1202 : vector<8x128xf32>
      %1205 = arith.addf %1196, %1204 : vector<8x128xf32>
      %1206 = vector.extract_strided_slice %1150 {offsets = [6, 0], sizes = [1, 128], strides = [1, 1]} : vector<8x128xf32> to vector<1x128xf32>
      %cst_326 = arith.constant 6.000000e+00 : f32
      %1207 = arith.addf %1153, %cst_326 : f32
      %1208 = vector.broadcast %1207 : f32 to vector<8x128xf32>
      %1209 = arith.subf %673, %1208 : vector<8x128xf32>
      %cst_327 = arith.constant 0.000000e+00 : f32
      %1210 = vector.broadcast %cst_327 : f32 to vector<8x128xf32>
      %1211 = arith.maximumf %1209, %1210 : vector<8x128xf32>
      %1212 = vector.broadcast %1206 : vector<1x128xf32> to vector<8x128xf32>
      %1213 = arith.mulf %1212, %1211 : vector<8x128xf32>
      %1214 = arith.addf %1205, %1213 : vector<8x128xf32>
      %1215 = vector.extract_strided_slice %1150 {offsets = [7, 0], sizes = [1, 128], strides = [1, 1]} : vector<8x128xf32> to vector<1x128xf32>
      %cst_328 = arith.constant 7.000000e+00 : f32
      %1216 = arith.addf %1153, %cst_328 : f32
      %1217 = vector.broadcast %1216 : f32 to vector<8x128xf32>
      %1218 = arith.subf %673, %1217 : vector<8x128xf32>
      %cst_329 = arith.constant 0.000000e+00 : f32
      %1219 = vector.broadcast %cst_329 : f32 to vector<8x128xf32>
      %1220 = arith.maximumf %1218, %1219 : vector<8x128xf32>
      %1221 = vector.broadcast %1215 : vector<1x128xf32> to vector<8x128xf32>
      %1222 = arith.mulf %1221, %1220 : vector<8x128xf32>
      %1223 = arith.addf %1214, %1222 : vector<8x128xf32>
      %1224 = arith.addf %1146, %1223 : vector<8x128xf32>
      %c7_i32_330 = arith.constant 7 : i32
      %c8_i32_331 = arith.constant 8 : i32
      %1225 = arith.muli %c7_i32_330, %c8_i32_331 : i32
      %1226 = tpu.assume_multiple %1225, 8 : i32
      %1227 = arith.index_cast %1226 : i32 to index
      %c0_332 = arith.constant 0 : index
      %1228 = vector.load %arg7[%1227, %c0_332] : memref<64x128xf32, #tpu.memory_space<vmem>>, vector<8x128xf32>
      %c8_i32_333 = arith.constant 8 : i32
      %1229 = arith.muli %c7_i32_330, %c8_i32_333 : i32
      %c1_i32_334 = arith.constant 1 : i32
      %1230 = arith.addi %1229, %c1_i32_334 : i32
      %1231 = arith.sitofp %1230 : i32 to f32
      %1232 = vector.extract_strided_slice %1228 {offsets = [0, 0], sizes = [1, 128], strides = [1, 1]} : vector<8x128xf32> to vector<1x128xf32>
      %1233 = vector.broadcast %1231 : f32 to vector<8x128xf32>
      %1234 = arith.subf %673, %1233 : vector<8x128xf32>
      %cst_335 = arith.constant 0.000000e+00 : f32
      %1235 = vector.broadcast %cst_335 : f32 to vector<8x128xf32>
      %1236 = arith.maximumf %1234, %1235 : vector<8x128xf32>
      %1237 = vector.broadcast %1232 : vector<1x128xf32> to vector<8x128xf32>
      %1238 = arith.mulf %1237, %1236 : vector<8x128xf32>
      %1239 = vector.extract_strided_slice %1228 {offsets = [1, 0], sizes = [1, 128], strides = [1, 1]} : vector<8x128xf32> to vector<1x128xf32>
      %cst_336 = arith.constant 1.000000e+00 : f32
      %1240 = arith.addf %1231, %cst_336 : f32
      %1241 = vector.broadcast %1240 : f32 to vector<8x128xf32>
      %1242 = arith.subf %673, %1241 : vector<8x128xf32>
      %cst_337 = arith.constant 0.000000e+00 : f32
      %1243 = vector.broadcast %cst_337 : f32 to vector<8x128xf32>
      %1244 = arith.maximumf %1242, %1243 : vector<8x128xf32>
      %1245 = vector.broadcast %1239 : vector<1x128xf32> to vector<8x128xf32>
      %1246 = arith.mulf %1245, %1244 : vector<8x128xf32>
      %1247 = arith.addf %1238, %1246 : vector<8x128xf32>
      %1248 = vector.extract_strided_slice %1228 {offsets = [2, 0], sizes = [1, 128], strides = [1, 1]} : vector<8x128xf32> to vector<1x128xf32>
      %cst_338 = arith.constant 2.000000e+00 : f32
      %1249 = arith.addf %1231, %cst_338 : f32
      %1250 = vector.broadcast %1249 : f32 to vector<8x128xf32>
      %1251 = arith.subf %673, %1250 : vector<8x128xf32>
      %cst_339 = arith.constant 0.000000e+00 : f32
      %1252 = vector.broadcast %cst_339 : f32 to vector<8x128xf32>
      %1253 = arith.maximumf %1251, %1252 : vector<8x128xf32>
      %1254 = vector.broadcast %1248 : vector<1x128xf32> to vector<8x128xf32>
      %1255 = arith.mulf %1254, %1253 : vector<8x128xf32>
      %1256 = arith.addf %1247, %1255 : vector<8x128xf32>
      %1257 = vector.extract_strided_slice %1228 {offsets = [3, 0], sizes = [1, 128], strides = [1, 1]} : vector<8x128xf32> to vector<1x128xf32>
      %cst_340 = arith.constant 3.000000e+00 : f32
      %1258 = arith.addf %1231, %cst_340 : f32
      %1259 = vector.broadcast %1258 : f32 to vector<8x128xf32>
      %1260 = arith.subf %673, %1259 : vector<8x128xf32>
      %cst_341 = arith.constant 0.000000e+00 : f32
      %1261 = vector.broadcast %cst_341 : f32 to vector<8x128xf32>
      %1262 = arith.maximumf %1260, %1261 : vector<8x128xf32>
      %1263 = vector.broadcast %1257 : vector<1x128xf32> to vector<8x128xf32>
      %1264 = arith.mulf %1263, %1262 : vector<8x128xf32>
      %1265 = arith.addf %1256, %1264 : vector<8x128xf32>
      %1266 = vector.extract_strided_slice %1228 {offsets = [4, 0], sizes = [1, 128], strides = [1, 1]} : vector<8x128xf32> to vector<1x128xf32>
      %cst_342 = arith.constant 4.000000e+00 : f32
      %1267 = arith.addf %1231, %cst_342 : f32
      %1268 = vector.broadcast %1267 : f32 to vector<8x128xf32>
      %1269 = arith.subf %673, %1268 : vector<8x128xf32>
      %cst_343 = arith.constant 0.000000e+00 : f32
      %1270 = vector.broadcast %cst_343 : f32 to vector<8x128xf32>
      %1271 = arith.maximumf %1269, %1270 : vector<8x128xf32>
      %1272 = vector.broadcast %1266 : vector<1x128xf32> to vector<8x128xf32>
      %1273 = arith.mulf %1272, %1271 : vector<8x128xf32>
      %1274 = arith.addf %1265, %1273 : vector<8x128xf32>
      %1275 = vector.extract_strided_slice %1228 {offsets = [5, 0], sizes = [1, 128], strides = [1, 1]} : vector<8x128xf32> to vector<1x128xf32>
      %cst_344 = arith.constant 5.000000e+00 : f32
      %1276 = arith.addf %1231, %cst_344 : f32
      %1277 = vector.broadcast %1276 : f32 to vector<8x128xf32>
      %1278 = arith.subf %673, %1277 : vector<8x128xf32>
      %cst_345 = arith.constant 0.000000e+00 : f32
      %1279 = vector.broadcast %cst_345 : f32 to vector<8x128xf32>
      %1280 = arith.maximumf %1278, %1279 : vector<8x128xf32>
      %1281 = vector.broadcast %1275 : vector<1x128xf32> to vector<8x128xf32>
      %1282 = arith.mulf %1281, %1280 : vector<8x128xf32>
      %1283 = arith.addf %1274, %1282 : vector<8x128xf32>
      %1284 = vector.extract_strided_slice %1228 {offsets = [6, 0], sizes = [1, 128], strides = [1, 1]} : vector<8x128xf32> to vector<1x128xf32>
      %cst_346 = arith.constant 6.000000e+00 : f32
      %1285 = arith.addf %1231, %cst_346 : f32
      %1286 = vector.broadcast %1285 : f32 to vector<8x128xf32>
      %1287 = arith.subf %673, %1286 : vector<8x128xf32>
      %cst_347 = arith.constant 0.000000e+00 : f32
      %1288 = vector.broadcast %cst_347 : f32 to vector<8x128xf32>
      %1289 = arith.maximumf %1287, %1288 : vector<8x128xf32>
      %1290 = vector.broadcast %1284 : vector<1x128xf32> to vector<8x128xf32>
      %1291 = arith.mulf %1290, %1289 : vector<8x128xf32>
      %1292 = arith.addf %1283, %1291 : vector<8x128xf32>
      %1293 = vector.extract_strided_slice %1228 {offsets = [7, 0], sizes = [1, 128], strides = [1, 1]} : vector<8x128xf32> to vector<1x128xf32>
      %cst_348 = arith.constant 7.000000e+00 : f32
      %1294 = arith.addf %1231, %cst_348 : f32
      %1295 = vector.broadcast %1294 : f32 to vector<8x128xf32>
      %1296 = arith.subf %673, %1295 : vector<8x128xf32>
      %cst_349 = arith.constant 0.000000e+00 : f32
      %1297 = vector.broadcast %cst_349 : f32 to vector<8x128xf32>
      %1298 = arith.maximumf %1296, %1297 : vector<8x128xf32>
      %1299 = vector.broadcast %1293 : vector<1x128xf32> to vector<8x128xf32>
      %1300 = arith.mulf %1299, %1298 : vector<8x128xf32>
      %1301 = arith.addf %1292, %1300 : vector<8x128xf32>
      %1302 = arith.addf %1224, %1301 : vector<8x128xf32>
      %c8_i32_350 = arith.constant 8 : i32
      %1303 = arith.truncf %1302 : vector<8x128xf32> to vector<8x128xbf16>
      %c0_351 = arith.constant 0 : index
      %c0_352 = arith.constant 0 : index
      %1304 = vector.load %arg18[%c0_351, %c0_352] : memref<8x128xbf16, #tpu.memory_space<vmem>>, vector<8x128xbf16>
      tpu.vector_store %arg18[%c0_351, %c0_352], %1303 {strides = array<i32>} : memref<8x128xbf16, #tpu.memory_space<vmem>>, vector<8x128xbf16>,
      %cst_353 = arith.constant 0.000000e+00 : f32
      %1305 = vector.broadcast %cst_353 : f32 to vector<8x128xf32>
      %c0_354 = arith.constant 0 : index
      %c0_355 = arith.constant 0 : index
      %1306 = vector.load %arg19[%c0_354, %c0_355] : memref<8x128xf32, #tpu.memory_space<vmem>>, vector<8x128xf32>
      tpu.vector_store %arg19[%c0_354, %c0_355], %1305 {strides = array<i32>} : memref<8x128xf32, #tpu.memory_space<vmem>>, vector<8x128xf32>,
    } else {
    }
    %c0 = arith.constant 0 : index
    %c0_1 = arith.constant 0 : index
    %3 = vector.load %arg18[%c0, %c0_1] : memref<8x128xbf16, #tpu.memory_space<vmem>>, vector<8x128xbf16>
    %c0_2 = arith.constant 0 : index
    %c0_3 = arith.constant 0 : index
    %4 = vector.load %arg8[%c0_2, %c0_3] : memref<128x128xbf16, #tpu.memory_space<vmem>>, vector<128x128xbf16>
    %cst = arith.constant dense<0.000000e+00> : vector<8x128xf32>
    %5 = tpu.matmul %3, %4, %cst {dimension_numbers = #tpu.dot_dimension_numbers<[1], [0], [0], [1], [0, 0, 1, 1], [], []>} : vector<8x128xbf16>, vector<128x128xbf16>, vector<8x128xf32> -> vector<8x128xf32>
    %c0_4 = arith.constant 0 : index
    %c0_5 = arith.constant 0 : index
    %6 = vector.load %arg9[%c0_4, %c0_5] : memref<1x128xf32, #tpu.memory_space<vmem>>, vector<1x128xf32>
    %7 = vector.broadcast %6 : vector<1x128xf32> to vector<8x128xf32>
    %8 = arith.addf %5, %7 : vector<8x128xf32>
    %c0_6 = arith.constant 0 : index
    %c0_7 = arith.constant 0 : index
    %9 = vector.load %arg10[%c0_6, %c0_7] : memref<1x128xf32, #tpu.memory_space<vmem>>, vector<1x128xf32>
    %c0_8 = arith.constant 0 : index
    %c0_9 = arith.constant 0 : index
    %10 = vector.load %arg11[%c0_8, %c0_9] : memref<1x128xf32, #tpu.memory_space<vmem>>, vector<1x128xf32>
    %cst_10 = arith.constant 4.000000e+00 : f32
    %11 = vector.broadcast %cst_10 : f32 to vector<8x128xf32>
    %12 = arith.addf %8, %11 : vector<8x128xf32>
    %cst_11 = arith.constant 7.875000e+00 : f32
    %13 = vector.broadcast %cst_11 : f32 to vector<8x128xf32>
    %14 = arith.mulf %12, %13 : vector<8x128xf32>
    %cst_12 = arith.constant 0.000000e+00 : f32
    %cst_13 = arith.constant 6.300000e+01 : f32
    %15 = vector.broadcast %cst_12 : f32 to vector<8x128xf32>
    %16 = arith.maximumf %15, %14 : vector<8x128xf32>
    %17 = vector.broadcast %cst_13 : f32 to vector<8x128xf32>
    %18 = arith.minimumf %17, %16 : vector<8x128xf32>
    %19 = vector.broadcast %10 : vector<1x128xf32> to vector<8x128xf32>
    %20 = arith.mulf %19, %18 : vector<8x128xf32>
    %21 = vector.broadcast %9 : vector<1x128xf32> to vector<8x128xf32>
    %22 = arith.addf %21, %20 : vector<8x128xf32>
    %23 = arith.addf %22, %8 : vector<8x128xf32>
    %c0_i32_14 = arith.constant 0 : i32
    %c8_i32 = arith.constant 8 : i32
    %24 = arith.muli %c0_i32_14, %c8_i32 : i32
    %25 = tpu.assume_multiple %24, 8 : i32
    %26 = arith.index_cast %25 : i32 to index
    %c0_15 = arith.constant 0 : index
    %27 = vector.load %arg12[%26, %c0_15] : memref<64x128xf32, #tpu.memory_space<vmem>>, vector<8x128xf32>
    %c8_i32_16 = arith.constant 8 : i32
    %28 = arith.muli %c0_i32_14, %c8_i32_16 : i32
    %c1_i32 = arith.constant 1 : i32
    %29 = arith.addi %28, %c1_i32 : i32
    %30 = arith.sitofp %29 : i32 to f32
    %31 = vector.extract_strided_slice %27 {offsets = [0, 0], sizes = [1, 128], strides = [1, 1]} : vector<8x128xf32> to vector<1x128xf32>
    %32 = vector.broadcast %30 : f32 to vector<8x128xf32>
    %33 = arith.subf %18, %32 : vector<8x128xf32>
    %cst_17 = arith.constant 0.000000e+00 : f32
    %34 = vector.broadcast %cst_17 : f32 to vector<8x128xf32>
    %35 = arith.maximumf %33, %34 : vector<8x128xf32>
    %36 = vector.broadcast %31 : vector<1x128xf32> to vector<8x128xf32>
    %37 = arith.mulf %36, %35 : vector<8x128xf32>
    %38 = vector.extract_strided_slice %27 {offsets = [1, 0], sizes = [1, 128], strides = [1, 1]} : vector<8x128xf32> to vector<1x128xf32>
    %cst_18 = arith.constant 1.000000e+00 : f32
    %39 = arith.addf %30, %cst_18 : f32
    %40 = vector.broadcast %39 : f32 to vector<8x128xf32>
    %41 = arith.subf %18, %40 : vector<8x128xf32>
    %cst_19 = arith.constant 0.000000e+00 : f32
    %42 = vector.broadcast %cst_19 : f32 to vector<8x128xf32>
    %43 = arith.maximumf %41, %42 : vector<8x128xf32>
    %44 = vector.broadcast %38 : vector<1x128xf32> to vector<8x128xf32>
    %45 = arith.mulf %44, %43 : vector<8x128xf32>
    %46 = arith.addf %37, %45 : vector<8x128xf32>
    %47 = vector.extract_strided_slice %27 {offsets = [2, 0], sizes = [1, 128], strides = [1, 1]} : vector<8x128xf32> to vector<1x128xf32>
    %cst_20 = arith.constant 2.000000e+00 : f32
    %48 = arith.addf %30, %cst_20 : f32
    %49 = vector.broadcast %48 : f32 to vector<8x128xf32>
    %50 = arith.subf %18, %49 : vector<8x128xf32>
    %cst_21 = arith.constant 0.000000e+00 : f32
    %51 = vector.broadcast %cst_21 : f32 to vector<8x128xf32>
    %52 = arith.maximumf %50, %51 : vector<8x128xf32>
    %53 = vector.broadcast %47 : vector<1x128xf32> to vector<8x128xf32>
    %54 = arith.mulf %53, %52 : vector<8x128xf32>
    %55 = arith.addf %46, %54 : vector<8x128xf32>
    %56 = vector.extract_strided_slice %27 {offsets = [3, 0], sizes = [1, 128], strides = [1, 1]} : vector<8x128xf32> to vector<1x128xf32>
    %cst_22 = arith.constant 3.000000e+00 : f32
    %57 = arith.addf %30, %cst_22 : f32
    %58 = vector.broadcast %57 : f32 to vector<8x128xf32>
    %59 = arith.subf %18, %58 : vector<8x128xf32>
    %cst_23 = arith.constant 0.000000e+00 : f32
    %60 = vector.broadcast %cst_23 : f32 to vector<8x128xf32>
    %61 = arith.maximumf %59, %60 : vector<8x128xf32>
    %62 = vector.broadcast %56 : vector<1x128xf32> to vector<8x128xf32>
    %63 = arith.mulf %62, %61 : vector<8x128xf32>
    %64 = arith.addf %55, %63 : vector<8x128xf32>
    %65 = vector.extract_strided_slice %27 {offsets = [4, 0], sizes = [1, 128], strides = [1, 1]} : vector<8x128xf32> to vector<1x128xf32>
    %cst_24 = arith.constant 4.000000e+00 : f32
    %66 = arith.addf %30, %cst_24 : f32
    %67 = vector.broadcast %66 : f32 to vector<8x128xf32>
    %68 = arith.subf %18, %67 : vector<8x128xf32>
    %cst_25 = arith.constant 0.000000e+00 : f32
    %69 = vector.broadcast %cst_25 : f32 to vector<8x128xf32>
    %70 = arith.maximumf %68, %69 : vector<8x128xf32>
    %71 = vector.broadcast %65 : vector<1x128xf32> to vector<8x128xf32>
    %72 = arith.mulf %71, %70 : vector<8x128xf32>
    %73 = arith.addf %64, %72 : vector<8x128xf32>
    %74 = vector.extract_strided_slice %27 {offsets = [5, 0], sizes = [1, 128], strides = [1, 1]} : vector<8x128xf32> to vector<1x128xf32>
    %cst_26 = arith.constant 5.000000e+00 : f32
    %75 = arith.addf %30, %cst_26 : f32
    %76 = vector.broadcast %75 : f32 to vector<8x128xf32>
    %77 = arith.subf %18, %76 : vector<8x128xf32>
    %cst_27 = arith.constant 0.000000e+00 : f32
    %78 = vector.broadcast %cst_27 : f32 to vector<8x128xf32>
    %79 = arith.maximumf %77, %78 : vector<8x128xf32>
    %80 = vector.broadcast %74 : vector<1x128xf32> to vector<8x128xf32>
    %81 = arith.mulf %80, %79 : vector<8x128xf32>
    %82 = arith.addf %73, %81 : vector<8x128xf32>
    %83 = vector.extract_strided_slice %27 {offsets = [6, 0], sizes = [1, 128], strides = [1, 1]} : vector<8x128xf32> to vector<1x128xf32>
    %cst_28 = arith.constant 6.000000e+00 : f32
    %84 = arith.addf %30, %cst_28 : f32
    %85 = vector.broadcast %84 : f32 to vector<8x128xf32>
    %86 = arith.subf %18, %85 : vector<8x128xf32>
    %cst_29 = arith.constant 0.000000e+00 : f32
    %87 = vector.broadcast %cst_29 : f32 to vector<8x128xf32>
    %88 = arith.maximumf %86, %87 : vector<8x128xf32>
    %89 = vector.broadcast %83 : vector<1x128xf32> to vector<8x128xf32>
    %90 = arith.mulf %89, %88 : vector<8x128xf32>
    %91 = arith.addf %82, %90 : vector<8x128xf32>
    %92 = vector.extract_strided_slice %27 {offsets = [7, 0], sizes = [1, 128], strides = [1, 1]} : vector<8x128xf32> to vector<1x128xf32>
    %cst_30 = arith.constant 7.000000e+00 : f32
    %93 = arith.addf %30, %cst_30 : f32
    %94 = vector.broadcast %93 : f32 to vector<8x128xf32>
    %95 = arith.subf %18, %94 : vector<8x128xf32>
    %cst_31 = arith.constant 0.000000e+00 : f32
    %96 = vector.broadcast %cst_31 : f32 to vector<8x128xf32>
    %97 = arith.maximumf %95, %96 : vector<8x128xf32>
    %98 = vector.broadcast %92 : vector<1x128xf32> to vector<8x128xf32>
    %99 = arith.mulf %98, %97 : vector<8x128xf32>
    %100 = arith.addf %91, %99 : vector<8x128xf32>
    %101 = arith.addf %23, %100 : vector<8x128xf32>
    %c1_i32_32 = arith.constant 1 : i32
    %c8_i32_33 = arith.constant 8 : i32
    %102 = arith.muli %c1_i32_32, %c8_i32_33 : i32
    %103 = tpu.assume_multiple %102, 8 : i32
    %104 = arith.index_cast %103 : i32 to index
    %c0_34 = arith.constant 0 : index
    %105 = vector.load %arg12[%104, %c0_34] : memref<64x128xf32, #tpu.memory_space<vmem>>, vector<8x128xf32>
    %c8_i32_35 = arith.constant 8 : i32
    %106 = arith.muli %c1_i32_32, %c8_i32_35 : i32
    %c1_i32_36 = arith.constant 1 : i32
    %107 = arith.addi %106, %c1_i32_36 : i32
    %108 = arith.sitofp %107 : i32 to f32
    %109 = vector.extract_strided_slice %105 {offsets = [0, 0], sizes = [1, 128], strides = [1, 1]} : vector<8x128xf32> to vector<1x128xf32>
    %110 = vector.broadcast %108 : f32 to vector<8x128xf32>
    %111 = arith.subf %18, %110 : vector<8x128xf32>
    %cst_37 = arith.constant 0.000000e+00 : f32
    %112 = vector.broadcast %cst_37 : f32 to vector<8x128xf32>
    %113 = arith.maximumf %111, %112 : vector<8x128xf32>
    %114 = vector.broadcast %109 : vector<1x128xf32> to vector<8x128xf32>
    %115 = arith.mulf %114, %113 : vector<8x128xf32>
    %116 = vector.extract_strided_slice %105 {offsets = [1, 0], sizes = [1, 128], strides = [1, 1]} : vector<8x128xf32> to vector<1x128xf32>
    %cst_38 = arith.constant 1.000000e+00 : f32
    %117 = arith.addf %108, %cst_38 : f32
    %118 = vector.broadcast %117 : f32 to vector<8x128xf32>
    %119 = arith.subf %18, %118 : vector<8x128xf32>
    %cst_39 = arith.constant 0.000000e+00 : f32
    %120 = vector.broadcast %cst_39 : f32 to vector<8x128xf32>
    %121 = arith.maximumf %119, %120 : vector<8x128xf32>
    %122 = vector.broadcast %116 : vector<1x128xf32> to vector<8x128xf32>
    %123 = arith.mulf %122, %121 : vector<8x128xf32>
    %124 = arith.addf %115, %123 : vector<8x128xf32>
    %125 = vector.extract_strided_slice %105 {offsets = [2, 0], sizes = [1, 128], strides = [1, 1]} : vector<8x128xf32> to vector<1x128xf32>
    %cst_40 = arith.constant 2.000000e+00 : f32
    %126 = arith.addf %108, %cst_40 : f32
    %127 = vector.broadcast %126 : f32 to vector<8x128xf32>
    %128 = arith.subf %18, %127 : vector<8x128xf32>
    %cst_41 = arith.constant 0.000000e+00 : f32
    %129 = vector.broadcast %cst_41 : f32 to vector<8x128xf32>
    %130 = arith.maximumf %128, %129 : vector<8x128xf32>
    %131 = vector.broadcast %125 : vector<1x128xf32> to vector<8x128xf32>
    %132 = arith.mulf %131, %130 : vector<8x128xf32>
    %133 = arith.addf %124, %132 : vector<8x128xf32>
    %134 = vector.extract_strided_slice %105 {offsets = [3, 0], sizes = [1, 128], strides = [1, 1]} : vector<8x128xf32> to vector<1x128xf32>
    %cst_42 = arith.constant 3.000000e+00 : f32
    %135 = arith.addf %108, %cst_42 : f32
    %136 = vector.broadcast %135 : f32 to vector<8x128xf32>
    %137 = arith.subf %18, %136 : vector<8x128xf32>
    %cst_43 = arith.constant 0.000000e+00 : f32
    %138 = vector.broadcast %cst_43 : f32 to vector<8x128xf32>
    %139 = arith.maximumf %137, %138 : vector<8x128xf32>
    %140 = vector.broadcast %134 : vector<1x128xf32> to vector<8x128xf32>
    %141 = arith.mulf %140, %139 : vector<8x128xf32>
    %142 = arith.addf %133, %141 : vector<8x128xf32>
    %143 = vector.extract_strided_slice %105 {offsets = [4, 0], sizes = [1, 128], strides = [1, 1]} : vector<8x128xf32> to vector<1x128xf32>
    %cst_44 = arith.constant 4.000000e+00 : f32
    %144 = arith.addf %108, %cst_44 : f32
    %145 = vector.broadcast %144 : f32 to vector<8x128xf32>
    %146 = arith.subf %18, %145 : vector<8x128xf32>
    %cst_45 = arith.constant 0.000000e+00 : f32
    %147 = vector.broadcast %cst_45 : f32 to vector<8x128xf32>
    %148 = arith.maximumf %146, %147 : vector<8x128xf32>
    %149 = vector.broadcast %143 : vector<1x128xf32> to vector<8x128xf32>
    %150 = arith.mulf %149, %148 : vector<8x128xf32>
    %151 = arith.addf %142, %150 : vector<8x128xf32>
    %152 = vector.extract_strided_slice %105 {offsets = [5, 0], sizes = [1, 128], strides = [1, 1]} : vector<8x128xf32> to vector<1x128xf32>
    %cst_46 = arith.constant 5.000000e+00 : f32
    %153 = arith.addf %108, %cst_46 : f32
    %154 = vector.broadcast %153 : f32 to vector<8x128xf32>
    %155 = arith.subf %18, %154 : vector<8x128xf32>
    %cst_47 = arith.constant 0.000000e+00 : f32
    %156 = vector.broadcast %cst_47 : f32 to vector<8x128xf32>
    %157 = arith.maximumf %155, %156 : vector<8x128xf32>
    %158 = vector.broadcast %152 : vector<1x128xf32> to vector<8x128xf32>
    %159 = arith.mulf %158, %157 : vector<8x128xf32>
    %160 = arith.addf %151, %159 : vector<8x128xf32>
    %161 = vector.extract_strided_slice %105 {offsets = [6, 0], sizes = [1, 128], strides = [1, 1]} : vector<8x128xf32> to vector<1x128xf32>
    %cst_48 = arith.constant 6.000000e+00 : f32
    %162 = arith.addf %108, %cst_48 : f32
    %163 = vector.broadcast %162 : f32 to vector<8x128xf32>
    %164 = arith.subf %18, %163 : vector<8x128xf32>
    %cst_49 = arith.constant 0.000000e+00 : f32
    %165 = vector.broadcast %cst_49 : f32 to vector<8x128xf32>
    %166 = arith.maximumf %164, %165 : vector<8x128xf32>
    %167 = vector.broadcast %161 : vector<1x128xf32> to vector<8x128xf32>
    %168 = arith.mulf %167, %166 : vector<8x128xf32>
    %169 = arith.addf %160, %168 : vector<8x128xf32>
    %170 = vector.extract_strided_slice %105 {offsets = [7, 0], sizes = [1, 128], strides = [1, 1]} : vector<8x128xf32> to vector<1x128xf32>
    %cst_50 = arith.constant 7.000000e+00 : f32
    %171 = arith.addf %108, %cst_50 : f32
    %172 = vector.broadcast %171 : f32 to vector<8x128xf32>
    %173 = arith.subf %18, %172 : vector<8x128xf32>
    %cst_51 = arith.constant 0.000000e+00 : f32
    %174 = vector.broadcast %cst_51 : f32 to vector<8x128xf32>
    %175 = arith.maximumf %173, %174 : vector<8x128xf32>
    %176 = vector.broadcast %170 : vector<1x128xf32> to vector<8x128xf32>
    %177 = arith.mulf %176, %175 : vector<8x128xf32>
    %178 = arith.addf %169, %177 : vector<8x128xf32>
    %179 = arith.addf %101, %178 : vector<8x128xf32>
    %c2_i32 = arith.constant 2 : i32
    %c8_i32_52 = arith.constant 8 : i32
    %180 = arith.muli %c2_i32, %c8_i32_52 : i32
    %181 = tpu.assume_multiple %180, 8 : i32
    %182 = arith.index_cast %181 : i32 to index
    %c0_53 = arith.constant 0 : index
    %183 = vector.load %arg12[%182, %c0_53] : memref<64x128xf32, #tpu.memory_space<vmem>>, vector<8x128xf32>
    %c8_i32_54 = arith.constant 8 : i32
    %184 = arith.muli %c2_i32, %c8_i32_54 : i32
    %c1_i32_55 = arith.constant 1 : i32
    %185 = arith.addi %184, %c1_i32_55 : i32
    %186 = arith.sitofp %185 : i32 to f32
    %187 = vector.extract_strided_slice %183 {offsets = [0, 0], sizes = [1, 128], strides = [1, 1]} : vector<8x128xf32> to vector<1x128xf32>
    %188 = vector.broadcast %186 : f32 to vector<8x128xf32>
    %189 = arith.subf %18, %188 : vector<8x128xf32>
    %cst_56 = arith.constant 0.000000e+00 : f32
    %190 = vector.broadcast %cst_56 : f32 to vector<8x128xf32>
    %191 = arith.maximumf %189, %190 : vector<8x128xf32>
    %192 = vector.broadcast %187 : vector<1x128xf32> to vector<8x128xf32>
    %193 = arith.mulf %192, %191 : vector<8x128xf32>
    %194 = vector.extract_strided_slice %183 {offsets = [1, 0], sizes = [1, 128], strides = [1, 1]} : vector<8x128xf32> to vector<1x128xf32>
    %cst_57 = arith.constant 1.000000e+00 : f32
    %195 = arith.addf %186, %cst_57 : f32
    %196 = vector.broadcast %195 : f32 to vector<8x128xf32>
    %197 = arith.subf %18, %196 : vector<8x128xf32>
    %cst_58 = arith.constant 0.000000e+00 : f32
    %198 = vector.broadcast %cst_58 : f32 to vector<8x128xf32>
    %199 = arith.maximumf %197, %198 : vector<8x128xf32>
    %200 = vector.broadcast %194 : vector<1x128xf32> to vector<8x128xf32>
    %201 = arith.mulf %200, %199 : vector<8x128xf32>
    %202 = arith.addf %193, %201 : vector<8x128xf32>
    %203 = vector.extract_strided_slice %183 {offsets = [2, 0], sizes = [1, 128], strides = [1, 1]} : vector<8x128xf32> to vector<1x128xf32>
    %cst_59 = arith.constant 2.000000e+00 : f32
    %204 = arith.addf %186, %cst_59 : f32
    %205 = vector.broadcast %204 : f32 to vector<8x128xf32>
    %206 = arith.subf %18, %205 : vector<8x128xf32>
    %cst_60 = arith.constant 0.000000e+00 : f32
    %207 = vector.broadcast %cst_60 : f32 to vector<8x128xf32>
    %208 = arith.maximumf %206, %207 : vector<8x128xf32>
    %209 = vector.broadcast %203 : vector<1x128xf32> to vector<8x128xf32>
    %210 = arith.mulf %209, %208 : vector<8x128xf32>
    %211 = arith.addf %202, %210 : vector<8x128xf32>
    %212 = vector.extract_strided_slice %183 {offsets = [3, 0], sizes = [1, 128], strides = [1, 1]} : vector<8x128xf32> to vector<1x128xf32>
    %cst_61 = arith.constant 3.000000e+00 : f32
    %213 = arith.addf %186, %cst_61 : f32
    %214 = vector.broadcast %213 : f32 to vector<8x128xf32>
    %215 = arith.subf %18, %214 : vector<8x128xf32>
    %cst_62 = arith.constant 0.000000e+00 : f32
    %216 = vector.broadcast %cst_62 : f32 to vector<8x128xf32>
    %217 = arith.maximumf %215, %216 : vector<8x128xf32>
    %218 = vector.broadcast %212 : vector<1x128xf32> to vector<8x128xf32>
    %219 = arith.mulf %218, %217 : vector<8x128xf32>
    %220 = arith.addf %211, %219 : vector<8x128xf32>
    %221 = vector.extract_strided_slice %183 {offsets = [4, 0], sizes = [1, 128], strides = [1, 1]} : vector<8x128xf32> to vector<1x128xf32>
    %cst_63 = arith.constant 4.000000e+00 : f32
    %222 = arith.addf %186, %cst_63 : f32
    %223 = vector.broadcast %222 : f32 to vector<8x128xf32>
    %224 = arith.subf %18, %223 : vector<8x128xf32>
    %cst_64 = arith.constant 0.000000e+00 : f32
    %225 = vector.broadcast %cst_64 : f32 to vector<8x128xf32>
    %226 = arith.maximumf %224, %225 : vector<8x128xf32>
    %227 = vector.broadcast %221 : vector<1x128xf32> to vector<8x128xf32>
    %228 = arith.mulf %227, %226 : vector<8x128xf32>
    %229 = arith.addf %220, %228 : vector<8x128xf32>
    %230 = vector.extract_strided_slice %183 {offsets = [5, 0], sizes = [1, 128], strides = [1, 1]} : vector<8x128xf32> to vector<1x128xf32>
    %cst_65 = arith.constant 5.000000e+00 : f32
    %231 = arith.addf %186, %cst_65 : f32
    %232 = vector.broadcast %231 : f32 to vector<8x128xf32>
    %233 = arith.subf %18, %232 : vector<8x128xf32>
    %cst_66 = arith.constant 0.000000e+00 : f32
    %234 = vector.broadcast %cst_66 : f32 to vector<8x128xf32>
    %235 = arith.maximumf %233, %234 : vector<8x128xf32>
    %236 = vector.broadcast %230 : vector<1x128xf32> to vector<8x128xf32>
    %237 = arith.mulf %236, %235 : vector<8x128xf32>
    %238 = arith.addf %229, %237 : vector<8x128xf32>
    %239 = vector.extract_strided_slice %183 {offsets = [6, 0], sizes = [1, 128], strides = [1, 1]} : vector<8x128xf32> to vector<1x128xf32>
    %cst_67 = arith.constant 6.000000e+00 : f32
    %240 = arith.addf %186, %cst_67 : f32
    %241 = vector.broadcast %240 : f32 to vector<8x128xf32>
    %242 = arith.subf %18, %241 : vector<8x128xf32>
    %cst_68 = arith.constant 0.000000e+00 : f32
    %243 = vector.broadcast %cst_68 : f32 to vector<8x128xf32>
    %244 = arith.maximumf %242, %243 : vector<8x128xf32>
    %245 = vector.broadcast %239 : vector<1x128xf32> to vector<8x128xf32>
    %246 = arith.mulf %245, %244 : vector<8x128xf32>
    %247 = arith.addf %238, %246 : vector<8x128xf32>
    %248 = vector.extract_strided_slice %183 {offsets = [7, 0], sizes = [1, 128], strides = [1, 1]} : vector<8x128xf32> to vector<1x128xf32>
    %cst_69 = arith.constant 7.000000e+00 : f32
    %249 = arith.addf %186, %cst_69 : f32
    %250 = vector.broadcast %249 : f32 to vector<8x128xf32>
    %251 = arith.subf %18, %250 : vector<8x128xf32>
    %cst_70 = arith.constant 0.000000e+00 : f32
    %252 = vector.broadcast %cst_70 : f32 to vector<8x128xf32>
    %253 = arith.maximumf %251, %252 : vector<8x128xf32>
    %254 = vector.broadcast %248 : vector<1x128xf32> to vector<8x128xf32>
    %255 = arith.mulf %254, %253 : vector<8x128xf32>
    %256 = arith.addf %247, %255 : vector<8x128xf32>
    %257 = arith.addf %179, %256 : vector<8x128xf32>
    %c3_i32 = arith.constant 3 : i32
    %c8_i32_71 = arith.constant 8 : i32
    %258 = arith.muli %c3_i32, %c8_i32_71 : i32
    %259 = tpu.assume_multiple %258, 8 : i32
    %260 = arith.index_cast %259 : i32 to index
    %c0_72 = arith.constant 0 : index
    %261 = vector.load %arg12[%260, %c0_72] : memref<64x128xf32, #tpu.memory_space<vmem>>, vector<8x128xf32>
    %c8_i32_73 = arith.constant 8 : i32
    %262 = arith.muli %c3_i32, %c8_i32_73 : i32
    %c1_i32_74 = arith.constant 1 : i32
    %263 = arith.addi %262, %c1_i32_74 : i32
    %264 = arith.sitofp %263 : i32 to f32
    %265 = vector.extract_strided_slice %261 {offsets = [0, 0], sizes = [1, 128], strides = [1, 1]} : vector<8x128xf32> to vector<1x128xf32>
    %266 = vector.broadcast %264 : f32 to vector<8x128xf32>
    %267 = arith.subf %18, %266 : vector<8x128xf32>
    %cst_75 = arith.constant 0.000000e+00 : f32
    %268 = vector.broadcast %cst_75 : f32 to vector<8x128xf32>
    %269 = arith.maximumf %267, %268 : vector<8x128xf32>
    %270 = vector.broadcast %265 : vector<1x128xf32> to vector<8x128xf32>
    %271 = arith.mulf %270, %269 : vector<8x128xf32>
    %272 = vector.extract_strided_slice %261 {offsets = [1, 0], sizes = [1, 128], strides = [1, 1]} : vector<8x128xf32> to vector<1x128xf32>
    %cst_76 = arith.constant 1.000000e+00 : f32
    %273 = arith.addf %264, %cst_76 : f32
    %274 = vector.broadcast %273 : f32 to vector<8x128xf32>
    %275 = arith.subf %18, %274 : vector<8x128xf32>
    %cst_77 = arith.constant 0.000000e+00 : f32
    %276 = vector.broadcast %cst_77 : f32 to vector<8x128xf32>
    %277 = arith.maximumf %275, %276 : vector<8x128xf32>
    %278 = vector.broadcast %272 : vector<1x128xf32> to vector<8x128xf32>
    %279 = arith.mulf %278, %277 : vector<8x128xf32>
    %280 = arith.addf %271, %279 : vector<8x128xf32>
    %281 = vector.extract_strided_slice %261 {offsets = [2, 0], sizes = [1, 128], strides = [1, 1]} : vector<8x128xf32> to vector<1x128xf32>
    %cst_78 = arith.constant 2.000000e+00 : f32
    %282 = arith.addf %264, %cst_78 : f32
    %283 = vector.broadcast %282 : f32 to vector<8x128xf32>
    %284 = arith.subf %18, %283 : vector<8x128xf32>
    %cst_79 = arith.constant 0.000000e+00 : f32
    %285 = vector.broadcast %cst_79 : f32 to vector<8x128xf32>
    %286 = arith.maximumf %284, %285 : vector<8x128xf32>
    %287 = vector.broadcast %281 : vector<1x128xf32> to vector<8x128xf32>
    %288 = arith.mulf %287, %286 : vector<8x128xf32>
    %289 = arith.addf %280, %288 : vector<8x128xf32>
    %290 = vector.extract_strided_slice %261 {offsets = [3, 0], sizes = [1, 128], strides = [1, 1]} : vector<8x128xf32> to vector<1x128xf32>
    %cst_80 = arith.constant 3.000000e+00 : f32
    %291 = arith.addf %264, %cst_80 : f32
    %292 = vector.broadcast %291 : f32 to vector<8x128xf32>
    %293 = arith.subf %18, %292 : vector<8x128xf32>
    %cst_81 = arith.constant 0.000000e+00 : f32
    %294 = vector.broadcast %cst_81 : f32 to vector<8x128xf32>
    %295 = arith.maximumf %293, %294 : vector<8x128xf32>
    %296 = vector.broadcast %290 : vector<1x128xf32> to vector<8x128xf32>
    %297 = arith.mulf %296, %295 : vector<8x128xf32>
    %298 = arith.addf %289, %297 : vector<8x128xf32>
    %299 = vector.extract_strided_slice %261 {offsets = [4, 0], sizes = [1, 128], strides = [1, 1]} : vector<8x128xf32> to vector<1x128xf32>
    %cst_82 = arith.constant 4.000000e+00 : f32
    %300 = arith.addf %264, %cst_82 : f32
    %301 = vector.broadcast %300 : f32 to vector<8x128xf32>
    %302 = arith.subf %18, %301 : vector<8x128xf32>
    %cst_83 = arith.constant 0.000000e+00 : f32
    %303 = vector.broadcast %cst_83 : f32 to vector<8x128xf32>
    %304 = arith.maximumf %302, %303 : vector<8x128xf32>
    %305 = vector.broadcast %299 : vector<1x128xf32> to vector<8x128xf32>
    %306 = arith.mulf %305, %304 : vector<8x128xf32>
    %307 = arith.addf %298, %306 : vector<8x128xf32>
    %308 = vector.extract_strided_slice %261 {offsets = [5, 0], sizes = [1, 128], strides = [1, 1]} : vector<8x128xf32> to vector<1x128xf32>
    %cst_84 = arith.constant 5.000000e+00 : f32
    %309 = arith.addf %264, %cst_84 : f32
    %310 = vector.broadcast %309 : f32 to vector<8x128xf32>
    %311 = arith.subf %18, %310 : vector<8x128xf32>
    %cst_85 = arith.constant 0.000000e+00 : f32
    %312 = vector.broadcast %cst_85 : f32 to vector<8x128xf32>
    %313 = arith.maximumf %311, %312 : vector<8x128xf32>
    %314 = vector.broadcast %308 : vector<1x128xf32> to vector<8x128xf32>
    %315 = arith.mulf %314, %313 : vector<8x128xf32>
    %316 = arith.addf %307, %315 : vector<8x128xf32>
    %317 = vector.extract_strided_slice %261 {offsets = [6, 0], sizes = [1, 128], strides = [1, 1]} : vector<8x128xf32> to vector<1x128xf32>
    %cst_86 = arith.constant 6.000000e+00 : f32
    %318 = arith.addf %264, %cst_86 : f32
    %319 = vector.broadcast %318 : f32 to vector<8x128xf32>
    %320 = arith.subf %18, %319 : vector<8x128xf32>
    %cst_87 = arith.constant 0.000000e+00 : f32
    %321 = vector.broadcast %cst_87 : f32 to vector<8x128xf32>
    %322 = arith.maximumf %320, %321 : vector<8x128xf32>
    %323 = vector.broadcast %317 : vector<1x128xf32> to vector<8x128xf32>
    %324 = arith.mulf %323, %322 : vector<8x128xf32>
    %325 = arith.addf %316, %324 : vector<8x128xf32>
    %326 = vector.extract_strided_slice %261 {offsets = [7, 0], sizes = [1, 128], strides = [1, 1]} : vector<8x128xf32> to vector<1x128xf32>
    %cst_88 = arith.constant 7.000000e+00 : f32
    %327 = arith.addf %264, %cst_88 : f32
    %328 = vector.broadcast %327 : f32 to vector<8x128xf32>
    %329 = arith.subf %18, %328 : vector<8x128xf32>
    %cst_89 = arith.constant 0.000000e+00 : f32
    %330 = vector.broadcast %cst_89 : f32 to vector<8x128xf32>
    %331 = arith.maximumf %329, %330 : vector<8x128xf32>
    %332 = vector.broadcast %326 : vector<1x128xf32> to vector<8x128xf32>
    %333 = arith.mulf %332, %331 : vector<8x128xf32>
    %334 = arith.addf %325, %333 : vector<8x128xf32>
    %335 = arith.addf %257, %334 : vector<8x128xf32>
    %c4_i32 = arith.constant 4 : i32
    %c8_i32_90 = arith.constant 8 : i32
    %336 = arith.muli %c4_i32, %c8_i32_90 : i32
    %337 = tpu.assume_multiple %336, 8 : i32
    %338 = arith.index_cast %337 : i32 to index
    %c0_91 = arith.constant 0 : index
    %339 = vector.load %arg12[%338, %c0_91] : memref<64x128xf32, #tpu.memory_space<vmem>>, vector<8x128xf32>
    %c8_i32_92 = arith.constant 8 : i32
    %340 = arith.muli %c4_i32, %c8_i32_92 : i32
    %c1_i32_93 = arith.constant 1 : i32
    %341 = arith.addi %340, %c1_i32_93 : i32
    %342 = arith.sitofp %341 : i32 to f32
    %343 = vector.extract_strided_slice %339 {offsets = [0, 0], sizes = [1, 128], strides = [1, 1]} : vector<8x128xf32> to vector<1x128xf32>
    %344 = vector.broadcast %342 : f32 to vector<8x128xf32>
    %345 = arith.subf %18, %344 : vector<8x128xf32>
    %cst_94 = arith.constant 0.000000e+00 : f32
    %346 = vector.broadcast %cst_94 : f32 to vector<8x128xf32>
    %347 = arith.maximumf %345, %346 : vector<8x128xf32>
    %348 = vector.broadcast %343 : vector<1x128xf32> to vector<8x128xf32>
    %349 = arith.mulf %348, %347 : vector<8x128xf32>
    %350 = vector.extract_strided_slice %339 {offsets = [1, 0], sizes = [1, 128], strides = [1, 1]} : vector<8x128xf32> to vector<1x128xf32>
    %cst_95 = arith.constant 1.000000e+00 : f32
    %351 = arith.addf %342, %cst_95 : f32
    %352 = vector.broadcast %351 : f32 to vector<8x128xf32>
    %353 = arith.subf %18, %352 : vector<8x128xf32>
    %cst_96 = arith.constant 0.000000e+00 : f32
    %354 = vector.broadcast %cst_96 : f32 to vector<8x128xf32>
    %355 = arith.maximumf %353, %354 : vector<8x128xf32>
    %356 = vector.broadcast %350 : vector<1x128xf32> to vector<8x128xf32>
    %357 = arith.mulf %356, %355 : vector<8x128xf32>
    %358 = arith.addf %349, %357 : vector<8x128xf32>
    %359 = vector.extract_strided_slice %339 {offsets = [2, 0], sizes = [1, 128], strides = [1, 1]} : vector<8x128xf32> to vector<1x128xf32>
    %cst_97 = arith.constant 2.000000e+00 : f32
    %360 = arith.addf %342, %cst_97 : f32
    %361 = vector.broadcast %360 : f32 to vector<8x128xf32>
    %362 = arith.subf %18, %361 : vector<8x128xf32>
    %cst_98 = arith.constant 0.000000e+00 : f32
    %363 = vector.broadcast %cst_98 : f32 to vector<8x128xf32>
    %364 = arith.maximumf %362, %363 : vector<8x128xf32>
    %365 = vector.broadcast %359 : vector<1x128xf32> to vector<8x128xf32>
    %366 = arith.mulf %365, %364 : vector<8x128xf32>
    %367 = arith.addf %358, %366 : vector<8x128xf32>
    %368 = vector.extract_strided_slice %339 {offsets = [3, 0], sizes = [1, 128], strides = [1, 1]} : vector<8x128xf32> to vector<1x128xf32>
    %cst_99 = arith.constant 3.000000e+00 : f32
    %369 = arith.addf %342, %cst_99 : f32
    %370 = vector.broadcast %369 : f32 to vector<8x128xf32>
    %371 = arith.subf %18, %370 : vector<8x128xf32>
    %cst_100 = arith.constant 0.000000e+00 : f32
    %372 = vector.broadcast %cst_100 : f32 to vector<8x128xf32>
    %373 = arith.maximumf %371, %372 : vector<8x128xf32>
    %374 = vector.broadcast %368 : vector<1x128xf32> to vector<8x128xf32>
    %375 = arith.mulf %374, %373 : vector<8x128xf32>
    %376 = arith.addf %367, %375 : vector<8x128xf32>
    %377 = vector.extract_strided_slice %339 {offsets = [4, 0], sizes = [1, 128], strides = [1, 1]} : vector<8x128xf32> to vector<1x128xf32>
    %cst_101 = arith.constant 4.000000e+00 : f32
    %378 = arith.addf %342, %cst_101 : f32
    %379 = vector.broadcast %378 : f32 to vector<8x128xf32>
    %380 = arith.subf %18, %379 : vector<8x128xf32>
    %cst_102 = arith.constant 0.000000e+00 : f32
    %381 = vector.broadcast %cst_102 : f32 to vector<8x128xf32>
    %382 = arith.maximumf %380, %381 : vector<8x128xf32>
    %383 = vector.broadcast %377 : vector<1x128xf32> to vector<8x128xf32>
    %384 = arith.mulf %383, %382 : vector<8x128xf32>
    %385 = arith.addf %376, %384 : vector<8x128xf32>
    %386 = vector.extract_strided_slice %339 {offsets = [5, 0], sizes = [1, 128], strides = [1, 1]} : vector<8x128xf32> to vector<1x128xf32>
    %cst_103 = arith.constant 5.000000e+00 : f32
    %387 = arith.addf %342, %cst_103 : f32
    %388 = vector.broadcast %387 : f32 to vector<8x128xf32>
    %389 = arith.subf %18, %388 : vector<8x128xf32>
    %cst_104 = arith.constant 0.000000e+00 : f32
    %390 = vector.broadcast %cst_104 : f32 to vector<8x128xf32>
    %391 = arith.maximumf %389, %390 : vector<8x128xf32>
    %392 = vector.broadcast %386 : vector<1x128xf32> to vector<8x128xf32>
    %393 = arith.mulf %392, %391 : vector<8x128xf32>
    %394 = arith.addf %385, %393 : vector<8x128xf32>
    %395 = vector.extract_strided_slice %339 {offsets = [6, 0], sizes = [1, 128], strides = [1, 1]} : vector<8x128xf32> to vector<1x128xf32>
    %cst_105 = arith.constant 6.000000e+00 : f32
    %396 = arith.addf %342, %cst_105 : f32
    %397 = vector.broadcast %396 : f32 to vector<8x128xf32>
    %398 = arith.subf %18, %397 : vector<8x128xf32>
    %cst_106 = arith.constant 0.000000e+00 : f32
    %399 = vector.broadcast %cst_106 : f32 to vector<8x128xf32>
    %400 = arith.maximumf %398, %399 : vector<8x128xf32>
    %401 = vector.broadcast %395 : vector<1x128xf32> to vector<8x128xf32>
    %402 = arith.mulf %401, %400 : vector<8x128xf32>
    %403 = arith.addf %394, %402 : vector<8x128xf32>
    %404 = vector.extract_strided_slice %339 {offsets = [7, 0], sizes = [1, 128], strides = [1, 1]} : vector<8x128xf32> to vector<1x128xf32>
    %cst_107 = arith.constant 7.000000e+00 : f32
    %405 = arith.addf %342, %cst_107 : f32
    %406 = vector.broadcast %405 : f32 to vector<8x128xf32>
    %407 = arith.subf %18, %406 : vector<8x128xf32>
    %cst_108 = arith.constant 0.000000e+00 : f32
    %408 = vector.broadcast %cst_108 : f32 to vector<8x128xf32>
    %409 = arith.maximumf %407, %408 : vector<8x128xf32>
    %410 = vector.broadcast %404 : vector<1x128xf32> to vector<8x128xf32>
    %411 = arith.mulf %410, %409 : vector<8x128xf32>
    %412 = arith.addf %403, %411 : vector<8x128xf32>
    %413 = arith.addf %335, %412 : vector<8x128xf32>
    %c5_i32 = arith.constant 5 : i32
    %c8_i32_109 = arith.constant 8 : i32
    %414 = arith.muli %c5_i32, %c8_i32_109 : i32
    %415 = tpu.assume_multiple %414, 8 : i32
    %416 = arith.index_cast %415 : i32 to index
    %c0_110 = arith.constant 0 : index
    %417 = vector.load %arg12[%416, %c0_110] : memref<64x128xf32, #tpu.memory_space<vmem>>, vector<8x128xf32>
    %c8_i32_111 = arith.constant 8 : i32
    %418 = arith.muli %c5_i32, %c8_i32_111 : i32
    %c1_i32_112 = arith.constant 1 : i32
    %419 = arith.addi %418, %c1_i32_112 : i32
    %420 = arith.sitofp %419 : i32 to f32
    %421 = vector.extract_strided_slice %417 {offsets = [0, 0], sizes = [1, 128], strides = [1, 1]} : vector<8x128xf32> to vector<1x128xf32>
    %422 = vector.broadcast %420 : f32 to vector<8x128xf32>
    %423 = arith.subf %18, %422 : vector<8x128xf32>
    %cst_113 = arith.constant 0.000000e+00 : f32
    %424 = vector.broadcast %cst_113 : f32 to vector<8x128xf32>
    %425 = arith.maximumf %423, %424 : vector<8x128xf32>
    %426 = vector.broadcast %421 : vector<1x128xf32> to vector<8x128xf32>
    %427 = arith.mulf %426, %425 : vector<8x128xf32>
    %428 = vector.extract_strided_slice %417 {offsets = [1, 0], sizes = [1, 128], strides = [1, 1]} : vector<8x128xf32> to vector<1x128xf32>
    %cst_114 = arith.constant 1.000000e+00 : f32
    %429 = arith.addf %420, %cst_114 : f32
    %430 = vector.broadcast %429 : f32 to vector<8x128xf32>
    %431 = arith.subf %18, %430 : vector<8x128xf32>
    %cst_115 = arith.constant 0.000000e+00 : f32
    %432 = vector.broadcast %cst_115 : f32 to vector<8x128xf32>
    %433 = arith.maximumf %431, %432 : vector<8x128xf32>
    %434 = vector.broadcast %428 : vector<1x128xf32> to vector<8x128xf32>
    %435 = arith.mulf %434, %433 : vector<8x128xf32>
    %436 = arith.addf %427, %435 : vector<8x128xf32>
    %437 = vector.extract_strided_slice %417 {offsets = [2, 0], sizes = [1, 128], strides = [1, 1]} : vector<8x128xf32> to vector<1x128xf32>
    %cst_116 = arith.constant 2.000000e+00 : f32
    %438 = arith.addf %420, %cst_116 : f32
    %439 = vector.broadcast %438 : f32 to vector<8x128xf32>
    %440 = arith.subf %18, %439 : vector<8x128xf32>
    %cst_117 = arith.constant 0.000000e+00 : f32
    %441 = vector.broadcast %cst_117 : f32 to vector<8x128xf32>
    %442 = arith.maximumf %440, %441 : vector<8x128xf32>
    %443 = vector.broadcast %437 : vector<1x128xf32> to vector<8x128xf32>
    %444 = arith.mulf %443, %442 : vector<8x128xf32>
    %445 = arith.addf %436, %444 : vector<8x128xf32>
    %446 = vector.extract_strided_slice %417 {offsets = [3, 0], sizes = [1, 128], strides = [1, 1]} : vector<8x128xf32> to vector<1x128xf32>
    %cst_118 = arith.constant 3.000000e+00 : f32
    %447 = arith.addf %420, %cst_118 : f32
    %448 = vector.broadcast %447 : f32 to vector<8x128xf32>
    %449 = arith.subf %18, %448 : vector<8x128xf32>
    %cst_119 = arith.constant 0.000000e+00 : f32
    %450 = vector.broadcast %cst_119 : f32 to vector<8x128xf32>
    %451 = arith.maximumf %449, %450 : vector<8x128xf32>
    %452 = vector.broadcast %446 : vector<1x128xf32> to vector<8x128xf32>
    %453 = arith.mulf %452, %451 : vector<8x128xf32>
    %454 = arith.addf %445, %453 : vector<8x128xf32>
    %455 = vector.extract_strided_slice %417 {offsets = [4, 0], sizes = [1, 128], strides = [1, 1]} : vector<8x128xf32> to vector<1x128xf32>
    %cst_120 = arith.constant 4.000000e+00 : f32
    %456 = arith.addf %420, %cst_120 : f32
    %457 = vector.broadcast %456 : f32 to vector<8x128xf32>
    %458 = arith.subf %18, %457 : vector<8x128xf32>
    %cst_121 = arith.constant 0.000000e+00 : f32
    %459 = vector.broadcast %cst_121 : f32 to vector<8x128xf32>
    %460 = arith.maximumf %458, %459 : vector<8x128xf32>
    %461 = vector.broadcast %455 : vector<1x128xf32> to vector<8x128xf32>
    %462 = arith.mulf %461, %460 : vector<8x128xf32>
    %463 = arith.addf %454, %462 : vector<8x128xf32>
    %464 = vector.extract_strided_slice %417 {offsets = [5, 0], sizes = [1, 128], strides = [1, 1]} : vector<8x128xf32> to vector<1x128xf32>
    %cst_122 = arith.constant 5.000000e+00 : f32
    %465 = arith.addf %420, %cst_122 : f32
    %466 = vector.broadcast %465 : f32 to vector<8x128xf32>
    %467 = arith.subf %18, %466 : vector<8x128xf32>
    %cst_123 = arith.constant 0.000000e+00 : f32
    %468 = vector.broadcast %cst_123 : f32 to vector<8x128xf32>
    %469 = arith.maximumf %467, %468 : vector<8x128xf32>
    %470 = vector.broadcast %464 : vector<1x128xf32> to vector<8x128xf32>
    %471 = arith.mulf %470, %469 : vector<8x128xf32>
    %472 = arith.addf %463, %471 : vector<8x128xf32>
    %473 = vector.extract_strided_slice %417 {offsets = [6, 0], sizes = [1, 128], strides = [1, 1]} : vector<8x128xf32> to vector<1x128xf32>
    %cst_124 = arith.constant 6.000000e+00 : f32
    %474 = arith.addf %420, %cst_124 : f32
    %475 = vector.broadcast %474 : f32 to vector<8x128xf32>
    %476 = arith.subf %18, %475 : vector<8x128xf32>
    %cst_125 = arith.constant 0.000000e+00 : f32
    %477 = vector.broadcast %cst_125 : f32 to vector<8x128xf32>
    %478 = arith.maximumf %476, %477 : vector<8x128xf32>
    %479 = vector.broadcast %473 : vector<1x128xf32> to vector<8x128xf32>
    %480 = arith.mulf %479, %478 : vector<8x128xf32>
    %481 = arith.addf %472, %480 : vector<8x128xf32>
    %482 = vector.extract_strided_slice %417 {offsets = [7, 0], sizes = [1, 128], strides = [1, 1]} : vector<8x128xf32> to vector<1x128xf32>
    %cst_126 = arith.constant 7.000000e+00 : f32
    %483 = arith.addf %420, %cst_126 : f32
    %484 = vector.broadcast %483 : f32 to vector<8x128xf32>
    %485 = arith.subf %18, %484 : vector<8x128xf32>
    %cst_127 = arith.constant 0.000000e+00 : f32
    %486 = vector.broadcast %cst_127 : f32 to vector<8x128xf32>
    %487 = arith.maximumf %485, %486 : vector<8x128xf32>
    %488 = vector.broadcast %482 : vector<1x128xf32> to vector<8x128xf32>
    %489 = arith.mulf %488, %487 : vector<8x128xf32>
    %490 = arith.addf %481, %489 : vector<8x128xf32>
    %491 = arith.addf %413, %490 : vector<8x128xf32>
    %c6_i32 = arith.constant 6 : i32
    %c8_i32_128 = arith.constant 8 : i32
    %492 = arith.muli %c6_i32, %c8_i32_128 : i32
    %493 = tpu.assume_multiple %492, 8 : i32
    %494 = arith.index_cast %493 : i32 to index
    %c0_129 = arith.constant 0 : index
    %495 = vector.load %arg12[%494, %c0_129] : memref<64x128xf32, #tpu.memory_space<vmem>>, vector<8x128xf32>
    %c8_i32_130 = arith.constant 8 : i32
    %496 = arith.muli %c6_i32, %c8_i32_130 : i32
    %c1_i32_131 = arith.constant 1 : i32
    %497 = arith.addi %496, %c1_i32_131 : i32
    %498 = arith.sitofp %497 : i32 to f32
    %499 = vector.extract_strided_slice %495 {offsets = [0, 0], sizes = [1, 128], strides = [1, 1]} : vector<8x128xf32> to vector<1x128xf32>
    %500 = vector.broadcast %498 : f32 to vector<8x128xf32>
    %501 = arith.subf %18, %500 : vector<8x128xf32>
    %cst_132 = arith.constant 0.000000e+00 : f32
    %502 = vector.broadcast %cst_132 : f32 to vector<8x128xf32>
    %503 = arith.maximumf %501, %502 : vector<8x128xf32>
    %504 = vector.broadcast %499 : vector<1x128xf32> to vector<8x128xf32>
    %505 = arith.mulf %504, %503 : vector<8x128xf32>
    %506 = vector.extract_strided_slice %495 {offsets = [1, 0], sizes = [1, 128], strides = [1, 1]} : vector<8x128xf32> to vector<1x128xf32>
    %cst_133 = arith.constant 1.000000e+00 : f32
    %507 = arith.addf %498, %cst_133 : f32
    %508 = vector.broadcast %507 : f32 to vector<8x128xf32>
    %509 = arith.subf %18, %508 : vector<8x128xf32>
    %cst_134 = arith.constant 0.000000e+00 : f32
    %510 = vector.broadcast %cst_134 : f32 to vector<8x128xf32>
    %511 = arith.maximumf %509, %510 : vector<8x128xf32>
    %512 = vector.broadcast %506 : vector<1x128xf32> to vector<8x128xf32>
    %513 = arith.mulf %512, %511 : vector<8x128xf32>
    %514 = arith.addf %505, %513 : vector<8x128xf32>
    %515 = vector.extract_strided_slice %495 {offsets = [2, 0], sizes = [1, 128], strides = [1, 1]} : vector<8x128xf32> to vector<1x128xf32>
    %cst_135 = arith.constant 2.000000e+00 : f32
    %516 = arith.addf %498, %cst_135 : f32
    %517 = vector.broadcast %516 : f32 to vector<8x128xf32>
    %518 = arith.subf %18, %517 : vector<8x128xf32>
    %cst_136 = arith.constant 0.000000e+00 : f32
    %519 = vector.broadcast %cst_136 : f32 to vector<8x128xf32>
    %520 = arith.maximumf %518, %519 : vector<8x128xf32>
    %521 = vector.broadcast %515 : vector<1x128xf32> to vector<8x128xf32>
    %522 = arith.mulf %521, %520 : vector<8x128xf32>
    %523 = arith.addf %514, %522 : vector<8x128xf32>
    %524 = vector.extract_strided_slice %495 {offsets = [3, 0], sizes = [1, 128], strides = [1, 1]} : vector<8x128xf32> to vector<1x128xf32>
    %cst_137 = arith.constant 3.000000e+00 : f32
    %525 = arith.addf %498, %cst_137 : f32
    %526 = vector.broadcast %525 : f32 to vector<8x128xf32>
    %527 = arith.subf %18, %526 : vector<8x128xf32>
    %cst_138 = arith.constant 0.000000e+00 : f32
    %528 = vector.broadcast %cst_138 : f32 to vector<8x128xf32>
    %529 = arith.maximumf %527, %528 : vector<8x128xf32>
    %530 = vector.broadcast %524 : vector<1x128xf32> to vector<8x128xf32>
    %531 = arith.mulf %530, %529 : vector<8x128xf32>
    %532 = arith.addf %523, %531 : vector<8x128xf32>
    %533 = vector.extract_strided_slice %495 {offsets = [4, 0], sizes = [1, 128], strides = [1, 1]} : vector<8x128xf32> to vector<1x128xf32>
    %cst_139 = arith.constant 4.000000e+00 : f32
    %534 = arith.addf %498, %cst_139 : f32
    %535 = vector.broadcast %534 : f32 to vector<8x128xf32>
    %536 = arith.subf %18, %535 : vector<8x128xf32>
    %cst_140 = arith.constant 0.000000e+00 : f32
    %537 = vector.broadcast %cst_140 : f32 to vector<8x128xf32>
    %538 = arith.maximumf %536, %537 : vector<8x128xf32>
    %539 = vector.broadcast %533 : vector<1x128xf32> to vector<8x128xf32>
    %540 = arith.mulf %539, %538 : vector<8x128xf32>
    %541 = arith.addf %532, %540 : vector<8x128xf32>
    %542 = vector.extract_strided_slice %495 {offsets = [5, 0], sizes = [1, 128], strides = [1, 1]} : vector<8x128xf32> to vector<1x128xf32>
    %cst_141 = arith.constant 5.000000e+00 : f32
    %543 = arith.addf %498, %cst_141 : f32
    %544 = vector.broadcast %543 : f32 to vector<8x128xf32>
    %545 = arith.subf %18, %544 : vector<8x128xf32>
    %cst_142 = arith.constant 0.000000e+00 : f32
    %546 = vector.broadcast %cst_142 : f32 to vector<8x128xf32>
    %547 = arith.maximumf %545, %546 : vector<8x128xf32>
    %548 = vector.broadcast %542 : vector<1x128xf32> to vector<8x128xf32>
    %549 = arith.mulf %548, %547 : vector<8x128xf32>
    %550 = arith.addf %541, %549 : vector<8x128xf32>
    %551 = vector.extract_strided_slice %495 {offsets = [6, 0], sizes = [1, 128], strides = [1, 1]} : vector<8x128xf32> to vector<1x128xf32>
    %cst_143 = arith.constant 6.000000e+00 : f32
    %552 = arith.addf %498, %cst_143 : f32
    %553 = vector.broadcast %552 : f32 to vector<8x128xf32>
    %554 = arith.subf %18, %553 : vector<8x128xf32>
    %cst_144 = arith.constant 0.000000e+00 : f32
    %555 = vector.broadcast %cst_144 : f32 to vector<8x128xf32>
    %556 = arith.maximumf %554, %555 : vector<8x128xf32>
    %557 = vector.broadcast %551 : vector<1x128xf32> to vector<8x128xf32>
    %558 = arith.mulf %557, %556 : vector<8x128xf32>
    %559 = arith.addf %550, %558 : vector<8x128xf32>
    %560 = vector.extract_strided_slice %495 {offsets = [7, 0], sizes = [1, 128], strides = [1, 1]} : vector<8x128xf32> to vector<1x128xf32>
    %cst_145 = arith.constant 7.000000e+00 : f32
    %561 = arith.addf %498, %cst_145 : f32
    %562 = vector.broadcast %561 : f32 to vector<8x128xf32>
    %563 = arith.subf %18, %562 : vector<8x128xf32>
    %cst_146 = arith.constant 0.000000e+00 : f32
    %564 = vector.broadcast %cst_146 : f32 to vector<8x128xf32>
    %565 = arith.maximumf %563, %564 : vector<8x128xf32>
    %566 = vector.broadcast %560 : vector<1x128xf32> to vector<8x128xf32>
    %567 = arith.mulf %566, %565 : vector<8x128xf32>
    %568 = arith.addf %559, %567 : vector<8x128xf32>
    %569 = arith.addf %491, %568 : vector<8x128xf32>
    %c7_i32 = arith.constant 7 : i32
    %c8_i32_147 = arith.constant 8 : i32
    %570 = arith.muli %c7_i32, %c8_i32_147 : i32
    %571 = tpu.assume_multiple %570, 8 : i32
    %572 = arith.index_cast %571 : i32 to index
    %c0_148 = arith.constant 0 : index
    %573 = vector.load %arg12[%572, %c0_148] : memref<64x128xf32, #tpu.memory_space<vmem>>, vector<8x128xf32>
    %c8_i32_149 = arith.constant 8 : i32
    %574 = arith.muli %c7_i32, %c8_i32_149 : i32
    %c1_i32_150 = arith.constant 1 : i32
    %575 = arith.addi %574, %c1_i32_150 : i32
    %576 = arith.sitofp %575 : i32 to f32
    %577 = vector.extract_strided_slice %573 {offsets = [0, 0], sizes = [1, 128], strides = [1, 1]} : vector<8x128xf32> to vector<1x128xf32>
    %578 = vector.broadcast %576 : f32 to vector<8x128xf32>
    %579 = arith.subf %18, %578 : vector<8x128xf32>
    %cst_151 = arith.constant 0.000000e+00 : f32
    %580 = vector.broadcast %cst_151 : f32 to vector<8x128xf32>
    %581 = arith.maximumf %579, %580 : vector<8x128xf32>
    %582 = vector.broadcast %577 : vector<1x128xf32> to vector<8x128xf32>
    %583 = arith.mulf %582, %581 : vector<8x128xf32>
    %584 = vector.extract_strided_slice %573 {offsets = [1, 0], sizes = [1, 128], strides = [1, 1]} : vector<8x128xf32> to vector<1x128xf32>
    %cst_152 = arith.constant 1.000000e+00 : f32
    %585 = arith.addf %576, %cst_152 : f32
    %586 = vector.broadcast %585 : f32 to vector<8x128xf32>
    %587 = arith.subf %18, %586 : vector<8x128xf32>
    %cst_153 = arith.constant 0.000000e+00 : f32
    %588 = vector.broadcast %cst_153 : f32 to vector<8x128xf32>
    %589 = arith.maximumf %587, %588 : vector<8x128xf32>
    %590 = vector.broadcast %584 : vector<1x128xf32> to vector<8x128xf32>
    %591 = arith.mulf %590, %589 : vector<8x128xf32>
    %592 = arith.addf %583, %591 : vector<8x128xf32>
    %593 = vector.extract_strided_slice %573 {offsets = [2, 0], sizes = [1, 128], strides = [1, 1]} : vector<8x128xf32> to vector<1x128xf32>
    %cst_154 = arith.constant 2.000000e+00 : f32
    %594 = arith.addf %576, %cst_154 : f32
    %595 = vector.broadcast %594 : f32 to vector<8x128xf32>
    %596 = arith.subf %18, %595 : vector<8x128xf32>
    %cst_155 = arith.constant 0.000000e+00 : f32
    %597 = vector.broadcast %cst_155 : f32 to vector<8x128xf32>
    %598 = arith.maximumf %596, %597 : vector<8x128xf32>
    %599 = vector.broadcast %593 : vector<1x128xf32> to vector<8x128xf32>
    %600 = arith.mulf %599, %598 : vector<8x128xf32>
    %601 = arith.addf %592, %600 : vector<8x128xf32>
    %602 = vector.extract_strided_slice %573 {offsets = [3, 0], sizes = [1, 128], strides = [1, 1]} : vector<8x128xf32> to vector<1x128xf32>
    %cst_156 = arith.constant 3.000000e+00 : f32
    %603 = arith.addf %576, %cst_156 : f32
    %604 = vector.broadcast %603 : f32 to vector<8x128xf32>
    %605 = arith.subf %18, %604 : vector<8x128xf32>
    %cst_157 = arith.constant 0.000000e+00 : f32
    %606 = vector.broadcast %cst_157 : f32 to vector<8x128xf32>
    %607 = arith.maximumf %605, %606 : vector<8x128xf32>
    %608 = vector.broadcast %602 : vector<1x128xf32> to vector<8x128xf32>
    %609 = arith.mulf %608, %607 : vector<8x128xf32>
    %610 = arith.addf %601, %609 : vector<8x128xf32>
    %611 = vector.extract_strided_slice %573 {offsets = [4, 0], sizes = [1, 128], strides = [1, 1]} : vector<8x128xf32> to vector<1x128xf32>
    %cst_158 = arith.constant 4.000000e+00 : f32
    %612 = arith.addf %576, %cst_158 : f32
    %613 = vector.broadcast %612 : f32 to vector<8x128xf32>
    %614 = arith.subf %18, %613 : vector<8x128xf32>
    %cst_159 = arith.constant 0.000000e+00 : f32
    %615 = vector.broadcast %cst_159 : f32 to vector<8x128xf32>
    %616 = arith.maximumf %614, %615 : vector<8x128xf32>
    %617 = vector.broadcast %611 : vector<1x128xf32> to vector<8x128xf32>
    %618 = arith.mulf %617, %616 : vector<8x128xf32>
    %619 = arith.addf %610, %618 : vector<8x128xf32>
    %620 = vector.extract_strided_slice %573 {offsets = [5, 0], sizes = [1, 128], strides = [1, 1]} : vector<8x128xf32> to vector<1x128xf32>
    %cst_160 = arith.constant 5.000000e+00 : f32
    %621 = arith.addf %576, %cst_160 : f32
    %622 = vector.broadcast %621 : f32 to vector<8x128xf32>
    %623 = arith.subf %18, %622 : vector<8x128xf32>
    %cst_161 = arith.constant 0.000000e+00 : f32
    %624 = vector.broadcast %cst_161 : f32 to vector<8x128xf32>
    %625 = arith.maximumf %623, %624 : vector<8x128xf32>
    %626 = vector.broadcast %620 : vector<1x128xf32> to vector<8x128xf32>
    %627 = arith.mulf %626, %625 : vector<8x128xf32>
    %628 = arith.addf %619, %627 : vector<8x128xf32>
    %629 = vector.extract_strided_slice %573 {offsets = [6, 0], sizes = [1, 128], strides = [1, 1]} : vector<8x128xf32> to vector<1x128xf32>
    %cst_162 = arith.constant 6.000000e+00 : f32
    %630 = arith.addf %576, %cst_162 : f32
    %631 = vector.broadcast %630 : f32 to vector<8x128xf32>
    %632 = arith.subf %18, %631 : vector<8x128xf32>
    %cst_163 = arith.constant 0.000000e+00 : f32
    %633 = vector.broadcast %cst_163 : f32 to vector<8x128xf32>
    %634 = arith.maximumf %632, %633 : vector<8x128xf32>
    %635 = vector.broadcast %629 : vector<1x128xf32> to vector<8x128xf32>
    %636 = arith.mulf %635, %634 : vector<8x128xf32>
    %637 = arith.addf %628, %636 : vector<8x128xf32>
    %638 = vector.extract_strided_slice %573 {offsets = [7, 0], sizes = [1, 128], strides = [1, 1]} : vector<8x128xf32> to vector<1x128xf32>
    %cst_164 = arith.constant 7.000000e+00 : f32
    %639 = arith.addf %576, %cst_164 : f32
    %640 = vector.broadcast %639 : f32 to vector<8x128xf32>
    %641 = arith.subf %18, %640 : vector<8x128xf32>
    %cst_165 = arith.constant 0.000000e+00 : f32
    %642 = vector.broadcast %cst_165 : f32 to vector<8x128xf32>
    %643 = arith.maximumf %641, %642 : vector<8x128xf32>
    %644 = vector.broadcast %638 : vector<1x128xf32> to vector<8x128xf32>
    %645 = arith.mulf %644, %643 : vector<8x128xf32>
    %646 = arith.addf %637, %645 : vector<8x128xf32>
    %647 = arith.addf %569, %646 : vector<8x128xf32>
    %c8_i32_166 = arith.constant 8 : i32
    %c0_167 = arith.constant 0 : index
    %c0_168 = arith.constant 0 : index
    %648 = vector.load %arg19[%c0_167, %c0_168] : memref<8x128xf32, #tpu.memory_space<vmem>>, vector<8x128xf32>
    %649 = arith.truncf %647 : vector<8x128xf32> to vector<8x128xbf16>
    %c0_169 = arith.constant 0 : index
    %c0_170 = arith.constant 0 : index
    %650 = vector.load %arg13[%c0_169, %c0_170] : memref<128x128xbf16, #tpu.memory_space<vmem>>, vector<128x128xbf16>
    %cst_171 = arith.constant dense<0.000000e+00> : vector<8x128xf32>
    %651 = tpu.matmul %649, %650, %cst_171 {dimension_numbers = #tpu.dot_dimension_numbers<[1], [0], [0], [1], [0, 0, 1, 1], [], []>} : vector<8x128xbf16>, vector<128x128xbf16>, vector<8x128xf32> -> vector<8x128xf32>
    %652 = arith.addf %648, %651 : vector<8x128xf32>
    %c0_172 = arith.constant 0 : index
    %c0_173 = arith.constant 0 : index
    %653 = vector.load %arg19[%c0_172, %c0_173] : memref<8x128xf32, #tpu.memory_space<vmem>>, vector<8x128xf32>
    tpu.vector_store %arg19[%c0_172, %c0_173], %652 {strides = array<i32>} : memref<8x128xf32, #tpu.memory_space<vmem>>, vector<8x128xf32>,
    %c3_i32_174 = arith.constant 3 : i32
    %654 = arith.cmpi eq, %arg1, %c3_i32_174 : i32
    %655 = arith.extui %654 : i1 to i32
    %c0_i32_175 = arith.constant 0 : i32
    %656 = arith.cmpi ne, %655, %c0_i32_175 : i32
    scf.if %656 {
      %c0_176 = arith.constant 0 : index
      %c0_177 = arith.constant 0 : index
      %657 = vector.load %arg19[%c0_176, %c0_177] : memref<8x128xf32, #tpu.memory_space<vmem>>, vector<8x128xf32>
      %c0_178 = arith.constant 0 : index
      %c0_179 = arith.constant 0 : index
      %658 = vector.load %arg14[%c0_178, %c0_179] : memref<1x128xf32, #tpu.memory_space<vmem>>, vector<1x128xf32>
      %659 = vector.broadcast %658 : vector<1x128xf32> to vector<8x128xf32>
      %660 = arith.addf %657, %659 : vector<8x128xf32>
      %c0_180 = arith.constant 0 : index
      %c0_181 = arith.constant 0 : index
      %661 = vector.load %arg15[%c0_180, %c0_181] : memref<1x128xf32, #tpu.memory_space<vmem>>, vector<1x128xf32>
      %662 = vector.broadcast %661 : vector<1x128xf32> to vector<8x128xf32>
      %663 = arith.mulf %660, %662 : vector<8x128xf32>
      %c0_182 = arith.constant 0 : index
      %c0_183 = arith.constant 0 : index
      %664 = vector.load %arg16[%c0_182, %c0_183] : memref<1x128xf32, #tpu.memory_space<vmem>>, vector<1x128xf32>
      %665 = vector.broadcast %664 : vector<1x128xf32> to vector<8x128xf32>
      %666 = arith.addf %663, %665 : vector<8x128xf32>
      %c0_184 = arith.constant 0 : index
      %c0_185 = arith.constant 0 : index
      %667 = vector.load %arg2[%c0_184, %c0_185] : memref<8x128xf32, #tpu.memory_space<vmem>>, vector<8x128xf32>
      %668 = arith.addf %666, %667 : vector<8x128xf32>
      %c0_186 = arith.constant 0 : index
      %c0_187 = arith.constant 0 : index
      %669 = vector.load %arg17[%c0_186, %c0_187] : memref<8x128xf32, #tpu.memory_space<vmem>>, vector<8x128xf32>
      tpu.vector_store %arg17[%c0_186, %c0_187], %668 {strides = array<i32>} : memref<8x128xf32, #tpu.memory_space<vmem>>, vector<8x128xf32>,
    } else {
    }
    return
  }
  func.func @transform_0(%arg0: i32, %arg1: i32) -> (i32, i32) {
    %c0_i32 = arith.constant 0 : i32
    %c0_i32_0 = arith.constant 0 : i32
    return %arg0, %c0_i32 : i32, i32
  }
  func.func @transform_1(%arg0: i32, %arg1: i32) -> (i32, i32) {
    %c0_i32 = arith.constant 0 : i32
    %c0_i32_0 = arith.constant 0 : i32
    %c0_i32_1 = arith.constant 0 : i32
    return %c0_i32, %c0_i32_0 : i32, i32
  }
  func.func @transform_2(%arg0: i32, %arg1: i32) -> (i32, i32) {
    %c0_i32 = arith.constant 0 : i32
    %c0_i32_0 = arith.constant 0 : i32
    %c0_i32_1 = arith.constant 0 : i32
    return %c0_i32, %c0_i32_0 : i32, i32
  }
  func.func @transform_3(%arg0: i32, %arg1: i32) -> (i32, i32) {
    %c0_i32 = arith.constant 0 : i32
    %c0_i32_0 = arith.constant 0 : i32
    %c0_i32_1 = arith.constant 0 : i32
    return %c0_i32, %c0_i32_0 : i32, i32
  }
  func.func @transform_4(%arg0: i32, %arg1: i32) -> (i32, i32) {
    %c0_i32 = arith.constant 0 : i32
    %c0_i32_0 = arith.constant 0 : i32
    %c0_i32_1 = arith.constant 0 : i32
    return %c0_i32, %c0_i32_0 : i32, i32
  }
  func.func @transform_5(%arg0: i32, %arg1: i32) -> (i32, i32) {
    %c0_i32 = arith.constant 0 : i32
    %c0_i32_0 = arith.constant 0 : i32
    %c0_i32_1 = arith.constant 0 : i32
    return %c0_i32, %c0_i32_0 : i32, i32
  }
  func.func @transform_6(%arg0: i32, %arg1: i32) -> (i32, i32) {
    %c0_i32 = arith.constant 0 : i32
    %c0_i32_0 = arith.constant 0 : i32
    return %c0_i32, %arg1 : i32, i32
  }
  func.func @transform_7(%arg0: i32, %arg1: i32) -> (i32, i32) {
    %c0_i32 = arith.constant 0 : i32
    %c0_i32_0 = arith.constant 0 : i32
    return %c0_i32, %arg1 : i32, i32
  }
  func.func @transform_8(%arg0: i32, %arg1: i32) -> (i32, i32) {
    %c0_i32 = arith.constant 0 : i32
    %c0_i32_0 = arith.constant 0 : i32
    return %c0_i32, %arg1 : i32, i32
  }
  func.func @transform_9(%arg0: i32, %arg1: i32) -> (i32, i32) {
    %c0_i32 = arith.constant 0 : i32
    %c0_i32_0 = arith.constant 0 : i32
    return %c0_i32, %arg1 : i32, i32
  }
  func.func @transform_10(%arg0: i32, %arg1: i32) -> (i32, i32) {
    %c0_i32 = arith.constant 0 : i32
    %c0_i32_0 = arith.constant 0 : i32
    return %c0_i32, %arg1 : i32, i32
  }
  func.func @transform_11(%arg0: i32, %arg1: i32) -> (i32, i32) {
    %c0_i32 = arith.constant 0 : i32
    %c0_i32_0 = arith.constant 0 : i32
    return %arg1, %c0_i32 : i32, i32
  }
  func.func @transform_12(%arg0: i32, %arg1: i32) -> (i32, i32) {
    %c0_i32 = arith.constant 0 : i32
    %c0_i32_0 = arith.constant 0 : i32
    %c0_i32_1 = arith.constant 0 : i32
    return %c0_i32, %c0_i32_0 : i32, i32
  }
  func.func @transform_13(%arg0: i32, %arg1: i32) -> (i32, i32) {
    %c0_i32 = arith.constant 0 : i32
    %c0_i32_0 = arith.constant 0 : i32
    %c0_i32_1 = arith.constant 0 : i32
    return %c0_i32, %c0_i32_0 : i32, i32
  }
  func.func @transform_14(%arg0: i32, %arg1: i32) -> (i32, i32) {
    %c0_i32 = arith.constant 0 : i32
    %c0_i32_0 = arith.constant 0 : i32
    %c0_i32_1 = arith.constant 0 : i32
    return %c0_i32, %c0_i32_0 : i32, i32
  }
  func.func @transform_15(%arg0: i32, %arg1: i32) -> (i32, i32) {
    %c0_i32 = arith.constant 0 : i32
    %c0_i32_0 = arith.constant 0 : i32
    return %arg0, %c0_i32 : i32, i32
  }
}

</mosaic_0001>

<llo_original>
// kernel: tpu_custom_call.1
$region0: #{tpu_custom_call.1}
  #allocation0 [shape = 'u32[]', space=smem, size = 0x4, offset = 0x4, fixed_abs, tag = 'smem constant byte address 0x4 - core index']
  #allocation1 [shape = 'u32[144,128]{1,0:T(1,128)}', space=vmem, size = 0x12000, scoped, tag = 'internal scratch']
  #allocation2 [shape = 'bf16[8,128]{1,0:T(8,128)(2,1)}', space=vmem, size = 0x800, scoped, tag = 'scratch operand']
  #allocation3 [shape = 'f32[8,128]{1,0:T(8,128)}', space=vmem, size = 0x1000, scoped, tag = 'scratch operand']
  %s0 = inlined_call_operand.hbm [shape: f32[16,128], index: 0, kind: input, shape index: {}]
  %s1 = inlined_call_operand.vmem [shape: f32[1,128], index: 1, kind: input, shape index: {}]
  %s2 = inlined_call_operand.vmem [shape: f32[1,128], index: 2, kind: input, shape index: {}]
  %s3 = inlined_call_operand.vmem [shape: f32[1,128], index: 3, kind: input, shape index: {}]
  %s4 = inlined_call_operand.hbm [shape: f32[1,128], index: 4, kind: input, shape index: {}]
  %s5 = inlined_call_operand.hbm [shape: f32[64,128], index: 5, kind: input, shape index: {}]
  %s6 = inlined_call_operand.hbm [shape: bf16[128,512], index: 6, kind: input, shape index: {}]
  %s7 = inlined_call_operand.vmem [shape: f32[1,512], index: 7, kind: input, shape index: {}]
  %s8 = inlined_call_operand.vmem [shape: f32[1,512], index: 8, kind: input, shape index: {}]
  %s9 = inlined_call_operand.vmem [shape: f32[1,512], index: 9, kind: input, shape index: {}]
  %s10 = inlined_call_operand.hbm [shape: f32[64,512], index: 10, kind: input, shape index: {}]
  %s11 = inlined_call_operand.hbm [shape: bf16[512,128], index: 11, kind: input, shape index: {}]
  %s12 = inlined_call_operand.vmem [shape: f32[1,128], index: 12, kind: input, shape index: {}]
  %s13 = inlined_call_operand.vmem [shape: f32[1,128], index: 13, kind: input, shape index: {}]
  %s14 = inlined_call_operand.vmem [shape: f32[1,128], index: 14, kind: input, shape index: {}]
  %s15 = inlined_call_operand.hbm [shape: f32[16,128], index: 15, kind: output, shape index: {}]
  %s16 = sld [smem:[#allocation0]]
  $region125: #{tpu_custom_call.1} parent=0
    _
  %s18 = ssub.s32 1, %s16
  %s19 = scalar_select 0, %s18, %s16
  $region1: #{tpu_custom_call.1} parent=0
    #allocation4 [shape = 'u8[8192]{0}', space=vmem, size = 0x2000, scoped, tag = 'input window, operand 0']
    #allocation5 [shape = 's32[2]{0}', space=sflag, size = 0x8, scoped, tag = 'scoped memory for tpu_custom_call.1']
    #allocation6 [shape = 's32[2]{0}', space=sflag, size = 0x8, scoped, tag = 'scoped memory for tpu_custom_call.1']
    #allocation7 [shape = 'u8[512]{0}', space=vmem, size = 0x400, scoped, tag = 'input window, operand 4, single buffered']
    #allocation8 [shape = 's32[1]{0}', space=sflag, size = 0x4, scoped, tag = 'scoped memory for tpu_custom_call.1']
    #allocation9 [shape = 'u8[32768]{0}', space=vmem, size = 0x8000, scoped, tag = 'input window, operand 5, single buffered']
    #allocation10 [shape = 'u8[65536]{0}', space=vmem, size = 0x10000, scoped, tag = 'input window, operand 6']
    #allocation11 [shape = 's32[2]{0}', space=sflag, size = 0x8, scoped, tag = 'scoped memory for tpu_custom_call.1']
    #allocation12 [shape = 'u8[65536]{0}', space=vmem, size = 0x10000, scoped, tag = 'input window, operand 10']
    #allocation13 [shape = 'u8[65536]{0}', space=vmem, size = 0x10000, scoped, tag = 'input window, operand 11']
    #allocation14 [shape = 's32[2]{0}', space=sflag, size = 0x8, scoped, tag = 'scoped memory for tpu_custom_call.1']
    #allocation15 [shape = 'u8[8192]{0}', space=vmem, size = 0x2000, scoped, tag = 'output window, operand 0']
    %20 = vsyncpa [#allocation5], 0
    %s21 = scalar_lea.sflag [#allocation5], 1
    %22 = vsyncpa %s21, 0
    %23 = vsyncpa [#allocation8], 0
    %24 = vsyncpa [#allocation11], 0
    %s25 = scalar_lea.sflag [#allocation11], 1
    %26 = vsyncpa %s25, 0
    %27 = vsyncpa [#allocation14], 0
    %s28 = scalar_lea.sflag [#allocation14], 1
    %29 = vsyncpa %s28, 0
    %30 = vsyncpa [#allocation6], 0
    %s31 = scalar_lea.sflag [#allocation6], 1
    %32 = vsyncpa %s31, 0
    loop: start=0, step=1, limit=10
    $region2: #{tpu_custom_call.1} parent=1 // loop_pre_header
      _
    $region3: #{tpu_custom_call.1} parent=1 // loop_header
      %s34 = sphi 0, %s38
      %p35 = scmp.ge.s32.totalorder %s34, 10
      %s41 = sphi 0, %s53
      %s42 = sphi 0, %s49
      %s43 = sphi 0, %s41
      %s44 = sphi 0, %s42
      %s45 = sphi 0, %s43
      %s46 = sphi 0, %s44
      %s56 = sphi 0, %s58
      %s59 = sphi 0, %s56
      %s60 = sphi 0, %s59
      %s76 = sphi 0, %s60
      %s80 = sphi 0, %s80
      %s82 = sphi 0, %s80
      %s83 = sphi 0, %s82
      %s97 = sphi 0, %s83
      %s101 = sphi 0, %s101
      %s103 = sphi 0, %s101
      %s104 = sphi 0, %s103
      %s118 = sphi 0, %s104
      %s122 = sphi 0, %s122
      %s124 = sphi 0, %s122
      %s125 = sphi 0, %s124
      %s139 = sphi 0, %s125
      %s143 = sphi 0, %s143
      %s145 = sphi 0, %s143
      %s146 = sphi 0, %s145
      %s160 = sphi 0, %s146
      %s164 = sphi 0, %s164
      %s166 = sphi 0, %s164
      %s167 = sphi 0, %s166
      %s181 = sphi 0, %s167
      %s187 = sphi 0, %s189
      %s190 = sphi 0, %s187
      %s191 = sphi 0, %s190
      %s207 = sphi 0, %s191
      %s213 = sphi 0, %s215
      %s216 = sphi 0, %s213
      %s217 = sphi 0, %s216
      %s233 = sphi 0, %s217
      %s239 = sphi 0, %s241
      %s242 = sphi 0, %s239
      %s243 = sphi 0, %s242
      %s259 = sphi 0, %s243
      %s265 = sphi 0, %s267
      %s268 = sphi 0, %s265
      %s269 = sphi 0, %s268
      %s285 = sphi 0, %s269
      %s291 = sphi 0, %s293
      %s294 = sphi 0, %s291
      %s295 = sphi 0, %s294
      %s311 = sphi 0, %s295
      %s317 = sphi 0, %s319
      %s320 = sphi 0, %s317
      %s321 = sphi 0, %s320
      %s337 = sphi 0, %s321
      %s341 = sphi 0, %s341
      %s343 = sphi 0, %s341
      %s344 = sphi 0, %s343
      %s358 = sphi 0, %s344
      %s362 = sphi 0, %s362
      %s364 = sphi 0, %s362
      %s365 = sphi 0, %s364
      %s379 = sphi 0, %s365
      %s383 = sphi 0, %s383
      %s385 = sphi 0, %s383
      %s386 = sphi 0, %s385
      %s400 = sphi 0, %s386
      %s406 = sphi 0, %s408
      %s409 = sphi 0, %s406
      %s410 = sphi 0, %s409
      %s426 = sphi 0, %s410
    $region4: #{tpu_custom_call.1} parent=1 // loop_header_branch
      %37 = sbr.rel (%p35) target = $region8
    $region5: #{tpu_custom_call.1} parent=1 // loop_body
      %s39 = ssub.s32 %s34, 1
      %s40 = ssub.s32 %s34, 2
      %s47 = sadd.s32 1, %s42
      %p48 = scmp.ge.s32.totalorder %s47, 4
      %s49 = scalar_select %p48, 0, %s47
      %s50 = sadd.s32 1, %s41
      %s51 = scalar_select %p48, %s50, %s41
      %p52 = scmp.ge.s32.totalorder %s51, 2
      %s53 = scalar_select %p52, 0, %s51
      %s54 = ssub.s32 %s41, %s53
      %p55 = scmp.eq.s32.totalorder %s54, 0
      %s57 = sadd.s32 %s56, 1
      %s58 = scalar_select %p55, %s56, %s57
      %p61 = pneg %p55
      %p62 = scmp.eq.s32.totalorder %s34, 7
      %p63 = por %p61, %p62
      %p64 = scmp.ne.s32.totalorder %s56, %s59
      %p65 = scmp.eq.s32.totalorder %s34, 0
      %p66 = por %p64, %p65
      %p67 = scmp.ne.s32.totalorder %s56, %s59
      %p68 = scmp.eq.s32.totalorder %s39, 7
      %p69 = por %p67, %p68
      %p70 = scmp.ne.s32.totalorder %s59, %s60
      %p71 = scmp.eq.s32.totalorder %s39, 0
      %p72 = por %p70, %p71
      %p73 = scmp.ne.s32.totalorder %s59, %s60
      %p74 = scmp.eq.s32.totalorder %s40, 7
      %p75 = por %p73, %p74
      %p77 = scmp.ne.s32.totalorder %s60, %s76
      %p78 = scmp.eq.s32.totalorder %s40, 0
      %p79 = por %p77, %p78
      %s81 = sadd.s32 %s80, 1
      %p84 = scmp.eq.s32.totalorder %s34, 7
      %p85 = scmp.ne.s32.totalorder %s80, %s82
      %p86 = scmp.eq.s32.totalorder %s34, 0
      %p87 = por %p85, %p86
      %p88 = scmp.ne.s32.totalorder %s80, %s82
      %p89 = scmp.eq.s32.totalorder %s39, 7
      %p90 = por %p88, %p89
      %p91 = scmp.ne.s32.totalorder %s82, %s83
      %p92 = scmp.eq.s32.totalorder %s39, 0
      %p93 = por %p91, %p92
      %p94 = scmp.ne.s32.totalorder %s82, %s83
      %p95 = scmp.eq.s32.totalorder %s40, 7
      %p96 = por %p94, %p95
      %p98 = scmp.ne.s32.totalorder %s83, %s97
      %p99 = scmp.eq.s32.totalorder %s40, 0
      %p100 = por %p98, %p99
      %s102 = sadd.s32 %s101, 1
      %p105 = scmp.eq.s32.totalorder %s34, 7
      %p106 = scmp.ne.s32.totalorder %s101, %s103
      %p107 = scmp.eq.s32.totalorder %s34, 0
      %p108 = por %p106, %p107
      %p109 = scmp.ne.s32.totalorder %s101, %s103
      %p110 = scmp.eq.s32.totalorder %s39, 7
      %p111 = por %p109, %p110
      %p112 = scmp.ne.s32.totalorder %s103, %s104
      %p113 = scmp.eq.s32.totalorder %s39, 0
      %p114 = por %p112, %p113
      %p115 = scmp.ne.s32.totalorder %s103, %s104
      %p116 = scmp.eq.s32.totalorder %s40, 7
      %p117 = por %p115, %p116
      %p119 = scmp.ne.s32.totalorder %s104, %s118
      %p120 = scmp.eq.s32.totalorder %s40, 0
      %p121 = por %p119, %p120
      %s123 = sadd.s32 %s122, 1
      %p126 = scmp.eq.s32.totalorder %s34, 7
      %p127 = scmp.ne.s32.totalorder %s122, %s124
      %p128 = scmp.eq.s32.totalorder %s34, 0
      %p129 = por %p127, %p128
      %p130 = scmp.ne.s32.totalorder %s122, %s124
      %p131 = scmp.eq.s32.totalorder %s39, 7
      %p132 = por %p130, %p131
      %p133 = scmp.ne.s32.totalorder %s124, %s125
      %p134 = scmp.eq.s32.totalorder %s39, 0
      %p135 = por %p133, %p134
      %p136 = scmp.ne.s32.totalorder %s124, %s125
      %p137 = scmp.eq.s32.totalorder %s40, 7
      %p138 = por %p136, %p137
      %p140 = scmp.ne.s32.totalorder %s125, %s139
      %p141 = scmp.eq.s32.totalorder %s40, 0
      %p142 = por %p140, %p141
      %s144 = sadd.s32 %s143, 1
      %p147 = scmp.eq.s32.totalorder %s34, 7
      %p148 = scmp.ne.s32.totalorder %s143, %s145
      %p149 = scmp.eq.s32.totalorder %s34, 0
      %p150 = por %p148, %p149
      %p151 = scmp.ne.s32.totalorder %s143, %s145
      %p152 = scmp.eq.s32.totalorder %s39, 7
      %p153 = por %p151, %p152
      %p154 = scmp.ne.s32.totalorder %s145, %s146
      %p155 = scmp.eq.s32.totalorder %s39, 0
      %p156 = por %p154, %p155
      %p157 = scmp.ne.s32.totalorder %s145, %s146
      %p158 = scmp.eq.s32.totalorder %s40, 7
      %p159 = por %p157, %p158
      %p161 = scmp.ne.s32.totalorder %s146, %s160
      %p162 = scmp.eq.s32.totalorder %s40, 0
      %p163 = por %p161, %p162
      %s165 = sadd.s32 %s164, 1
      %p168 = scmp.eq.s32.totalorder %s34, 7
      %p169 = scmp.ne.s32.totalorder %s164, %s166
      %p170 = scmp.eq.s32.totalorder %s34, 0
      %p171 = por %p169, %p170
      %p172 = scmp.ne.s32.totalorder %s164, %s166
      %p173 = scmp.eq.s32.totalorder %s39, 7
      %p174 = por %p172, %p173
      %p175 = scmp.ne.s32.totalorder %s166, %s167
      %p176 = scmp.eq.s32.totalorder %s39, 0
      %p177 = por %p175, %p176
      %p178 = scmp.ne.s32.totalorder %s166, %s167
      %p179 = scmp.eq.s32.totalorder %s40, 7
      %p180 = por %p178, %p179
      %p182 = scmp.ne.s32.totalorder %s167, %s181
      %p183 = scmp.eq.s32.totalorder %s40, 0
      %p184 = por %p182, %p183
      %s185 = ssub.s32 %s42, %s49
      %p186 = scmp.eq.s32.totalorder %s185, 0
      %s188 = sadd.s32 %s187, 1
      %s189 = scalar_select %p186, %s187, %s188
      %p192 = pneg %p186
      %p193 = scmp.eq.s32.totalorder %s34, 7
      %p194 = por %p192, %p193
      %p195 = scmp.ne.s32.totalorder %s187, %s190
      %p196 = scmp.eq.s32.totalorder %s34, 0
      %p197 = por %p195, %p196
      %p198 = scmp.ne.s32.totalorder %s187, %s190
      %p199 = scmp.eq.s32.totalorder %s39, 7
      %p200 = por %p198, %p199
      %p201 = scmp.ne.s32.totalorder %s190, %s191
      %p202 = scmp.eq.s32.totalorder %s39, 0
      %p203 = por %p201, %p202
      %p204 = scmp.ne.s32.totalorder %s190, %s191
      %p205 = scmp.eq.s32.totalorder %s40, 7
      %p206 = por %p204, %p205
      %p208 = scmp.ne.s32.totalorder %s191, %s207
      %p209 = scmp.eq.s32.totalorder %s40, 0
      %p210 = por %p208, %p209
      %s211 = ssub.s32 %s42, %s49
      %p212 = scmp.eq.s32.totalorder %s211, 0
      %s214 = sadd.s32 %s213, 1
      %s215 = scalar_select %p212, %s213, %s214
      %p218 = pneg %p212
      %p219 = scmp.eq.s32.totalorder %s34, 7
      %p220 = por %p218, %p219
      %p221 = scmp.ne.s32.totalorder %s213, %s216
      %p222 = scmp.eq.s32.totalorder %s34, 0
      %p223 = por %p221, %p222
      %p224 = scmp.ne.s32.totalorder %s213, %s216
      %p225 = scmp.eq.s32.totalorder %s39, 7
      %p226 = por %p224, %p225
      %p227 = scmp.ne.s32.totalorder %s216, %s217
      %p228 = scmp.eq.s32.totalorder %s39, 0
      %p229 = por %p227, %p228
      %p230 = scmp.ne.s32.totalorder %s216, %s217
      %p231 = scmp.eq.s32.totalorder %s40, 7
      %p232 = por %p230, %p231
      %p234 = scmp.ne.s32.totalorder %s217, %s233
      %p235 = scmp.eq.s32.totalorder %s40, 0
      %p236 = por %p234, %p235
      %s237 = ssub.s32 %s42, %s49
      %p238 = scmp.eq.s32.totalorder %s237, 0
      %s240 = sadd.s32 %s239, 1
      %s241 = scalar_select %p238, %s239, %s240
      %p244 = pneg %p238
      %p245 = scmp.eq.s32.totalorder %s34, 7
      %p246 = por %p244, %p245
      %p247 = scmp.ne.s32.totalorder %s239, %s242
      %p248 = scmp.eq.s32.totalorder %s34, 0
      %p249 = por %p247, %p248
      %p250 = scmp.ne.s32.totalorder %s239, %s242
      %p251 = scmp.eq.s32.totalorder %s39, 7
      %p252 = por %p250, %p251
      %p253 = scmp.ne.s32.totalorder %s242, %s243
      %p254 = scmp.eq.s32.totalorder %s39, 0
      %p255 = por %p253, %p254
      %p256 = scmp.ne.s32.totalorder %s242, %s243
      %p257 = scmp.eq.s32.totalorder %s40, 7
      %p258 = por %p256, %p257
      %p260 = scmp.ne.s32.totalorder %s243, %s259
      %p261 = scmp.eq.s32.totalorder %s40, 0
      %p262 = por %p260, %p261
      %s263 = ssub.s32 %s42, %s49
      %p264 = scmp.eq.s32.totalorder %s263, 0
      %s266 = sadd.s32 %s265, 1
      %s267 = scalar_select %p264, %s265, %s266
      %p270 = pneg %p264
      %p271 = scmp.eq.s32.totalorder %s34, 7
      %p272 = por %p270, %p271
      %p273 = scmp.ne.s32.totalorder %s265, %s268
      %p274 = scmp.eq.s32.totalorder %s34, 0
      %p275 = por %p273, %p274
      %p276 = scmp.ne.s32.totalorder %s265, %s268
      %p277 = scmp.eq.s32.totalorder %s39, 7
      %p278 = por %p276, %p277
      %p279 = scmp.ne.s32.totalorder %s268, %s269
      %p280 = scmp.eq.s32.totalorder %s39, 0
      %p281 = por %p279, %p280
      %p282 = scmp.ne.s32.totalorder %s268, %s269
      %p283 = scmp.eq.s32.totalorder %s40, 7
      %p284 = por %p282, %p283
      %p286 = scmp.ne.s32.totalorder %s269, %s285
      %p287 = scmp.eq.s32.totalorder %s40, 0
      %p288 = por %p286, %p287
      %s289 = ssub.s32 %s42, %s49
      %p290 = scmp.eq.s32.totalorder %s289, 0
      %s292 = sadd.s32 %s291, 1
      %s293 = scalar_select %p290, %s291, %s292
      %p296 = pneg %p290
      %p297 = scmp.eq.s32.totalorder %s34, 7
      %p298 = por %p296, %p297
      %p299 = scmp.ne.s32.totalorder %s291, %s294
      %p300 = scmp.eq.s32.totalorder %s34, 0
      %p301 = por %p299, %p300
      %p302 = scmp.ne.s32.totalorder %s291, %s294
      %p303 = scmp.eq.s32.totalorder %s39, 7
      %p304 = por %p302, %p303
      %p305 = scmp.ne.s32.totalorder %s294, %s295
      %p306 = scmp.eq.s32.totalorder %s39, 0
      %p307 = por %p305, %p306
      %p308 = scmp.ne.s32.totalorder %s294, %s295
      %p309 = scmp.eq.s32.totalorder %s40, 7
      %p310 = por %p308, %p309
      %p312 = scmp.ne.s32.totalorder %s295, %s311
      %p313 = scmp.eq.s32.totalorder %s40, 0
      %p314 = por %p312, %p313
      %s315 = ssub.s32 %s42, %s49
      %p316 = scmp.eq.s32.totalorder %s315, 0
      %s318 = sadd.s32 %s317, 1
      %s319 = scalar_select %p316, %s317, %s318
      %p322 = pneg %p316
      %p323 = scmp.eq.s32.totalorder %s34, 7
      %p324 = por %p322, %p323
      %p325 = scmp.ne.s32.totalorder %s317, %s320
      %p326 = scmp.eq.s32.totalorder %s34, 0
      %p327 = por %p325, %p326
      %p328 = scmp.ne.s32.totalorder %s317, %s320
      %p329 = scmp.eq.s32.totalorder %s39, 7
      %p330 = por %p328, %p329
      %p331 = scmp.ne.s32.totalorder %s320, %s321
      %p332 = scmp.eq.s32.totalorder %s39, 0
      %p333 = por %p331, %p332
      %p334 = scmp.ne.s32.totalorder %s320, %s321
      %p335 = scmp.eq.s32.totalorder %s40, 7
      %p336 = por %p334, %p335
      %p338 = scmp.ne.s32.totalorder %s321, %s337
      %p339 = scmp.eq.s32.totalorder %s40, 0
      %p340 = por %p338, %p339
      %s342 = sadd.s32 %s341, 1
      %p345 = scmp.eq.s32.totalorder %s34, 7
      %p346 = scmp.ne.s32.totalorder %s341, %s343
      %p347 = scmp.eq.s32.totalorder %s34, 0
      %p348 = por %p346, %p347
      %p349 = scmp.ne.s32.totalorder %s341, %s343
      %p350 = scmp.eq.s32.totalorder %s39, 7
      %p351 = por %p349, %p350
      %p352 = scmp.ne.s32.totalorder %s343, %s344
      %p353 = scmp.eq.s32.totalorder %s39, 0
      %p354 = por %p352, %p353
      %p355 = scmp.ne.s32.totalorder %s343, %s344
      %p356 = scmp.eq.s32.totalorder %s40, 7
      %p357 = por %p355, %p356
      %p359 = scmp.ne.s32.totalorder %s344, %s358
      %p360 = scmp.eq.s32.totalorder %s40, 0
      %p361 = por %p359, %p360
      %s363 = sadd.s32 %s362, 1
      %p366 = scmp.eq.s32.totalorder %s34, 7
      %p367 = scmp.ne.s32.totalorder %s362, %s364
      %p368 = scmp.eq.s32.totalorder %s34, 0
      %p369 = por %p367, %p368
      %p370 = scmp.ne.s32.totalorder %s362, %s364
      %p371 = scmp.eq.s32.totalorder %s39, 7
      %p372 = por %p370, %p371
      %p373 = scmp.ne.s32.totalorder %s364, %s365
      %p374 = scmp.eq.s32.totalorder %s39, 0
      %p375 = por %p373, %p374
      %p376 = scmp.ne.s32.totalorder %s364, %s365
      %p377 = scmp.eq.s32.totalorder %s40, 7
      %p378 = por %p376, %p377
      %p380 = scmp.ne.s32.totalorder %s365, %s379
      %p381 = scmp.eq.s32.totalorder %s40, 0
      %p382 = por %p380, %p381
      %s384 = sadd.s32 %s383, 1
      %p387 = scmp.eq.s32.totalorder %s34, 7
      %p388 = scmp.ne.s32.totalorder %s383, %s385
      %p389 = scmp.eq.s32.totalorder %s34, 0
      %p390 = por %p388, %p389
      %p391 = scmp.ne.s32.totalorder %s383, %s385
      %p392 = scmp.eq.s32.totalorder %s39, 7
      %p393 = por %p391, %p392
      %p394 = scmp.ne.s32.totalorder %s385, %s386
      %p395 = scmp.eq.s32.totalorder %s39, 0
      %p396 = por %p394, %p395
      %p397 = scmp.ne.s32.totalorder %s385, %s386
      %p398 = scmp.eq.s32.totalorder %s40, 7
      %p399 = por %p397, %p398
      %p401 = scmp.ne.s32.totalorder %s386, %s400
      %p402 = scmp.eq.s32.totalorder %s40, 0
      %p403 = por %p401, %p402
      %s404 = ssub.s32 %s41, %s53
      %p405 = scmp.eq.s32.totalorder %s404, 0
      %s407 = sadd.s32 %s406, 1
      %s408 = scalar_select %p405, %s406, %s407
      %p411 = pneg %p405
      %p412 = scmp.eq.s32.totalorder %s34, 7
      %p413 = por %p411, %p412
      %p414 = scmp.ne.s32.totalorder %s406, %s409
      %p415 = scmp.eq.s32.totalorder %s34, 0
      %p416 = por %p414, %p415
      %p417 = scmp.ne.s32.totalorder %s406, %s409
      %p418 = scmp.eq.s32.totalorder %s39, 7
      %p419 = por %p417, %p418
      %p420 = scmp.ne.s32.totalorder %s409, %s410
      %p421 = scmp.eq.s32.totalorder %s39, 0
      %p422 = por %p420, %p421
      %p423 = scmp.ne.s32.totalorder %s409, %s410
      %p424 = scmp.eq.s32.totalorder %s40, 7
      %p425 = por %p423, %p424
      %p427 = scmp.ne.s32.totalorder %s410, %s426
      %p428 = scmp.eq.s32.totalorder %s40, 0
      %p429 = por %p427, %p428
      %p430 = scmp.le.s32.totalorder 1, %s34
      %p431 = scmp.lt.s32.totalorder %s34, 9
      %p432 = pnand %p430, %p431
      %p433 = pneg %p432
      // Predicated region
      $region9: #{tpu_custom_call.1} parent=5 // pred_check
        _
      $region10: #{tpu_custom_call.1} parent=5 // pred_check_branch
        %435 = sbr.rel (%p432) target = $region12
      $region11: #{tpu_custom_call.1} parent=5 // pred_region
        %s436 = ssub.s32 %s34, 1
        // Predicated region
        $region13: #{tpu_custom_call.1} parent=11 // pred_check
          %p437 = pneg %p93
        $region14: #{tpu_custom_call.1} parent=11 // pred_check_branch
          %439 = sbr.rel (%p437) target = $region16
        $region15: #{tpu_custom_call.1} parent=11 // pred_region
          _
        $region16: #{tpu_custom_call.1} parent=11 // pred_fallthru
          _
        // Predicated region
        $region17: #{tpu_custom_call.1} parent=11 // pred_check
          %p440 = pneg %p114
        $region18: #{tpu_custom_call.1} parent=11 // pred_check_branch
          %442 = sbr.rel (%p440) target = $region20
        $region19: #{tpu_custom_call.1} parent=11 // pred_region
          _
        $region20: #{tpu_custom_call.1} parent=11 // pred_fallthru
          _
        // Predicated region
        $region21: #{tpu_custom_call.1} parent=11 // pred_check
          %p443 = pneg %p135
        $region22: #{tpu_custom_call.1} parent=11 // pred_check_branch
          %445 = sbr.rel (%p443) target = $region24
        $region23: #{tpu_custom_call.1} parent=11 // pred_region
          _
        $region24: #{tpu_custom_call.1} parent=11 // pred_fallthru
          _
        // Predicated region
        $region25: #{tpu_custom_call.1} parent=11 // pred_check
          %p446 = pneg %p156
        $region26: #{tpu_custom_call.1} parent=11 // pred_check_branch
          %448 = sbr.rel (%p446) target = $region28
        $region27: #{tpu_custom_call.1} parent=11 // pred_region
          %s450 = ssub.s32 16, 16
          %451 = vsyncadd [#allocation8], %s450
          %s453 = sshll.u32 [#allocation7], 4
          %s454 = int_to_ptr.vmem [resolvable:$true] %s453
          %456 = dma.hbm_to_vmem [thread:$0]  %s4, 16, %s454, [#allocation8]
        $region28: #{tpu_custom_call.1} parent=11 // pred_fallthru
          _
        // Predicated region
        $region29: #{tpu_custom_call.1} parent=11 // pred_check
          %p457 = pneg %p177
        $region30: #{tpu_custom_call.1} parent=11 // pred_check_branch
          %459 = sbr.rel (%p457) target = $region32
        $region31: #{tpu_custom_call.1} parent=11 // pred_region
          %s461 = ssub.s32 1024, 1024
          %462 = vsyncadd [#allocation8], %s461
          %s463 = sshll.u32 [#allocation9], 4
          %s464 = int_to_ptr.vmem [resolvable:$true] %s463
          %469 = dma.hbm_to_vmem [thread:$0]  %s5, 1024, %s464, [#allocation8], 128, 128, 8
        $region32: #{tpu_custom_call.1} parent=11 // pred_fallthru
          _
        // Predicated region
        $region33: #{tpu_custom_call.1} parent=11 // pred_check
          %p470 = pneg %p354
        $region34: #{tpu_custom_call.1} parent=11 // pred_check_branch
          %472 = sbr.rel (%p470) target = $region36
        $region35: #{tpu_custom_call.1} parent=11 // pred_region
          _
        $region36: #{tpu_custom_call.1} parent=11 // pred_fallthru
          _
        // Predicated region
        $region37: #{tpu_custom_call.1} parent=11 // pred_check
          %p473 = pneg %p375
        $region38: #{tpu_custom_call.1} parent=11 // pred_check_branch
          %475 = sbr.rel (%p473) target = $region40
        $region39: #{tpu_custom_call.1} parent=11 // pred_region
          _
        $region40: #{tpu_custom_call.1} parent=11 // pred_fallthru
          _
        // Predicated region
        $region41: #{tpu_custom_call.1} parent=11 // pred_check
          %p476 = pneg %p396
        $region42: #{tpu_custom_call.1} parent=11 // pred_check_branch
          %478 = sbr.rel (%p476) target = $region44
        $region43: #{tpu_custom_call.1} parent=11 // pred_region
          _
        $region44: #{tpu_custom_call.1} parent=11 // pred_fallthru
          _
      $region12: #{tpu_custom_call.1} parent=5 // pred_fallthru
        _
      %p479 = scmp.lt.s32.totalorder %s34, 8
      // Predicated region
      $region45: #{tpu_custom_call.1} parent=5 // pred_check
        %p480 = pneg %p479
      $region46: #{tpu_custom_call.1} parent=5 // pred_check_branch
        %482 = sbr.rel (%p480) target = $region48
      $region47: #{tpu_custom_call.1} parent=5 // pred_region
        // Predicated region
        $region49: #{tpu_custom_call.1} parent=47 // pred_check
          %p483 = pneg %p66
        $region50: #{tpu_custom_call.1} parent=47 // pred_check_branch
          %485 = sbr.rel (%p483) target = $region52
        $region51: #{tpu_custom_call.1} parent=47 // pred_region
          %s486 = sand.u32 %s56, 1
          %s487 = scalar_lea.sflag [#allocation5], %s486
          %s488 = sand.u32 %s56, 1
          %s489 = smul.addr %s488, 8
          %s490 = scalar_lea.vmem [#allocation4], %s489
          %s492 = ssub.s32 128, 128
          %493 = vsyncadd %s487, %s492
          %s494 = smul.addr %s41, 128
          %s495 = scalar_lea.hbm %s0, %s494
          %s497 = sshll.u32 %s490, 4
          %s498 = int_to_ptr.vmem [resolvable:$true] %s497
          %500 = dma.hbm_to_vmem [thread:$0]  %s495, 128, %s498, %s487
        $region52: #{tpu_custom_call.1} parent=47 // pred_fallthru
          _
        // Predicated region
        $region53: #{tpu_custom_call.1} parent=47 // pred_check
          %p501 = pneg %p197
        $region54: #{tpu_custom_call.1} parent=47 // pred_check_branch
          %503 = sbr.rel (%p501) target = $region56
        $region55: #{tpu_custom_call.1} parent=47 // pred_region
          %s504 = sand.u32 %s34, 1
          %s505 = scalar_lea.sflag [#allocation11], %s504
          %s506 = sand.u32 %s187, 1
          %s507 = smul.addr %s506, 64
          %s508 = scalar_lea.vmem [#allocation10], %s507
          %s510 = ssub.s32 1024, 1024
          %511 = vsyncadd %s505, %s510
          %s512 = smul.addr %s42, 64
          %s513 = scalar_lea.hbm %s6, %s512
          %s514 = sshll.u32 %s508, 4
          %s515 = int_to_ptr.vmem [resolvable:$true] %s514
          %520 = dma.hbm_to_vmem [thread:$0]  %s513, 1024, %s515, %s505, 256, 64, 4
        $region56: #{tpu_custom_call.1} parent=47 // pred_fallthru
          _
        // Predicated region
        $region57: #{tpu_custom_call.1} parent=47 // pred_check
          %p521 = pneg %p223
        $region58: #{tpu_custom_call.1} parent=47 // pred_check_branch
          %523 = sbr.rel (%p521) target = $region60
        $region59: #{tpu_custom_call.1} parent=47 // pred_region
          %p524 = scmp.lt.s32.totalorder %s42, 3
          %s525 = scalar_select %p524, %s42, 3
          %s526 = scalar_lea.vmem %s7, %s525
        $region60: #{tpu_custom_call.1} parent=47 // pred_fallthru
          _
        // Predicated region
        $region61: #{tpu_custom_call.1} parent=47 // pred_check
          %p527 = pneg %p249
        $region62: #{tpu_custom_call.1} parent=47 // pred_check_branch
          %529 = sbr.rel (%p527) target = $region64
        $region63: #{tpu_custom_call.1} parent=47 // pred_region
          %p530 = scmp.lt.s32.totalorder %s42, 3
          %s531 = scalar_select %p530, %s42, 3
          %s532 = scalar_lea.vmem %s8, %s531
        $region64: #{tpu_custom_call.1} parent=47 // pred_fallthru
          _
        // Predicated region
        $region65: #{tpu_custom_call.1} parent=47 // pred_check
          %p533 = pneg %p275
        $region66: #{tpu_custom_call.1} parent=47 // pred_check_branch
          %535 = sbr.rel (%p533) target = $region68
        $region67: #{tpu_custom_call.1} parent=47 // pred_region
          %p536 = scmp.lt.s32.totalorder %s42, 3
          %s537 = scalar_select %p536, %s42, 3
          %s538 = scalar_lea.vmem %s9, %s537
        $region68: #{tpu_custom_call.1} parent=47 // pred_fallthru
          _
        // Predicated region
        $region69: #{tpu_custom_call.1} parent=47 // pred_check
          %p539 = pneg %p301
        $region70: #{tpu_custom_call.1} parent=47 // pred_check_branch
          %541 = sbr.rel (%p539) target = $region72
        $region71: #{tpu_custom_call.1} parent=47 // pred_region
          %s542 = sand.u32 %s34, 1
          %s543 = scalar_lea.sflag [#allocation11], %s542
          %s544 = sand.u32 %s291, 1
          %s545 = smul.addr %s544, 64
          %s546 = scalar_lea.vmem [#allocation12], %s545
          %s548 = ssub.s32 1024, 1024
          %549 = vsyncadd %s543, %s548
          %s550 = smul.addr %s42, 128
          %s551 = scalar_lea.hbm %s10, %s550
          %s552 = sshll.u32 %s546, 4
          %s553 = int_to_ptr.vmem [resolvable:$true] %s552
          %558 = dma.hbm_to_vmem [thread:$0]  %s551, 1024, %s553, %s543, 512, 128, 8
        $region72: #{tpu_custom_call.1} parent=47 // pred_fallthru
          _
        // Predicated region
        $region73: #{tpu_custom_call.1} parent=47 // pred_check
          %p559 = pneg %p327
        $region74: #{tpu_custom_call.1} parent=47 // pred_check_branch
          %561 = sbr.rel (%p559) target = $region76
        $region75: #{tpu_custom_call.1} parent=47 // pred_region
          %s562 = sand.u32 %s317, 1
          %s563 = scalar_lea.sflag [#allocation14], %s562
          %s564 = sand.u32 %s317, 1
          %s565 = smul.addr %s564, 64
          %s566 = scalar_lea.vmem [#allocation13], %s565
          %s567 = smul.u32 16, %s42
          %s569 = ssub.s32 1024, 1024
          %570 = vsyncadd %s563, %s569
          %s571 = smul.addr %s567, 64
          %s572 = scalar_lea.hbm %s11, %s571
          %s573 = sshll.u32 %s566, 4
          %s574 = int_to_ptr.vmem [resolvable:$true] %s573
          %579 = dma.hbm_to_vmem [thread:$0]  %s572, 1024, %s574, %s563, 64, 64, 4
        $region76: #{tpu_custom_call.1} parent=47 // pred_fallthru
          _
      $region48: #{tpu_custom_call.1} parent=5 // pred_fallthru
        _
      %p580 = scmp.le.s32.totalorder 1, %s34
      %p581 = scmp.lt.s32.totalorder %s34, 9
      %p582 = pnand %p580, %p581
      %p583 = pneg %p582
      // Predicated region
      $region77: #{tpu_custom_call.1} parent=5 // pred_check
        _
      $region78: #{tpu_custom_call.1} parent=5 // pred_check_branch
        %585 = sbr.rel (%p582) target = $region80
      $region79: #{tpu_custom_call.1} parent=5 // pred_region
        %s586 = ssub.s32 %s34, 1
        %s587 = sand.u32 %s59, 1
        %s588 = scalar_lea.sflag [#allocation5], %s587
        %s589 = sand.u32 %s59, 1
        %s590 = smul.addr %s589, 8
        %s591 = scalar_lea.vmem [#allocation4], %s590
        // Predicated region
        $region81: #{tpu_custom_call.1} parent=79 // pred_check
          %p592 = pneg %p72
        $region82: #{tpu_custom_call.1} parent=79 // pred_check_branch
          %594 = sbr.rel (%p592) target = $region84
        $region83: #{tpu_custom_call.1} parent=79 // pred_region
          %595 = dma.done %s588, 128
        $region84: #{tpu_custom_call.1} parent=79 // pred_fallthru
          _
        // Predicated region
        $region85: #{tpu_custom_call.1} parent=79 // pred_check
          %p596 = pneg %p156
        $region86: #{tpu_custom_call.1} parent=79 // pred_check_branch
          %598 = sbr.rel (%p596) target = $region88
        $region87: #{tpu_custom_call.1} parent=79 // pred_region
          %599 = dma.done [#allocation8], 16
        $region88: #{tpu_custom_call.1} parent=79 // pred_fallthru
          _
        // Predicated region
        $region89: #{tpu_custom_call.1} parent=79 // pred_check
          %p600 = pneg %p177
        $region90: #{tpu_custom_call.1} parent=79 // pred_check_branch
          %602 = sbr.rel (%p600) target = $region92
        $region91: #{tpu_custom_call.1} parent=79 // pred_region
          %603 = dma.done [#allocation8], 1024
        $region92: #{tpu_custom_call.1} parent=79 // pred_fallthru
          _
        %s604 = sand.u32 %s39, 1
        %s605 = scalar_lea.sflag [#allocation11], %s604
        %s606 = sand.u32 %s190, 1
        %s607 = smul.addr %s606, 64
        %s608 = scalar_lea.vmem [#allocation10], %s607
        // Predicated region
        $region93: #{tpu_custom_call.1} parent=79 // pred_check
          %p609 = pneg %p203
        $region94: #{tpu_custom_call.1} parent=79 // pred_check_branch
          %611 = sbr.rel (%p609) target = $region96
        $region95: #{tpu_custom_call.1} parent=79 // pred_region
          %612 = dma.done %s605, 1024
        $region96: #{tpu_custom_call.1} parent=79 // pred_fallthru
          _
        %s613 = sand.u32 %s39, 1
        %s614 = scalar_lea.sflag [#allocation11], %s613
        %s615 = sand.u32 %s294, 1
        %s616 = smul.addr %s615, 64
        %s617 = scalar_lea.vmem [#allocation12], %s616
        // Predicated region
        $region97: #{tpu_custom_call.1} parent=79 // pred_check
          %p618 = pneg %p307
        $region98: #{tpu_custom_call.1} parent=79 // pred_check_branch
          %620 = sbr.rel (%p618) target = $region100
        $region99: #{tpu_custom_call.1} parent=79 // pred_region
          %621 = dma.done %s614, 1024
        $region100: #{tpu_custom_call.1} parent=79 // pred_fallthru
          _
        %s622 = sand.u32 %s320, 1
        %s623 = scalar_lea.sflag [#allocation14], %s622
        %s624 = sand.u32 %s320, 1
        %s625 = smul.addr %s624, 64
        %s626 = scalar_lea.vmem [#allocation13], %s625
        // Predicated region
        $region101: #{tpu_custom_call.1} parent=79 // pred_check
          %p627 = pneg %p333
        $region102: #{tpu_custom_call.1} parent=79 // pred_check_branch
          %629 = sbr.rel (%p627) target = $region104
        $region103: #{tpu_custom_call.1} parent=79 // pred_region
          %630 = dma.done %s623, 1024
        $region104: #{tpu_custom_call.1} parent=79 // pred_fallthru
          _
        %s631 = sand.u32 %s59, 1
        %s632 = scalar_lea.sflag [#allocation5], %s631
        %s633 = sand.u32 %s59, 1
        %s634 = smul.addr %s633, 8
        %s635 = scalar_lea.vmem [#allocation4], %s634
        %p636 = pneg %p72
        %p637 = pneg %p69
        %p638 = pneg %p93
        %p639 = pneg %p90
        %p640 = pneg %p114
        %p641 = pneg %p111
        %p642 = pneg %p135
        %p643 = pneg %p132
        %p644 = pneg %p156
        %p645 = pneg %p153
        %p646 = pneg %p177
        %p647 = pneg %p174
        %s648 = sand.u32 %s39, 1
        %s649 = scalar_lea.sflag [#allocation11], %s648
        %s650 = sand.u32 %s190, 1
        %s651 = smul.addr %s650, 64
        %s652 = scalar_lea.vmem [#allocation10], %s651
        %p653 = pneg %p203
        %p654 = pneg %p200
        %p655 = scmp.lt.s32.totalorder %s44, 3
        %s656 = scalar_select %p655, %s44, 3
        %s657 = scalar_lea.vmem %s7, %s656
        %p658 = pneg %p229
        %p659 = pneg %p226
        %p660 = scmp.lt.s32.totalorder %s44, 3
        %s661 = scalar_select %p660, %s44, 3
        %s662 = scalar_lea.vmem %s8, %s661
        %p663 = pneg %p255
        %p664 = pneg %p252
        %p665 = scmp.lt.s32.totalorder %s44, 3
        %s666 = scalar_select %p665, %s44, 3
        %s667 = scalar_lea.vmem %s9, %s666
        %p668 = pneg %p281
        %p669 = pneg %p278
        %s670 = sand.u32 %s39, 1
        %s671 = scalar_lea.sflag [#allocation11], %s670
        %s672 = sand.u32 %s294, 1
        %s673 = smul.addr %s672, 64
        %s674 = scalar_lea.vmem [#allocation12], %s673
        %p675 = pneg %p307
        %p676 = pneg %p304
        %s677 = sand.u32 %s320, 1
        %s678 = scalar_lea.sflag [#allocation14], %s677
        %s679 = sand.u32 %s320, 1
        %s680 = smul.addr %s679, 64
        %s681 = scalar_lea.vmem [#allocation13], %s680
        %p682 = pneg %p333
        %p683 = pneg %p330
        %p684 = pneg %p354
        %p685 = pneg %p351
        %p686 = pneg %p375
        %p687 = pneg %p372
        %p688 = pneg %p396
        %p689 = pneg %p393
        %p690 = pneg %p422
        %p691 = pneg %p419
        %s692 = sand.u32 %s409, 1
        %s693 = scalar_lea.sflag [#allocation6], %s692
        %s694 = sand.u32 %s409, 1
        %s695 = smul.addr %s694, 8
        %s696 = scalar_lea.vmem [#allocation15], %s695
        %p697 = scmp.lt.s32.totalorder %s44, 3
        %s698 = scalar_select %p697, %s44, 3
        %s699 = scalar_lea.vmem %s7, %s698
        %p700 = scmp.lt.s32.totalorder %s44, 3
        %s701 = scalar_select %p700, %s44, 3
        %s702 = scalar_lea.vmem %s8, %s701
        %p703 = scmp.lt.s32.totalorder %s44, 3
        %s704 = scalar_select %p703, %s44, 3
        %s705 = scalar_lea.vmem %s9, %s704
        %s706 = smul.u32 16, %s44
        %p708 = scmp.eq.s32.totalorder %s44, 0
        // Predicated region
        $region105: #{tpu_custom_call.1} parent=79 // pred_check
          %p709 = pneg %p708
        $region106: #{tpu_custom_call.1} parent=79 // pred_check_branch
          %711 = sbr.rel (%p709) target = $region108
        $region107: #{tpu_custom_call.1} parent=79 // pred_region
          %v712 = vld [vmem:[%s591] sm:$0xff]
          %v713 = vld [vmem:[%s1] sm:$0x1]
          %v715 = vlaneseq
          %v716 = vshrl.u32 %v715, 7
          %v717 = vsub.s32 0, %v716
          %v718 = vrot.slane %v713, %v717
          %v720 = vmul.f32 %v712, %v718
          %v721 = vld [vmem:[%s2] sm:$0x1]
          %v723 = vlaneseq
          %v724 = vshrl.u32 %v723, 7
          %v725 = vsub.s32 0, %v724
          %v726 = vrot.slane %v721, %v725
          %v728 = vadd.f32 %v720, %v726
          %v729 = vld [vmem:[%s3] sm:$0x1]
          %v730 = vld [vmem:[#allocation7] sm:$0x1]
          %v731 = vadd.f32 %v728, 4.0
          %v732 = vmul.f32 %v731, 7.875
          %v733 = vmax.f32 %v732, 0.0
          %v734 = vmin.f32 %v733, 63.0
          %v736 = vlaneseq
          %v737 = vshrl.u32 %v736, 7
          %v738 = vsub.s32 0, %v737
          %v739 = vrot.slane %v730, %v738
          %v741 = vmul.f32 %v739, %v734
          %v743 = vlaneseq
          %v744 = vshrl.u32 %v743, 7
          %v745 = vsub.s32 0, %v744
          %v746 = vrot.slane %v729, %v745
          %v748 = vadd.f32 %v746, %v741
          %v749 = vadd.f32 %v748, %v728
          %v750 = vld [vmem:[#allocation9] sm:$0xff]
          %v751 = vsub.f32 %v734, 1.0
          %v752 = vmax.f32 %v751, 0.0
          %v753 = vlaneseq
          %v754 = vshrl.u32 %v753, 7
          %v755 = vsub.s32 0, %v754
          %v756 = vrot.slane %v750, %v755
          %v757 = vmul.f32 %v756, %v752
          %v758 = vsub.f32 %v734, 2.0
          %v759 = vmax.f32 %v758, 0.0
          %v760 = vlaneseq
          %v761 = vshrl.u32 %v760, 7
          %v762 = vsub.s32 1, %v761
          %v763 = vrot.slane %v750, %v762
          %v764 = vmul.f32 %v763, %v759
          %v765 = vadd.f32 %v757, %v764
          %v766 = vsub.f32 %v734, 3.0
          %v767 = vmax.f32 %v766, 0.0
          %v768 = vlaneseq
          %v769 = vshrl.u32 %v768, 7
          %v770 = vsub.s32 2, %v769
          %v771 = vrot.slane %v750, %v770
          %v772 = vmul.f32 %v771, %v767
          %v773 = vadd.f32 %v765, %v772
          %v774 = vsub.f32 %v734, 4.0
          %v775 = vmax.f32 %v774, 0.0
          %v776 = vlaneseq
          %v777 = vshrl.u32 %v776, 7
          %v778 = vsub.s32 3, %v777
          %v779 = vrot.slane %v750, %v778
          %v780 = vmul.f32 %v779, %v775
          %v781 = vadd.f32 %v773, %v780
          %v782 = vsub.f32 %v734, 5.0
          %v783 = vmax.f32 %v782, 0.0
          %v784 = vlaneseq
          %v785 = vshrl.u32 %v784, 7
          %v786 = vsub.s32 4, %v785
          %v787 = vrot.slane %v750, %v786
          %v788 = vmul.f32 %v787, %v783
          %v789 = vadd.f32 %v781, %v788
          %v790 = vsub.f32 %v734, 6.0
          %v791 = vmax.f32 %v790, 0.0
          %v792 = vlaneseq
          %v793 = vshrl.u32 %v792, 7
          %v794 = vsub.s32 5, %v793
          %v795 = vrot.slane %v750, %v794
          %v796 = vmul.f32 %v795, %v791
          %v797 = vadd.f32 %v789, %v796
          %v798 = vsub.f32 %v734, 7.0
          %v799 = vmax.f32 %v798, 0.0
          %v800 = vlaneseq
          %v801 = vshrl.u32 %v800, 7
          %v802 = vsub.s32 6, %v801
          %v803 = vrot.slane %v750, %v802
          %v804 = vmul.f32 %v803, %v799
          %v805 = vadd.f32 %v797, %v804
          %v806 = vsub.f32 %v734, 8.0
          %v807 = vmax.f32 %v806, 0.0
          %v808 = vlaneseq
          %v809 = vshrl.u32 %v808, 7
          %v810 = vsub.s32 7, %v809
          %v811 = vrot.slane %v750, %v810
          %v812 = vmul.f32 %v811, %v807
          %v813 = vadd.f32 %v805, %v812
          %v814 = vadd.f32 %v749, %v813
          %s815 = scalar_lea.vmem [#allocation9], 8
          %v816 = vld [vmem:[%s815] sm:$0xff]
          %v817 = vsub.f32 %v734, 9.0
          %v818 = vmax.f32 %v817, 0.0
          %v819 = vlaneseq
          %v820 = vshrl.u32 %v819, 7
          %v821 = vsub.s32 0, %v820
          %v822 = vrot.slane %v816, %v821
          %v823 = vmul.f32 %v822, %v818
          %v824 = vsub.f32 %v734, 10.0
          %v825 = vmax.f32 %v824, 0.0
          %v826 = vlaneseq
          %v827 = vshrl.u32 %v826, 7
          %v828 = vsub.s32 1, %v827
          %v829 = vrot.slane %v816, %v828
          %v830 = vmul.f32 %v829, %v825
          %v831 = vadd.f32 %v823, %v830
          %v832 = vsub.f32 %v734, 11.0
          %v833 = vmax.f32 %v832, 0.0
          %v834 = vlaneseq
          %v835 = vshrl.u32 %v834, 7
          %v836 = vsub.s32 2, %v835
          %v837 = vrot.slane %v816, %v836
          %v838 = vmul.f32 %v837, %v833
          %v839 = vadd.f32 %v831, %v838
          %v840 = vsub.f32 %v734, 12.0
          %v841 = vmax.f32 %v840, 0.0
          %v842 = vlaneseq
          %v843 = vshrl.u32 %v842, 7
          %v844 = vsub.s32 3, %v843
          %v845 = vrot.slane %v816, %v844
          %v846 = vmul.f32 %v845, %v841
          %v847 = vadd.f32 %v839, %v846
          %v848 = vsub.f32 %v734, 13.0
          %v849 = vmax.f32 %v848, 0.0
          %v850 = vlaneseq
          %v851 = vshrl.u32 %v850, 7
          %v852 = vsub.s32 4, %v851
          %v853 = vrot.slane %v816, %v852
          %v854 = vmul.f32 %v853, %v849
          %v855 = vadd.f32 %v847, %v854
          %v856 = vsub.f32 %v734, 14.0
          %v857 = vmax.f32 %v856, 0.0
          %v858 = vlaneseq
          %v859 = vshrl.u32 %v858, 7
          %v860 = vsub.s32 5, %v859
          %v861 = vrot.slane %v816, %v860
          %v862 = vmul.f32 %v861, %v857
          %v863 = vadd.f32 %v855, %v862
          %v864 = vsub.f32 %v734, 15.0
          %v865 = vmax.f32 %v864, 0.0
          %v866 = vlaneseq
          %v867 = vshrl.u32 %v866, 7
          %v868 = vsub.s32 6, %v867
          %v869 = vrot.slane %v816, %v868
          %v870 = vmul.f32 %v869, %v865
          %v871 = vadd.f32 %v863, %v870
          %v872 = vsub.f32 %v734, 16.0
          %v873 = vmax.f32 %v872, 0.0
          %v874 = vlaneseq
          %v875 = vshrl.u32 %v874, 7
          %v876 = vsub.s32 7, %v875
          %v877 = vrot.slane %v816, %v876
          %v878 = vmul.f32 %v877, %v873
          %v879 = vadd.f32 %v871, %v878
          %v880 = vadd.f32 %v814, %v879
          %s881 = scalar_lea.vmem [#allocation9], 16
          %v882 = vld [vmem:[%s881] sm:$0xff]
          %v883 = vsub.f32 %v734, 17.0
          %v884 = vmax.f32 %v883, 0.0
          %v885 = vlaneseq
          %v886 = vshrl.u32 %v885, 7
          %v887 = vsub.s32 0, %v886
          %v888 = vrot.slane %v882, %v887
          %v889 = vmul.f32 %v888, %v884
          %v890 = vsub.f32 %v734, 18.0
          %v891 = vmax.f32 %v890, 0.0
          %v892 = vlaneseq
          %v893 = vshrl.u32 %v892, 7
          %v894 = vsub.s32 1, %v893
          %v895 = vrot.slane %v882, %v894
          %v896 = vmul.f32 %v895, %v891
          %v897 = vadd.f32 %v889, %v896
          %v898 = vsub.f32 %v734, 19.0
          %v899 = vmax.f32 %v898, 0.0
          %v900 = vlaneseq
          %v901 = vshrl.u32 %v900, 7
          %v902 = vsub.s32 2, %v901
          %v903 = vrot.slane %v882, %v902
          %v904 = vmul.f32 %v903, %v899
          %v905 = vadd.f32 %v897, %v904
          %v906 = vsub.f32 %v734, 20.0
          %v907 = vmax.f32 %v906, 0.0
          %v908 = vlaneseq
          %v909 = vshrl.u32 %v908, 7
          %v910 = vsub.s32 3, %v909
          %v911 = vrot.slane %v882, %v910
          %v912 = vmul.f32 %v911, %v907
          %v913 = vadd.f32 %v905, %v912
          %v914 = vsub.f32 %v734, 21.0
          %v915 = vmax.f32 %v914, 0.0
          %v916 = vlaneseq
          %v917 = vshrl.u32 %v916, 7
          %v918 = vsub.s32 4, %v917
          %v919 = vrot.slane %v882, %v918
          %v920 = vmul.f32 %v919, %v915
          %v921 = vadd.f32 %v913, %v920
          %v922 = vsub.f32 %v734, 22.0
          %v923 = vmax.f32 %v922, 0.0
          %v924 = vlaneseq
          %v925 = vshrl.u32 %v924, 7
          %v926 = vsub.s32 5, %v925
          %v927 = vrot.slane %v882, %v926
          %v928 = vmul.f32 %v927, %v923
          %v929 = vadd.f32 %v921, %v928
          %v930 = vsub.f32 %v734, 23.0
          %v931 = vmax.f32 %v930, 0.0
          %v932 = vlaneseq
          %v933 = vshrl.u32 %v932, 7
          %v934 = vsub.s32 6, %v933
          %v935 = vrot.slane %v882, %v934
          %v936 = vmul.f32 %v935, %v931
          %v937 = vadd.f32 %v929, %v936
          %v938 = vsub.f32 %v734, 24.0
          %v939 = vmax.f32 %v938, 0.0
          %v940 = vlaneseq
          %v941 = vshrl.u32 %v940, 7
          %v942 = vsub.s32 7, %v941
          %v943 = vrot.slane %v882, %v942
          %v944 = vmul.f32 %v943, %v939
          %v945 = vadd.f32 %v937, %v944
          %v946 = vadd.f32 %v880, %v945
          %s947 = scalar_lea.vmem [#allocation9], 24
          %v948 = vld [vmem:[%s947] sm:$0xff]
          %v949 = vsub.f32 %v734, 25.0
          %v950 = vmax.f32 %v949, 0.0
          %v951 = vlaneseq
          %v952 = vshrl.u32 %v951, 7
          %v953 = vsub.s32 0, %v952
          %v954 = vrot.slane %v948, %v953
          %v955 = vmul.f32 %v954, %v950
          %v956 = vsub.f32 %v734, 26.0
          %v957 = vmax.f32 %v956, 0.0
          %v958 = vlaneseq
          %v959 = vshrl.u32 %v958, 7
          %v960 = vsub.s32 1, %v959
          %v961 = vrot.slane %v948, %v960
          %v962 = vmul.f32 %v961, %v957
          %v963 = vadd.f32 %v955, %v962
          %v964 = vsub.f32 %v734, 27.0
          %v965 = vmax.f32 %v964, 0.0
          %v966 = vlaneseq
          %v967 = vshrl.u32 %v966, 7
          %v968 = vsub.s32 2, %v967
          %v969 = vrot.slane %v948, %v968
          %v970 = vmul.f32 %v969, %v965
          %v971 = vadd.f32 %v963, %v970
          %v972 = vsub.f32 %v734, 28.0
          %v973 = vmax.f32 %v972, 0.0
          %v974 = vlaneseq
          %v975 = vshrl.u32 %v974, 7
          %v976 = vsub.s32 3, %v975
          %v977 = vrot.slane %v948, %v976
          %v978 = vmul.f32 %v977, %v973
          %v979 = vadd.f32 %v971, %v978
          %v980 = vsub.f32 %v734, 29.0
          %v981 = vmax.f32 %v980, 0.0
          %v982 = vlaneseq
          %v983 = vshrl.u32 %v982, 7
          %v984 = vsub.s32 4, %v983
          %v985 = vrot.slane %v948, %v984
          %v986 = vmul.f32 %v985, %v981
          %v987 = vadd.f32 %v979, %v986
          %v988 = vsub.f32 %v734, 30.0
          %v989 = vmax.f32 %v988, 0.0
          %v990 = vlaneseq
          %v991 = vshrl.u32 %v990, 7
          %v992 = vsub.s32 5, %v991
          %v993 = vrot.slane %v948, %v992
          %v994 = vmul.f32 %v993, %v989
          %v995 = vadd.f32 %v987, %v994
          %v996 = vsub.f32 %v734, 31.0
          %v997 = vmax.f32 %v996, 0.0
          %v998 = vlaneseq
          %v999 = vshrl.u32 %v998, 7
          %v1000 = vsub.s32 6, %v999
          %v1001 = vrot.slane %v948, %v1000
          %v1002 = vmul.f32 %v1001, %v997
          %v1003 = vadd.f32 %v995, %v1002
          %v1004 = vsub.f32 %v734, 32.0
          %v1005 = vmax.f32 %v1004, 0.0
          %v1006 = vlaneseq
          %v1007 = vshrl.u32 %v1006, 7
          %v1008 = vsub.s32 7, %v1007
          %v1009 = vrot.slane %v948, %v1008
          %v1010 = vmul.f32 %v1009, %v1005
          %v1011 = vadd.f32 %v1003, %v1010
          %v1012 = vadd.f32 %v946, %v1011
          %s1013 = scalar_lea.vmem [#allocation9], 32
          %v1014 = vld [vmem:[%s1013] sm:$0xff]
          %v1015 = vsub.f32 %v734, 33.0
          %v1016 = vmax.f32 %v1015, 0.0
          %v1017 = vlaneseq
          %v1018 = vshrl.u32 %v1017, 7
          %v1019 = vsub.s32 0, %v1018
          %v1020 = vrot.slane %v1014, %v1019
          %v1021 = vmul.f32 %v1020, %v1016
          %v1022 = vsub.f32 %v734, 34.0
          %v1023 = vmax.f32 %v1022, 0.0
          %v1024 = vlaneseq
          %v1025 = vshrl.u32 %v1024, 7
          %v1026 = vsub.s32 1, %v1025
          %v1027 = vrot.slane %v1014, %v1026
          %v1028 = vmul.f32 %v1027, %v1023
          %v1029 = vadd.f32 %v1021, %v1028
          %v1030 = vsub.f32 %v734, 35.0
          %v1031 = vmax.f32 %v1030, 0.0
          %v1032 = vlaneseq
          %v1033 = vshrl.u32 %v1032, 7
          %v1034 = vsub.s32 2, %v1033
          %v1035 = vrot.slane %v1014, %v1034
          %v1036 = vmul.f32 %v1035, %v1031
          %v1037 = vadd.f32 %v1029, %v1036
          %v1038 = vsub.f32 %v734, 36.0
          %v1039 = vmax.f32 %v1038, 0.0
          %v1040 = vlaneseq
          %v1041 = vshrl.u32 %v1040, 7
          %v1042 = vsub.s32 3, %v1041
          %v1043 = vrot.slane %v1014, %v1042
          %v1044 = vmul.f32 %v1043, %v1039
          %v1045 = vadd.f32 %v1037, %v1044
          %v1046 = vsub.f32 %v734, 37.0
          %v1047 = vmax.f32 %v1046, 0.0
          %v1048 = vlaneseq
          %v1049 = vshrl.u32 %v1048, 7
          %v1050 = vsub.s32 4, %v1049
          %v1051 = vrot.slane %v1014, %v1050
          %v1052 = vmul.f32 %v1051, %v1047
          %v1053 = vadd.f32 %v1045, %v1052
          %v1054 = vsub.f32 %v734, 38.0
          %v1055 = vmax.f32 %v1054, 0.0
          %v1056 = vlaneseq
          %v1057 = vshrl.u32 %v1056, 7
          %v1058 = vsub.s32 5, %v1057
          %v1059 = vrot.slane %v1014, %v1058
          %v1060 = vmul.f32 %v1059, %v1055
          %v1061 = vadd.f32 %v1053, %v1060
          %v1062 = vsub.f32 %v734, 39.0
          %v1063 = vmax.f32 %v1062, 0.0
          %v1064 = vlaneseq
          %v1065 = vshrl.u32 %v1064, 7
          %v1066 = vsub.s32 6, %v1065
          %v1067 = vrot.slane %v1014, %v1066
          %v1068 = vmul.f32 %v1067, %v1063
          %v1069 = vadd.f32 %v1061, %v1068
          %v1070 = vsub.f32 %v734, 40.0
          %v1071 = vmax.f32 %v1070, 0.0
          %v1072 = vlaneseq
          %v1073 = vshrl.u32 %v1072, 7
          %v1074 = vsub.s32 7, %v1073
          %v1075 = vrot.slane %v1014, %v1074
          %v1076 = vmul.f32 %v1075, %v1071
          %v1077 = vadd.f32 %v1069, %v1076
          %v1078 = vadd.f32 %v1012, %v1077
          %s1079 = scalar_lea.vmem [#allocation9], 40
          %v1080 = vld [vmem:[%s1079] sm:$0xff]
          %v1081 = vsub.f32 %v734, 41.0
          %v1082 = vmax.f32 %v1081, 0.0
          %v1083 = vlaneseq
          %v1084 = vshrl.u32 %v1083, 7
          %v1085 = vsub.s32 0, %v1084
          %v1086 = vrot.slane %v1080, %v1085
          %v1087 = vmul.f32 %v1086, %v1082
          %v1088 = vsub.f32 %v734, 42.0
          %v1089 = vmax.f32 %v1088, 0.0
          %v1090 = vlaneseq
          %v1091 = vshrl.u32 %v1090, 7
          %v1092 = vsub.s32 1, %v1091
          %v1093 = vrot.slane %v1080, %v1092
          %v1094 = vmul.f32 %v1093, %v1089
          %v1095 = vadd.f32 %v1087, %v1094
          %v1096 = vsub.f32 %v734, 43.0
          %v1097 = vmax.f32 %v1096, 0.0
          %v1098 = vlaneseq
          %v1099 = vshrl.u32 %v1098, 7
          %v1100 = vsub.s32 2, %v1099
          %v1101 = vrot.slane %v1080, %v1100
          %v1102 = vmul.f32 %v1101, %v1097
          %v1103 = vadd.f32 %v1095, %v1102
          %v1104 = vsub.f32 %v734, 44.0
          %v1105 = vmax.f32 %v1104, 0.0
          %v1106 = vlaneseq
          %v1107 = vshrl.u32 %v1106, 7
          %v1108 = vsub.s32 3, %v1107
          %v1109 = vrot.slane %v1080, %v1108
          %v1110 = vmul.f32 %v1109, %v1105
          %v1111 = vadd.f32 %v1103, %v1110
          %v1112 = vsub.f32 %v734, 45.0
          %v1113 = vmax.f32 %v1112, 0.0
          %v1114 = vlaneseq
          %v1115 = vshrl.u32 %v1114, 7
          %v1116 = vsub.s32 4, %v1115
          %v1117 = vrot.slane %v1080, %v1116
          %v1118 = vmul.f32 %v1117, %v1113
          %v1119 = vadd.f32 %v1111, %v1118
          %v1120 = vsub.f32 %v734, 46.0
          %v1121 = vmax.f32 %v1120, 0.0
          %v1122 = vlaneseq
          %v1123 = vshrl.u32 %v1122, 7
          %v1124 = vsub.s32 5, %v1123
          %v1125 = vrot.slane %v1080, %v1124
          %v1126 = vmul.f32 %v1125, %v1121
          %v1127 = vadd.f32 %v1119, %v1126
          %v1128 = vsub.f32 %v734, 47.0
          %v1129 = vmax.f32 %v1128, 0.0
          %v1130 = vlaneseq
          %v1131 = vshrl.u32 %v1130, 7
          %v1132 = vsub.s32 6, %v1131
          %v1133 = vrot.slane %v1080, %v1132
          %v1134 = vmul.f32 %v1133, %v1129
          %v1135 = vadd.f32 %v1127, %v1134
          %v1136 = vsub.f32 %v734, 48.0
          %v1137 = vmax.f32 %v1136, 0.0
          %v1138 = vlaneseq
          %v1139 = vshrl.u32 %v1138, 7
          %v1140 = vsub.s32 7, %v1139
          %v1141 = vrot.slane %v1080, %v1140
          %v1142 = vmul.f32 %v1141, %v1137
          %v1143 = vadd.f32 %v1135, %v1142
          %v1144 = vadd.f32 %v1078, %v1143
          %s1145 = scalar_lea.vmem [#allocation9], 48
          %v1146 = vld [vmem:[%s1145] sm:$0xff]
          %v1147 = vsub.f32 %v734, 49.0
          %v1148 = vmax.f32 %v1147, 0.0
          %v1149 = vlaneseq
          %v1150 = vshrl.u32 %v1149, 7
          %v1151 = vsub.s32 0, %v1150
          %v1152 = vrot.slane %v1146, %v1151
          %v1153 = vmul.f32 %v1152, %v1148
          %v1154 = vsub.f32 %v734, 50.0
          %v1155 = vmax.f32 %v1154, 0.0
          %v1156 = vlaneseq
          %v1157 = vshrl.u32 %v1156, 7
          %v1158 = vsub.s32 1, %v1157
          %v1159 = vrot.slane %v1146, %v1158
          %v1160 = vmul.f32 %v1159, %v1155
          %v1161 = vadd.f32 %v1153, %v1160
          %v1162 = vsub.f32 %v734, 51.0
          %v1163 = vmax.f32 %v1162, 0.0
          %v1164 = vlaneseq
          %v1165 = vshrl.u32 %v1164, 7
          %v1166 = vsub.s32 2, %v1165
          %v1167 = vrot.slane %v1146, %v1166
          %v1168 = vmul.f32 %v1167, %v1163
          %v1169 = vadd.f32 %v1161, %v1168
          %v1170 = vsub.f32 %v734, 52.0
          %v1171 = vmax.f32 %v1170, 0.0
          %v1172 = vlaneseq
          %v1173 = vshrl.u32 %v1172, 7
          %v1174 = vsub.s32 3, %v1173
          %v1175 = vrot.slane %v1146, %v1174
          %v1176 = vmul.f32 %v1175, %v1171
          %v1177 = vadd.f32 %v1169, %v1176
          %v1178 = vsub.f32 %v734, 53.0
          %v1179 = vmax.f32 %v1178, 0.0
          %v1180 = vlaneseq
          %v1181 = vshrl.u32 %v1180, 7
          %v1182 = vsub.s32 4, %v1181
          %v1183 = vrot.slane %v1146, %v1182
          %v1184 = vmul.f32 %v1183, %v1179
          %v1185 = vadd.f32 %v1177, %v1184
          %v1186 = vsub.f32 %v734, 54.0
          %v1187 = vmax.f32 %v1186, 0.0
          %v1188 = vlaneseq
          %v1189 = vshrl.u32 %v1188, 7
          %v1190 = vsub.s32 5, %v1189
          %v1191 = vrot.slane %v1146, %v1190
          %v1192 = vmul.f32 %v1191, %v1187
          %v1193 = vadd.f32 %v1185, %v1192
          %v1194 = vsub.f32 %v734, 55.0
          %v1195 = vmax.f32 %v1194, 0.0
          %v1196 = vlaneseq
          %v1197 = vshrl.u32 %v1196, 7
          %v1198 = vsub.s32 6, %v1197
          %v1199 = vrot.slane %v1146, %v1198
          %v1200 = vmul.f32 %v1199, %v1195
          %v1201 = vadd.f32 %v1193, %v1200
          %v1202 = vsub.f32 %v734, 56.0
          %v1203 = vmax.f32 %v1202, 0.0
          %v1204 = vlaneseq
          %v1205 = vshrl.u32 %v1204, 7
          %v1206 = vsub.s32 7, %v1205
          %v1207 = vrot.slane %v1146, %v1206
          %v1208 = vmul.f32 %v1207, %v1203
          %v1209 = vadd.f32 %v1201, %v1208
          %v1210 = vadd.f32 %v1144, %v1209
          %s1211 = scalar_lea.vmem [#allocation9], 56
          %v1212 = vld [vmem:[%s1211] sm:$0xff]
          %v1213 = vsub.f32 %v734, 57.0
          %v1214 = vmax.f32 %v1213, 0.0
          %v1215 = vlaneseq
          %v1216 = vshrl.u32 %v1215, 7
          %v1217 = vsub.s32 0, %v1216
          %v1218 = vrot.slane %v1212, %v1217
          %v1219 = vmul.f32 %v1218, %v1214
          %v1220 = vsub.f32 %v734, 58.0
          %v1221 = vmax.f32 %v1220, 0.0
          %v1222 = vlaneseq
          %v1223 = vshrl.u32 %v1222, 7
          %v1224 = vsub.s32 1, %v1223
          %v1225 = vrot.slane %v1212, %v1224
          %v1226 = vmul.f32 %v1225, %v1221
          %v1227 = vadd.f32 %v1219, %v1226
          %v1228 = vsub.f32 %v734, 59.0
          %v1229 = vmax.f32 %v1228, 0.0
          %v1230 = vlaneseq
          %v1231 = vshrl.u32 %v1230, 7
          %v1232 = vsub.s32 2, %v1231
          %v1233 = vrot.slane %v1212, %v1232
          %v1234 = vmul.f32 %v1233, %v1229
          %v1235 = vadd.f32 %v1227, %v1234
          %v1236 = vsub.f32 %v734, 60.0
          %v1237 = vmax.f32 %v1236, 0.0
          %v1238 = vlaneseq
          %v1239 = vshrl.u32 %v1238, 7
          %v1240 = vsub.s32 3, %v1239
          %v1241 = vrot.slane %v1212, %v1240
          %v1242 = vmul.f32 %v1241, %v1237
          %v1243 = vadd.f32 %v1235, %v1242
          %v1244 = vsub.f32 %v734, 61.0
          %v1245 = vmax.f32 %v1244, 0.0
          %v1246 = vlaneseq
          %v1247 = vshrl.u32 %v1246, 7
          %v1248 = vsub.s32 4, %v1247
          %v1249 = vrot.slane %v1212, %v1248
          %v1250 = vmul.f32 %v1249, %v1245
          %v1251 = vadd.f32 %v1243, %v1250
          %v1252 = vsub.f32 %v734, 62.0
          %v1253 = vmax.f32 %v1252, 0.0
          %v1254 = vlaneseq
          %v1255 = vshrl.u32 %v1254, 7
          %v1256 = vsub.s32 5, %v1255
          %v1257 = vrot.slane %v1212, %v1256
          %v1258 = vmul.f32 %v1257, %v1253
          %v1259 = vadd.f32 %v1251, %v1258
          %v1260 = vsub.f32 %v734, 63.0
          %v1261 = vmax.f32 %v1260, 0.0
          %v1262 = vlaneseq
          %v1263 = vshrl.u32 %v1262, 7
          %v1264 = vsub.s32 6, %v1263
          %v1265 = vrot.slane %v1212, %v1264
          %v1266 = vmul.f32 %v1265, %v1261
          %v1267 = vadd.f32 %v1259, %v1266
          %v1268 = vsub.f32 %v734, 64.0
          %v1269 = vmax.f32 %v1268, 0.0
          %v1270 = vlaneseq
          %v1271 = vshrl.u32 %v1270, 7
          %v1272 = vsub.s32 7, %v1271
          %v1273 = vrot.slane %v1212, %v1272
          %v1274 = vmul.f32 %v1273, %v1269
          %v1275 = vadd.f32 %v1267, %v1274
          %v1276 = vadd.f32 %v1210, %v1275
          %v1277 = vpack.c.bf16 %v1276, %v1276
          %1278 = vst [vmem:[#allocation2] sm:$0xf] %v1277
          %1279 = vst [vmem:[#allocation3] sm:$0xff] 0.0
        $region108: #{tpu_custom_call.1} parent=79 // pred_fallthru
          _
        %v1280 = vld [vmem:[#allocation2] sm:$0xf]
        %v1281 = vld [vmem:[%s608] sm:$0xf]
        %v1282 = vld [vmem:[%s608 + $0x4] sm:$0xf]
        %v1283 = vld [vmem:[%s608 + $0x8] sm:$0xf]
        %v1284 = vld [vmem:[%s608 + $0xc] sm:$0xf]
        %v1285 = vld [vmem:[%s608 + $0x10] sm:$0xf]
        %v1286 = vld [vmem:[%s608 + $0x14] sm:$0xf]
        %v1287 = vld [vmem:[%s608 + $0x18] sm:$0xf]
        %v1288 = vld [vmem:[%s608 + $0x1c] sm:$0xf]
        %v1289 = vld [vmem:[%s608 + $0x20] sm:$0xf]
        %v1290 = vld [vmem:[%s608 + $0x24] sm:$0xf]
        %v1291 = vld [vmem:[%s608 + $0x28] sm:$0xf]
        %v1292 = vld [vmem:[%s608 + $0x2c] sm:$0xf]
        %v1293 = vld [vmem:[%s608 + $0x30] sm:$0xf]
        %v1294 = vld [vmem:[%s608 + $0x34] sm:$0xf]
        %v1295 = vld [vmem:[%s608 + $0x38] sm:$0xf]
        %v1296 = vld [vmem:[%s608 + $0x3c] sm:$0xf]
        %v1297 = vld [vmem:[%s699] sm:$0x1]
        %v1299 = vlaneseq
        %v1300 = vshrl.u32 %v1299, 7
        %v1301 = vsub.s32 0, %v1300
        %v1302 = vrot.slane %v1297, %v1301
        %v1320 = vunpack.c.l.b16 %v1281
        %v1321 = vunpack.c.l.b16 %v1282
        %v1322 = vunpack.c.l.b16 %v1283
        %v1323 = vunpack.c.l.b16 %v1284
        %v1324 = vunpack.c.l.b16 %v1285
        %v1325 = vunpack.c.l.b16 %v1286
        %v1326 = vunpack.c.l.b16 %v1287
        %v1327 = vunpack.c.l.b16 %v1288
        %v1328 = vunpack.c.l.b16 %v1289
        %v1329 = vunpack.c.l.b16 %v1290
        %v1330 = vunpack.c.l.b16 %v1291
        %v1331 = vunpack.c.l.b16 %v1292
        %v1332 = vunpack.c.l.b16 %v1293
        %v1333 = vunpack.c.l.b16 %v1294
        %v1334 = vunpack.c.l.b16 %v1295
        %v1335 = vunpack.c.l.b16 %v1296
        %v1336 = vpack.c.b16 %v1321, %v1320
        %v1337 = vpack.c.b16 %v1323, %v1322
        %v1338 = vpack.c.b16 %v1325, %v1324
        %v1339 = vpack.c.b16 %v1327, %v1326
        %v1340 = vpack.c.b16 %v1329, %v1328
        %v1341 = vpack.c.b16 %v1331, %v1330
        %v1342 = vpack.c.b16 %v1333, %v1332
        %v1343 = vpack.c.b16 %v1335, %v1334
        %1352 = vmatprep.subr.bf16.mxu0 0
        %1353 = vmatpush1.bf16.msra.mxu0 %v1336
        %1354 = vmatprep.subr.bf16.mxu0 0
        %1355 = vmatpush1.bf16.msra.mxu0 %v1337
        %1356 = vmatprep.subr.bf16.mxu0 0
        %1357 = vmatpush1.bf16.msra.mxu0 %v1338
        %1358 = vmatprep.subr.bf16.mxu0 0
        %1359 = vmatpush1.bf16.msra.mxu0 %v1339
        %1360 = vmatprep.subr.bf16.mxu0 0
        %1361 = vmatpush1.bf16.msra.mxu0 %v1340
        %1362 = vmatprep.subr.bf16.mxu0 0
        %1363 = vmatpush1.bf16.msra.mxu0 %v1341
        %1364 = vmatprep.subr.bf16.mxu0 0
        %1365 = vmatpush1.bf16.msra.mxu0 %v1342
        %1366 = vmatprep.subr.bf16.mxu0 0
        %1367 = vmatpush1.bf16.msra.mxu0 %v1343
        %1368 = vmatprep.subr.bf16.mxu0 0
        %1369 = vmatpush1.bf16.msra.mxu0 0
        %1370 = vmatprep.subr.bf16.mxu0 0
        %1371 = vmatpush1.bf16.msra.mxu0 0
        %1372 = vmatprep.subr.bf16.mxu0 0
        %1373 = vmatpush1.bf16.msra.mxu0 0
        %1374 = vmatprep.subr.bf16.mxu0 0
        %1375 = vmatpush1.bf16.msra.mxu0 0
        %1376 = vmatprep.subr.bf16.mxu0 0
        %1377 = vmatpush1.bf16.msra.mxu0 0
        %1378 = vmatprep.subr.bf16.mxu0 0
        %1379 = vmatpush1.bf16.msra.mxu0 0
        %1380 = vmatprep.subr.bf16.mxu0 0
        %1381 = vmatpush1.bf16.msra.mxu0 0
        %1382 = vmatprep.subr.bf16.mxu0 0
        %1383 = vmatpush1.bf16.msra.mxu0 0
        %1384 = vmatprep.mubr.bf16.mxu0 0
        %1385 = vmatmul.mubr.bf16.gmra.mrb[0].mxu0 %v1280
        %v1386 = vpop.f32.mrb[0].mxu0
        %v1387 = vadd.f32 %v1302, %v1386
        %v1388 = vpop.f32.mrb[0].mxu0
        %v1389 = vpop.f32.mrb[0].mxu0
        %v1390 = vpop.f32.mrb[0].mxu0
        %1391 = vdwg.mxu0
        %v1392 = vld [vmem:[%s702] sm:$0x1]
        %v1393 = vld [vmem:[%s705] sm:$0x1]
        %v1394 = vadd.f32 %v1387, 4.0
        %v1395 = vmul.f32 %v1394, 7.875
        %v1396 = vmax.f32 %v1395, 0.0
        %v1397 = vmin.f32 %v1396, 63.0
        %v1399 = vlaneseq
        %v1400 = vshrl.u32 %v1399, 7
        %v1401 = vsub.s32 0, %v1400
        %v1402 = vrot.slane %v1393, %v1401
        %v1404 = vmul.f32 %v1402, %v1397
        %v1406 = vlaneseq
        %v1407 = vshrl.u32 %v1406, 7
        %v1408 = vsub.s32 0, %v1407
        %v1409 = vrot.slane %v1392, %v1408
        %v1411 = vadd.f32 %v1409, %v1404
        %v1412 = vadd.f32 %v1411, %v1387
        %v1413 = vld [vmem:[%s617] sm:$0xff]
        %v1414 = vsub.f32 %v1397, 1.0
        %v1415 = vmax.f32 %v1414, 0.0
        %v1416 = vlaneseq
        %v1417 = vshrl.u32 %v1416, 7
        %v1418 = vsub.s32 0, %v1417
        %v1419 = vrot.slane %v1413, %v1418
        %v1420 = vmul.f32 %v1419, %v1415
        %v1421 = vsub.f32 %v1397, 2.0
        %v1422 = vmax.f32 %v1421, 0.0
        %v1423 = vlaneseq
        %v1424 = vshrl.u32 %v1423, 7
        %v1425 = vsub.s32 1, %v1424
        %v1426 = vrot.slane %v1413, %v1425
        %v1427 = vmul.f32 %v1426, %v1422
        %v1428 = vadd.f32 %v1420, %v1427
        %v1429 = vsub.f32 %v1397, 3.0
        %v1430 = vmax.f32 %v1429, 0.0
        %v1431 = vlaneseq
        %v1432 = vshrl.u32 %v1431, 7
        %v1433 = vsub.s32 2, %v1432
        %v1434 = vrot.slane %v1413, %v1433
        %v1435 = vmul.f32 %v1434, %v1430
        %v1436 = vadd.f32 %v1428, %v1435
        %v1437 = vsub.f32 %v1397, 4.0
        %v1438 = vmax.f32 %v1437, 0.0
        %v1439 = vlaneseq
        %v1440 = vshrl.u32 %v1439, 7
        %v1441 = vsub.s32 3, %v1440
        %v1442 = vrot.slane %v1413, %v1441
        %v1443 = vmul.f32 %v1442, %v1438
        %v1444 = vadd.f32 %v1436, %v1443
        %v1445 = vsub.f32 %v1397, 5.0
        %v1446 = vmax.f32 %v1445, 0.0
        %v1447 = vlaneseq
        %v1448 = vshrl.u32 %v1447, 7
        %v1449 = vsub.s32 4, %v1448
        %v1450 = vrot.slane %v1413, %v1449
        %v1451 = vmul.f32 %v1450, %v1446
        %v1452 = vadd.f32 %v1444, %v1451
        %v1453 = vsub.f32 %v1397, 6.0
        %v1454 = vmax.f32 %v1453, 0.0
        %v1455 = vlaneseq
        %v1456 = vshrl.u32 %v1455, 7
        %v1457 = vsub.s32 5, %v1456
        %v1458 = vrot.slane %v1413, %v1457
        %v1459 = vmul.f32 %v1458, %v1454
        %v1460 = vadd.f32 %v1452, %v1459
        %v1461 = vsub.f32 %v1397, 7.0
        %v1462 = vmax.f32 %v1461, 0.0
        %v1463 = vlaneseq
        %v1464 = vshrl.u32 %v1463, 7
        %v1465 = vsub.s32 6, %v1464
        %v1466 = vrot.slane %v1413, %v1465
        %v1467 = vmul.f32 %v1466, %v1462
        %v1468 = vadd.f32 %v1460, %v1467
        %v1469 = vsub.f32 %v1397, 8.0
        %v1470 = vmax.f32 %v1469, 0.0
        %v1471 = vlaneseq
        %v1472 = vshrl.u32 %v1471, 7
        %v1473 = vsub.s32 7, %v1472
        %v1474 = vrot.slane %v1413, %v1473
        %v1475 = vmul.f32 %v1474, %v1470
        %v1476 = vadd.f32 %v1468, %v1475
        %v1477 = vadd.f32 %v1412, %v1476
        %s1478 = scalar_lea.vmem %s617, 8 [#allocation12]
        %v1479 = vld [vmem:[%s1478] sm:$0xff]
        %v1480 = vsub.f32 %v1397, 9.0
        %v1481 = vmax.f32 %v1480, 0.0
        %v1482 = vlaneseq
        %v1483 = vshrl.u32 %v1482, 7
        %v1484 = vsub.s32 0, %v1483
        %v1485 = vrot.slane %v1479, %v1484
        %v1486 = vmul.f32 %v1485, %v1481
        %v1487 = vsub.f32 %v1397, 10.0
        %v1488 = vmax.f32 %v1487, 0.0
        %v1489 = vlaneseq
        %v1490 = vshrl.u32 %v1489, 7
        %v1491 = vsub.s32 1, %v1490
        %v1492 = vrot.slane %v1479, %v1491
        %v1493 = vmul.f32 %v1492, %v1488
        %v1494 = vadd.f32 %v1486, %v1493
        %v1495 = vsub.f32 %v1397, 11.0
        %v1496 = vmax.f32 %v1495, 0.0
        %v1497 = vlaneseq
        %v1498 = vshrl.u32 %v1497, 7
        %v1499 = vsub.s32 2, %v1498
        %v1500 = vrot.slane %v1479, %v1499
        %v1501 = vmul.f32 %v1500, %v1496
        %v1502 = vadd.f32 %v1494, %v1501
        %v1503 = vsub.f32 %v1397, 12.0
        %v1504 = vmax.f32 %v1503, 0.0
        %v1505 = vlaneseq
        %v1506 = vshrl.u32 %v1505, 7
        %v1507 = vsub.s32 3, %v1506
        %v1508 = vrot.slane %v1479, %v1507
        %v1509 = vmul.f32 %v1508, %v1504
        %v1510 = vadd.f32 %v1502, %v1509
        %v1511 = vsub.f32 %v1397, 13.0
        %v1512 = vmax.f32 %v1511, 0.0
        %v1513 = vlaneseq
        %v1514 = vshrl.u32 %v1513, 7
        %v1515 = vsub.s32 4, %v1514
        %v1516 = vrot.slane %v1479, %v1515
        %v1517 = vmul.f32 %v1516, %v1512
        %v1518 = vadd.f32 %v1510, %v1517
        %v1519 = vsub.f32 %v1397, 14.0
        %v1520 = vmax.f32 %v1519, 0.0
        %v1521 = vlaneseq
        %v1522 = vshrl.u32 %v1521, 7
        %v1523 = vsub.s32 5, %v1522
        %v1524 = vrot.slane %v1479, %v1523
        %v1525 = vmul.f32 %v1524, %v1520
        %v1526 = vadd.f32 %v1518, %v1525
        %v1527 = vsub.f32 %v1397, 15.0
        %v1528 = vmax.f32 %v1527, 0.0
        %v1529 = vlaneseq
        %v1530 = vshrl.u32 %v1529, 7
        %v1531 = vsub.s32 6, %v1530
        %v1532 = vrot.slane %v1479, %v1531
        %v1533 = vmul.f32 %v1532, %v1528
        %v1534 = vadd.f32 %v1526, %v1533
        %v1535 = vsub.f32 %v1397, 16.0
        %v1536 = vmax.f32 %v1535, 0.0
        %v1537 = vlaneseq
        %v1538 = vshrl.u32 %v1537, 7
        %v1539 = vsub.s32 7, %v1538
        %v1540 = vrot.slane %v1479, %v1539
        %v1541 = vmul.f32 %v1540, %v1536
        %v1542 = vadd.f32 %v1534, %v1541
        %v1543 = vadd.f32 %v1477, %v1542
        %s1544 = scalar_lea.vmem %s617, 16 [#allocation12]
        %v1545 = vld [vmem:[%s1544] sm:$0xff]
        %v1546 = vsub.f32 %v1397, 17.0
        %v1547 = vmax.f32 %v1546, 0.0
        %v1548 = vlaneseq
        %v1549 = vshrl.u32 %v1548, 7
        %v1550 = vsub.s32 0, %v1549
        %v1551 = vrot.slane %v1545, %v1550
        %v1552 = vmul.f32 %v1551, %v1547
        %v1553 = vsub.f32 %v1397, 18.0
        %v1554 = vmax.f32 %v1553, 0.0
        %v1555 = vlaneseq
        %v1556 = vshrl.u32 %v1555, 7
        %v1557 = vsub.s32 1, %v1556
        %v1558 = vrot.slane %v1545, %v1557
        %v1559 = vmul.f32 %v1558, %v1554
        %v1560 = vadd.f32 %v1552, %v1559
        %v1561 = vsub.f32 %v1397, 19.0
        %v1562 = vmax.f32 %v1561, 0.0
        %v1563 = vlaneseq
        %v1564 = vshrl.u32 %v1563, 7
        %v1565 = vsub.s32 2, %v1564
        %v1566 = vrot.slane %v1545, %v1565
        %v1567 = vmul.f32 %v1566, %v1562
        %v1568 = vadd.f32 %v1560, %v1567
        %v1569 = vsub.f32 %v1397, 20.0
        %v1570 = vmax.f32 %v1569, 0.0
        %v1571 = vlaneseq
        %v1572 = vshrl.u32 %v1571, 7
        %v1573 = vsub.s32 3, %v1572
        %v1574 = vrot.slane %v1545, %v1573
        %v1575 = vmul.f32 %v1574, %v1570
        %v1576 = vadd.f32 %v1568, %v1575
        %v1577 = vsub.f32 %v1397, 21.0
        %v1578 = vmax.f32 %v1577, 0.0
        %v1579 = vlaneseq
        %v1580 = vshrl.u32 %v1579, 7
        %v1581 = vsub.s32 4, %v1580
        %v1582 = vrot.slane %v1545, %v1581
        %v1583 = vmul.f32 %v1582, %v1578
        %v1584 = vadd.f32 %v1576, %v1583
        %v1585 = vsub.f32 %v1397, 22.0
        %v1586 = vmax.f32 %v1585, 0.0
        %v1587 = vlaneseq
        %v1588 = vshrl.u32 %v1587, 7
        %v1589 = vsub.s32 5, %v1588
        %v1590 = vrot.slane %v1545, %v1589
        %v1591 = vmul.f32 %v1590, %v1586
        %v1592 = vadd.f32 %v1584, %v1591
        %v1593 = vsub.f32 %v1397, 23.0
        %v1594 = vmax.f32 %v1593, 0.0
        %v1595 = vlaneseq
        %v1596 = vshrl.u32 %v1595, 7
        %v1597 = vsub.s32 6, %v1596
        %v1598 = vrot.slane %v1545, %v1597
        %v1599 = vmul.f32 %v1598, %v1594
        %v1600 = vadd.f32 %v1592, %v1599
        %v1601 = vsub.f32 %v1397, 24.0
        %v1602 = vmax.f32 %v1601, 0.0
        %v1603 = vlaneseq
        %v1604 = vshrl.u32 %v1603, 7
        %v1605 = vsub.s32 7, %v1604
        %v1606 = vrot.slane %v1545, %v1605
        %v1607 = vmul.f32 %v1606, %v1602
        %v1608 = vadd.f32 %v1600, %v1607
        %v1609 = vadd.f32 %v1543, %v1608
        %s1610 = scalar_lea.vmem %s617, 24 [#allocation12]
        %v1611 = vld [vmem:[%s1610] sm:$0xff]
        %v1612 = vsub.f32 %v1397, 25.0
        %v1613 = vmax.f32 %v1612, 0.0
        %v1614 = vlaneseq
        %v1615 = vshrl.u32 %v1614, 7
        %v1616 = vsub.s32 0, %v1615
        %v1617 = vrot.slane %v1611, %v1616
        %v1618 = vmul.f32 %v1617, %v1613
        %v1619 = vsub.f32 %v1397, 26.0
        %v1620 = vmax.f32 %v1619, 0.0
        %v1621 = vlaneseq
        %v1622 = vshrl.u32 %v1621, 7
        %v1623 = vsub.s32 1, %v1622
        %v1624 = vrot.slane %v1611, %v1623
        %v1625 = vmul.f32 %v1624, %v1620
        %v1626 = vadd.f32 %v1618, %v1625
        %v1627 = vsub.f32 %v1397, 27.0
        %v1628 = vmax.f32 %v1627, 0.0
        %v1629 = vlaneseq
        %v1630 = vshrl.u32 %v1629, 7
        %v1631 = vsub.s32 2, %v1630
        %v1632 = vrot.slane %v1611, %v1631
        %v1633 = vmul.f32 %v1632, %v1628
        %v1634 = vadd.f32 %v1626, %v1633
        %v1635 = vsub.f32 %v1397, 28.0
        %v1636 = vmax.f32 %v1635, 0.0
        %v1637 = vlaneseq
        %v1638 = vshrl.u32 %v1637, 7
        %v1639 = vsub.s32 3, %v1638
        %v1640 = vrot.slane %v1611, %v1639
        %v1641 = vmul.f32 %v1640, %v1636
        %v1642 = vadd.f32 %v1634, %v1641
        %v1643 = vsub.f32 %v1397, 29.0
        %v1644 = vmax.f32 %v1643, 0.0
        %v1645 = vlaneseq
        %v1646 = vshrl.u32 %v1645, 7
        %v1647 = vsub.s32 4, %v1646
        %v1648 = vrot.slane %v1611, %v1647
        %v1649 = vmul.f32 %v1648, %v1644
        %v1650 = vadd.f32 %v1642, %v1649
        %v1651 = vsub.f32 %v1397, 30.0
        %v1652 = vmax.f32 %v1651, 0.0
        %v1653 = vlaneseq
        %v1654 = vshrl.u32 %v1653, 7
        %v1655 = vsub.s32 5, %v1654
        %v1656 = vrot.slane %v1611, %v1655
        %v1657 = vmul.f32 %v1656, %v1652
        %v1658 = vadd.f32 %v1650, %v1657
        %v1659 = vsub.f32 %v1397, 31.0
        %v1660 = vmax.f32 %v1659, 0.0
        %v1661 = vlaneseq
        %v1662 = vshrl.u32 %v1661, 7
        %v1663 = vsub.s32 6, %v1662
        %v1664 = vrot.slane %v1611, %v1663
        %v1665 = vmul.f32 %v1664, %v1660
        %v1666 = vadd.f32 %v1658, %v1665
        %v1667 = vsub.f32 %v1397, 32.0
        %v1668 = vmax.f32 %v1667, 0.0
        %v1669 = vlaneseq
        %v1670 = vshrl.u32 %v1669, 7
        %v1671 = vsub.s32 7, %v1670
        %v1672 = vrot.slane %v1611, %v1671
        %v1673 = vmul.f32 %v1672, %v1668
        %v1674 = vadd.f32 %v1666, %v1673
        %v1675 = vadd.f32 %v1609, %v1674
        %s1676 = scalar_lea.vmem %s617, 32 [#allocation12]
        %v1677 = vld [vmem:[%s1676] sm:$0xff]
        %v1678 = vsub.f32 %v1397, 33.0
        %v1679 = vmax.f32 %v1678, 0.0
        %v1680 = vlaneseq
        %v1681 = vshrl.u32 %v1680, 7
        %v1682 = vsub.s32 0, %v1681
        %v1683 = vrot.slane %v1677, %v1682
        %v1684 = vmul.f32 %v1683, %v1679
        %v1685 = vsub.f32 %v1397, 34.0
        %v1686 = vmax.f32 %v1685, 0.0
        %v1687 = vlaneseq
        %v1688 = vshrl.u32 %v1687, 7
        %v1689 = vsub.s32 1, %v1688
        %v1690 = vrot.slane %v1677, %v1689
        %v1691 = vmul.f32 %v1690, %v1686
        %v1692 = vadd.f32 %v1684, %v1691
        %v1693 = vsub.f32 %v1397, 35.0
        %v1694 = vmax.f32 %v1693, 0.0
        %v1695 = vlaneseq
        %v1696 = vshrl.u32 %v1695, 7
        %v1697 = vsub.s32 2, %v1696
        %v1698 = vrot.slane %v1677, %v1697
        %v1699 = vmul.f32 %v1698, %v1694
        %v1700 = vadd.f32 %v1692, %v1699
        %v1701 = vsub.f32 %v1397, 36.0
        %v1702 = vmax.f32 %v1701, 0.0
        %v1703 = vlaneseq
        %v1704 = vshrl.u32 %v1703, 7
        %v1705 = vsub.s32 3, %v1704
        %v1706 = vrot.slane %v1677, %v1705
        %v1707 = vmul.f32 %v1706, %v1702
        %v1708 = vadd.f32 %v1700, %v1707
        %v1709 = vsub.f32 %v1397, 37.0
        %v1710 = vmax.f32 %v1709, 0.0
        %v1711 = vlaneseq
        %v1712 = vshrl.u32 %v1711, 7
        %v1713 = vsub.s32 4, %v1712
        %v1714 = vrot.slane %v1677, %v1713
        %v1715 = vmul.f32 %v1714, %v1710
        %v1716 = vadd.f32 %v1708, %v1715
        %v1717 = vsub.f32 %v1397, 38.0
        %v1718 = vmax.f32 %v1717, 0.0
        %v1719 = vlaneseq
        %v1720 = vshrl.u32 %v1719, 7
        %v1721 = vsub.s32 5, %v1720
        %v1722 = vrot.slane %v1677, %v1721
        %v1723 = vmul.f32 %v1722, %v1718
        %v1724 = vadd.f32 %v1716, %v1723
        %v1725 = vsub.f32 %v1397, 39.0
        %v1726 = vmax.f32 %v1725, 0.0
        %v1727 = vlaneseq
        %v1728 = vshrl.u32 %v1727, 7
        %v1729 = vsub.s32 6, %v1728
        %v1730 = vrot.slane %v1677, %v1729
        %v1731 = vmul.f32 %v1730, %v1726
        %v1732 = vadd.f32 %v1724, %v1731
        %v1733 = vsub.f32 %v1397, 40.0
        %v1734 = vmax.f32 %v1733, 0.0
        %v1735 = vlaneseq
        %v1736 = vshrl.u32 %v1735, 7
        %v1737 = vsub.s32 7, %v1736
        %v1738 = vrot.slane %v1677, %v1737
        %v1739 = vmul.f32 %v1738, %v1734
        %v1740 = vadd.f32 %v1732, %v1739
        %v1741 = vadd.f32 %v1675, %v1740
        %s1742 = scalar_lea.vmem %s617, 40 [#allocation12]
        %v1743 = vld [vmem:[%s1742] sm:$0xff]
        %v1744 = vsub.f32 %v1397, 41.0
        %v1745 = vmax.f32 %v1744, 0.0
        %v1746 = vlaneseq
        %v1747 = vshrl.u32 %v1746, 7
        %v1748 = vsub.s32 0, %v1747
        %v1749 = vrot.slane %v1743, %v1748
        %v1750 = vmul.f32 %v1749, %v1745
        %v1751 = vsub.f32 %v1397, 42.0
        %v1752 = vmax.f32 %v1751, 0.0
        %v1753 = vlaneseq
        %v1754 = vshrl.u32 %v1753, 7
        %v1755 = vsub.s32 1, %v1754
        %v1756 = vrot.slane %v1743, %v1755
        %v1757 = vmul.f32 %v1756, %v1752
        %v1758 = vadd.f32 %v1750, %v1757
        %v1759 = vsub.f32 %v1397, 43.0
        %v1760 = vmax.f32 %v1759, 0.0
        %v1761 = vlaneseq
        %v1762 = vshrl.u32 %v1761, 7
        %v1763 = vsub.s32 2, %v1762
        %v1764 = vrot.slane %v1743, %v1763
        %v1765 = vmul.f32 %v1764, %v1760
        %v1766 = vadd.f32 %v1758, %v1765
        %v1767 = vsub.f32 %v1397, 44.0
        %v1768 = vmax.f32 %v1767, 0.0
        %v1769 = vlaneseq
        %v1770 = vshrl.u32 %v1769, 7
        %v1771 = vsub.s32 3, %v1770
        %v1772 = vrot.slane %v1743, %v1771
        %v1773 = vmul.f32 %v1772, %v1768
        %v1774 = vadd.f32 %v1766, %v1773
        %v1775 = vsub.f32 %v1397, 45.0
        %v1776 = vmax.f32 %v1775, 0.0
        %v1777 = vlaneseq
        %v1778 = vshrl.u32 %v1777, 7
        %v1779 = vsub.s32 4, %v1778
        %v1780 = vrot.slane %v1743, %v1779
        %v1781 = vmul.f32 %v1780, %v1776
        %v1782 = vadd.f32 %v1774, %v1781
        %v1783 = vsub.f32 %v1397, 46.0
        %v1784 = vmax.f32 %v1783, 0.0
        %v1785 = vlaneseq
        %v1786 = vshrl.u32 %v1785, 7
        %v1787 = vsub.s32 5, %v1786
        %v1788 = vrot.slane %v1743, %v1787
        %v1789 = vmul.f32 %v1788, %v1784
        %v1790 = vadd.f32 %v1782, %v1789
        %v1791 = vsub.f32 %v1397, 47.0
        %v1792 = vmax.f32 %v1791, 0.0
        %v1793 = vlaneseq
        %v1794 = vshrl.u32 %v1793, 7
        %v1795 = vsub.s32 6, %v1794
        %v1796 = vrot.slane %v1743, %v1795
        %v1797 = vmul.f32 %v1796, %v1792
        %v1798 = vadd.f32 %v1790, %v1797
        %v1799 = vsub.f32 %v1397, 48.0
        %v1800 = vmax.f32 %v1799, 0.0
        %v1801 = vlaneseq
        %v1802 = vshrl.u32 %v1801, 7
        %v1803 = vsub.s32 7, %v1802
        %v1804 = vrot.slane %v1743, %v1803
        %v1805 = vmul.f32 %v1804, %v1800
        %v1806 = vadd.f32 %v1798, %v1805
        %v1807 = vadd.f32 %v1741, %v1806
        %s1808 = scalar_lea.vmem %s617, 48 [#allocation12]
        %v1809 = vld [vmem:[%s1808] sm:$0xff]
        %v1810 = vsub.f32 %v1397, 49.0
        %v1811 = vmax.f32 %v1810, 0.0
        %v1812 = vlaneseq
        %v1813 = vshrl.u32 %v1812, 7
        %v1814 = vsub.s32 0, %v1813
        %v1815 = vrot.slane %v1809, %v1814
        %v1816 = vmul.f32 %v1815, %v1811
        %v1817 = vsub.f32 %v1397, 50.0
        %v1818 = vmax.f32 %v1817, 0.0
        %v1819 = vlaneseq
        %v1820 = vshrl.u32 %v1819, 7
        %v1821 = vsub.s32 1, %v1820
        %v1822 = vrot.slane %v1809, %v1821
        %v1823 = vmul.f32 %v1822, %v1818
        %v1824 = vadd.f32 %v1816, %v1823
        %v1825 = vsub.f32 %v1397, 51.0
        %v1826 = vmax.f32 %v1825, 0.0
        %v1827 = vlaneseq
        %v1828 = vshrl.u32 %v1827, 7
        %v1829 = vsub.s32 2, %v1828
        %v1830 = vrot.slane %v1809, %v1829
        %v1831 = vmul.f32 %v1830, %v1826
        %v1832 = vadd.f32 %v1824, %v1831
        %v1833 = vsub.f32 %v1397, 52.0
        %v1834 = vmax.f32 %v1833, 0.0
        %v1835 = vlaneseq
        %v1836 = vshrl.u32 %v1835, 7
        %v1837 = vsub.s32 3, %v1836
        %v1838 = vrot.slane %v1809, %v1837
        %v1839 = vmul.f32 %v1838, %v1834
        %v1840 = vadd.f32 %v1832, %v1839
        %v1841 = vsub.f32 %v1397, 53.0
        %v1842 = vmax.f32 %v1841, 0.0
        %v1843 = vlaneseq
        %v1844 = vshrl.u32 %v1843, 7
        %v1845 = vsub.s32 4, %v1844
        %v1846 = vrot.slane %v1809, %v1845
        %v1847 = vmul.f32 %v1846, %v1842
        %v1848 = vadd.f32 %v1840, %v1847
        %v1849 = vsub.f32 %v1397, 54.0
        %v1850 = vmax.f32 %v1849, 0.0
        %v1851 = vlaneseq
        %v1852 = vshrl.u32 %v1851, 7
        %v1853 = vsub.s32 5, %v1852
        %v1854 = vrot.slane %v1809, %v1853
        %v1855 = vmul.f32 %v1854, %v1850
        %v1856 = vadd.f32 %v1848, %v1855
        %v1857 = vsub.f32 %v1397, 55.0
        %v1858 = vmax.f32 %v1857, 0.0
        %v1859 = vlaneseq
        %v1860 = vshrl.u32 %v1859, 7
        %v1861 = vsub.s32 6, %v1860
        %v1862 = vrot.slane %v1809, %v1861
        %v1863 = vmul.f32 %v1862, %v1858
        %v1864 = vadd.f32 %v1856, %v1863
        %v1865 = vsub.f32 %v1397, 56.0
        %v1866 = vmax.f32 %v1865, 0.0
        %v1867 = vlaneseq
        %v1868 = vshrl.u32 %v1867, 7
        %v1869 = vsub.s32 7, %v1868
        %v1870 = vrot.slane %v1809, %v1869
        %v1871 = vmul.f32 %v1870, %v1866
        %v1872 = vadd.f32 %v1864, %v1871
        %v1873 = vadd.f32 %v1807, %v1872
        %s1874 = scalar_lea.vmem %s617, 56 [#allocation12]
        %v1875 = vld [vmem:[%s1874] sm:$0xff]
        %v1876 = vsub.f32 %v1397, 57.0
        %v1877 = vmax.f32 %v1876, 0.0
        %v1878 = vlaneseq
        %v1879 = vshrl.u32 %v1878, 7
        %v1880 = vsub.s32 0, %v1879
        %v1881 = vrot.slane %v1875, %v1880
        %v1882 = vmul.f32 %v1881, %v1877
        %v1883 = vsub.f32 %v1397, 58.0
        %v1884 = vmax.f32 %v1883, 0.0
        %v1885 = vlaneseq
        %v1886 = vshrl.u32 %v1885, 7
        %v1887 = vsub.s32 1, %v1886
        %v1888 = vrot.slane %v1875, %v1887
        %v1889 = vmul.f32 %v1888, %v1884
        %v1890 = vadd.f32 %v1882, %v1889
        %v1891 = vsub.f32 %v1397, 59.0
        %v1892 = vmax.f32 %v1891, 0.0
        %v1893 = vlaneseq
        %v1894 = vshrl.u32 %v1893, 7
        %v1895 = vsub.s32 2, %v1894
        %v1896 = vrot.slane %v1875, %v1895
        %v1897 = vmul.f32 %v1896, %v1892
        %v1898 = vadd.f32 %v1890, %v1897
        %v1899 = vsub.f32 %v1397, 60.0
        %v1900 = vmax.f32 %v1899, 0.0
        %v1901 = vlaneseq
        %v1902 = vshrl.u32 %v1901, 7
        %v1903 = vsub.s32 3, %v1902
        %v1904 = vrot.slane %v1875, %v1903
        %v1905 = vmul.f32 %v1904, %v1900
        %v1906 = vadd.f32 %v1898, %v1905
        %v1907 = vsub.f32 %v1397, 61.0
        %v1908 = vmax.f32 %v1907, 0.0
        %v1909 = vlaneseq
        %v1910 = vshrl.u32 %v1909, 7
        %v1911 = vsub.s32 4, %v1910
        %v1912 = vrot.slane %v1875, %v1911
        %v1913 = vmul.f32 %v1912, %v1908
        %v1914 = vadd.f32 %v1906, %v1913
        %v1915 = vsub.f32 %v1397, 62.0
        %v1916 = vmax.f32 %v1915, 0.0
        %v1917 = vlaneseq
        %v1918 = vshrl.u32 %v1917, 7
        %v1919 = vsub.s32 5, %v1918
        %v1920 = vrot.slane %v1875, %v1919
        %v1921 = vmul.f32 %v1920, %v1916
        %v1922 = vadd.f32 %v1914, %v1921
        %v1923 = vsub.f32 %v1397, 63.0
        %v1924 = vmax.f32 %v1923, 0.0
        %v1925 = vlaneseq
        %v1926 = vshrl.u32 %v1925, 7
        %v1927 = vsub.s32 6, %v1926
        %v1928 = vrot.slane %v1875, %v1927
        %v1929 = vmul.f32 %v1928, %v1924
        %v1930 = vadd.f32 %v1922, %v1929
        %v1931 = vsub.f32 %v1397, 64.0
        %v1932 = vmax.f32 %v1931, 0.0
        %v1933 = vlaneseq
        %v1934 = vshrl.u32 %v1933, 7
        %v1935 = vsub.s32 7, %v1934
        %v1936 = vrot.slane %v1875, %v1935
        %v1937 = vmul.f32 %v1936, %v1932
        %v1938 = vadd.f32 %v1930, %v1937
        %v1939 = vadd.f32 %v1873, %v1938
        %v1940 = vld [vmem:[#allocation3] sm:$0xff]
        %v1941 = vpack.c.bf16 %v1939, %v1939
        %v1942 = vld [vmem:[%s626] sm:$0xf]
        %v1943 = vld [vmem:[%s626 + $0x4] sm:$0xf]
        %v1944 = vld [vmem:[%s626 + $0x8] sm:$0xf]
        %v1945 = vld [vmem:[%s626 + $0xc] sm:$0xf]
        %v1946 = vld [vmem:[%s626 + $0x10] sm:$0xf]
        %v1947 = vld [vmem:[%s626 + $0x14] sm:$0xf]
        %v1948 = vld [vmem:[%s626 + $0x18] sm:$0xf]
        %v1949 = vld [vmem:[%s626 + $0x1c] sm:$0xf]
        %v1950 = vld [vmem:[%s626 + $0x20] sm:$0xf]
        %v1951 = vld [vmem:[%s626 + $0x24] sm:$0xf]
        %v1952 = vld [vmem:[%s626 + $0x28] sm:$0xf]
        %v1953 = vld [vmem:[%s626 + $0x2c] sm:$0xf]
        %v1954 = vld [vmem:[%s626 + $0x30] sm:$0xf]
        %v1955 = vld [vmem:[%s626 + $0x34] sm:$0xf]
        %v1956 = vld [vmem:[%s626 + $0x38] sm:$0xf]
        %v1957 = vld [vmem:[%s626 + $0x3c] sm:$0xf]
        %v1974 = vunpack.c.l.b16 %v1942
        %v1975 = vunpack.c.l.b16 %v1943
        %v1976 = vunpack.c.l.b16 %v1944
        %v1977 = vunpack.c.l.b16 %v1945
        %v1978 = vunpack.c.l.b16 %v1946
        %v1979 = vunpack.c.l.b16 %v1947
        %v1980 = vunpack.c.l.b16 %v1948
        %v1981 = vunpack.c.l.b16 %v1949
        %v1982 = vunpack.c.l.b16 %v1950
        %v1983 = vunpack.c.l.b16 %v1951
        %v1984 = vunpack.c.l.b16 %v1952
        %v1985 = vunpack.c.l.b16 %v1953
        %v1986 = vunpack.c.l.b16 %v1954
        %v1987 = vunpack.c.l.b16 %v1955
        %v1988 = vunpack.c.l.b16 %v1956
        %v1989 = vunpack.c.l.b16 %v1957
        %v1990 = vpack.c.b16 %v1975, %v1974
        %v1991 = vpack.c.b16 %v1977, %v1976
        %v1992 = vpack.c.b16 %v1979, %v1978
        %v1993 = vpack.c.b16 %v1981, %v1980
        %v1994 = vpack.c.b16 %v1983, %v1982
        %v1995 = vpack.c.b16 %v1985, %v1984
        %v1996 = vpack.c.b16 %v1987, %v1986
        %v1997 = vpack.c.b16 %v1989, %v1988
        %2006 = vmatprep.subr.bf16.mxu0 0
        %2007 = vmatpush1.bf16.msra.mxu0 %v1990
        %2008 = vmatprep.subr.bf16.mxu0 0
        %2009 = vmatpush1.bf16.msra.mxu0 %v1991
        %2010 = vmatprep.subr.bf16.mxu0 0
        %2011 = vmatpush1.bf16.msra.mxu0 %v1992
        %2012 = vmatprep.subr.bf16.mxu0 0
        %2013 = vmatpush1.bf16.msra.mxu0 %v1993
        %2014 = vmatprep.subr.bf16.mxu0 0
        %2015 = vmatpush1.bf16.msra.mxu0 %v1994
        %2016 = vmatprep.subr.bf16.mxu0 0
        %2017 = vmatpush1.bf16.msra.mxu0 %v1995
        %2018 = vmatprep.subr.bf16.mxu0 0
        %2019 = vmatpush1.bf16.msra.mxu0 %v1996
        %2020 = vmatprep.subr.bf16.mxu0 0
        %2021 = vmatpush1.bf16.msra.mxu0 %v1997
        %2022 = vmatprep.subr.bf16.mxu0 0
        %2023 = vmatpush1.bf16.msra.mxu0 0
        %2024 = vmatprep.subr.bf16.mxu0 0
        %2025 = vmatpush1.bf16.msra.mxu0 0
        %2026 = vmatprep.subr.bf16.mxu0 0
        %2027 = vmatpush1.bf16.msra.mxu0 0
        %2028 = vmatprep.subr.bf16.mxu0 0
        %2029 = vmatpush1.bf16.msra.mxu0 0
        %2030 = vmatprep.subr.bf16.mxu0 0
        %2031 = vmatpush1.bf16.msra.mxu0 0
        %2032 = vmatprep.subr.bf16.mxu0 0
        %2033 = vmatpush1.bf16.msra.mxu0 0
        %2034 = vmatprep.subr.bf16.mxu0 0
        %2035 = vmatpush1.bf16.msra.mxu0 0
        %2036 = vmatprep.subr.bf16.mxu0 0
        %2037 = vmatpush1.bf16.msra.mxu0 0
        %2038 = vmatprep.mubr.bf16.mxu0 0
        %2039 = vmatmul.mubr.bf16.gmra.mrb[0].mxu0 %v1941
        %v2040 = vpop.f32.mrb[0].mxu0
        %v2041 = vadd.f32 0.0, %v2040
        %v2042 = vpop.f32.mrb[0].mxu0
        %v2043 = vpop.f32.mrb[0].mxu0
        %v2044 = vpop.f32.mrb[0].mxu0
        %2045 = vdwg.mxu0
        %v2046 = vadd.f32 %v1940, %v2041
        %2047 = vst [vmem:[#allocation3] sm:$0xff] %v2046
        %p2048 = scmp.eq.s32.totalorder %s44, 3
        // Predicated region
        $region109: #{tpu_custom_call.1} parent=79 // pred_check
          %p2049 = pneg %p2048
        $region110: #{tpu_custom_call.1} parent=79 // pred_check_branch
          %2051 = sbr.rel (%p2049) target = $region112
        $region111: #{tpu_custom_call.1} parent=79 // pred_region
          %v2052 = vld [vmem:[#allocation3] sm:$0xff]
          %v2053 = vld [vmem:[%s12] sm:$0x1]
          %v2055 = vlaneseq
          %v2056 = vshrl.u32 %v2055, 7
          %v2057 = vsub.s32 0, %v2056
          %v2058 = vrot.slane %v2053, %v2057
          %v2060 = vadd.f32 %v2052, %v2058
          %v2061 = vld [vmem:[%s13] sm:$0x1]
          %v2063 = vlaneseq
          %v2064 = vshrl.u32 %v2063, 7
          %v2065 = vsub.s32 0, %v2064
          %v2066 = vrot.slane %v2061, %v2065
          %v2068 = vmul.f32 %v2060, %v2066
          %v2069 = vld [vmem:[%s14] sm:$0x1]
          %v2071 = vlaneseq
          %v2072 = vshrl.u32 %v2071, 7
          %v2073 = vsub.s32 0, %v2072
          %v2074 = vrot.slane %v2069, %v2073
          %v2076 = vadd.f32 %v2068, %v2074
          %v2077 = vld [vmem:[%s591] sm:$0xff]
          %v2078 = vadd.f32 %v2076, %v2077
          %2079 = vst [vmem:[%s696] sm:$0xff] %v2078
        $region112: #{tpu_custom_call.1} parent=79 // pred_fallthru
          _
        %s2080 = sand.u32 %s409, 1
        %s2081 = scalar_lea.sflag [#allocation6], %s2080
        %s2082 = sand.u32 %s409, 1
        %s2083 = smul.addr %s2082, 8
        %s2084 = scalar_lea.vmem [#allocation15], %s2083
        // Predicated region
        $region113: #{tpu_custom_call.1} parent=79 // pred_check
          %p2085 = pneg %p419
        $region114: #{tpu_custom_call.1} parent=79 // pred_check_branch
          %2087 = sbr.rel (%p2085) target = $region116
        $region115: #{tpu_custom_call.1} parent=79 // pred_region
          %s2089 = ssub.s32 128, 128
          %2090 = vsyncadd %s2081, %s2089
          %s2091 = smul.addr %s43, 128
          %s2092 = scalar_lea.hbm %s15, %s2091
          %s2094 = sshll.u32 %s2084, 4
          %s2095 = int_to_ptr.vmem [resolvable:$true] %s2094
          %2097 = dma.vmem_to_hbm [thread:$0]  %s2095, 128, %s2092, %s2081
        $region116: #{tpu_custom_call.1} parent=79 // pred_fallthru
          _
      $region80: #{tpu_custom_call.1} parent=5 // pred_fallthru
        _
      %p2098 = scmp.le.s32.totalorder 2, %s34
      // Predicated region
      $region117: #{tpu_custom_call.1} parent=5 // pred_check
        %p2099 = pneg %p2098
      $region118: #{tpu_custom_call.1} parent=5 // pred_check_branch
        %2101 = sbr.rel (%p2099) target = $region120
      $region119: #{tpu_custom_call.1} parent=5 // pred_region
        %s2102 = ssub.s32 %s34, 2
        // Predicated region
        $region121: #{tpu_custom_call.1} parent=119 // pred_check
          %p2103 = pneg %p425
        $region122: #{tpu_custom_call.1} parent=119 // pred_check_branch
          %2105 = sbr.rel (%p2103) target = $region124
        $region123: #{tpu_custom_call.1} parent=119 // pred_region
          %s2106 = sand.u32 %s410, 1
          %s2107 = scalar_lea.sflag [#allocation6], %s2106
          %s2108 = sand.u32 %s410, 1
          %s2109 = smul.addr %s2108, 8
          %s2110 = scalar_lea.vmem [#allocation15], %s2109
          %2111 = dma.done %s2107, 128
        $region124: #{tpu_custom_call.1} parent=119 // pred_fallthru
          _
      $region120: #{tpu_custom_call.1} parent=5 // pred_fallthru
        _
    $region6: #{tpu_custom_call.1} parent=1 // loop_footer
      %s38 = sadd.s32 1, %s34
    $region7: #{tpu_custom_call.1} parent=1 // loop_footer_branch
      %33 = sbr.rel target = $region3
    $region8: #{tpu_custom_call.1} parent=1 // loop_exit
      _
    %2112 = vsyncpa [#allocation5], 1
    %s2113 = scalar_lea.sflag [#allocation5], 1
    %2114 = vsyncpa %s2113, 1
    %2115 = vsyncpa [#allocation8], 1
    %2116 = vsyncpa [#allocation11], 1
    %s2117 = scalar_lea.sflag [#allocation11], 1
    %2118 = vsyncpa %s2117, 1
    %2119 = vsyncpa [#allocation14], 1
    %s2120 = scalar_lea.sflag [#allocation14], 1
    %2121 = vsyncpa %s2120, 1
    %2122 = vsyncpa [#allocation6], 1
    %s2123 = scalar_lea.sflag [#allocation6], 1
    %2124 = vsyncpa %s2123, 1

</llo_original>
